<compile_context>
chip_gen: v7x
topology: tpu7x:2x2x1
jax: 0.10.0
libtpu: 0.0.40
codegen_flags: <defaults>
</compile_context>

<pallas_src>
import numpy as np
import jax
import jax.numpy as jnp
from jax.experimental import pallas as pl
from jax.experimental.pallas import tpu as pltpu

# ---------------------------------------------------------------------------
# Geometry (Net(h_dim=576) -> input 3x32x32)
# ---------------------------------------------------------------------------
Z_DIM, H_DIM = 10, 576
BB = 8                                   # samples per grid step (batch block)

# encoder: Conv2d(3,6,k4,s2)->6x15x15 ; Conv2d(6,16,k5,s2)->16x6x6
# decoder: ConvT(16,6,k5,s2)->6x15x15 ; ConvT(6,3,k4,s2)->3x32x32
D1_K, D1_IH, D1_IC, D1_OC, D1_OH = 5, 6, 16, 6, 15
D2_K, D2_IH, D2_IC, D2_OC, D2_OH = 4, 15, 6, 3, 32
BUF_W = 128                              # lane width of both dilation buffers
B1_ROWS = (D1_OH + D1_K - 1) * BB        # 19*BB
B2_ROWS = (D2_OH + D2_K - 1) * BB        # 35*BB
V1 = (8, 7)                              # deconv1 output cols per parity
V2 = (16, 16)                            # deconv2 output cols per parity


# ---------------------------------------------------------------------------
# Fused kernel: one batch block (BB samples) per grid step
# ---------------------------------------------------------------------------
def _vae_kernel(cols_ref, eps_ref, w1_ref, b1_ref, w2_ref, b2_ref,
                wfc12_ref, bfc12_ref, wfc3_ref, bfc3_ref,
                wd1_ref, bd1_ref, wd2_ref, bd2_ref,
                ydec_ref, muvl_ref, b1buf, b2buf):
    f32, bf16 = jnp.float32, jnp.bfloat16

    # ---- encoder conv1: block-diag GEMM over conv2-tap-major im2col (ReLU) ----
    cols = cols_ref[0]                                               # (36*BB, 1200) bf16
    h1 = jnp.dot(cols, w1_ref[...], preferred_element_type=f32) + b1_ref[...]
    h1 = jnp.maximum(h1, 0.0)                                        # (36*BB, 150)

    # ---- encoder conv2 (ReLU); rows ordered (spatial s, sample b) ----
    h2 = jnp.dot(h1.astype(bf16), w2_ref[...], preferred_element_type=f32) + b2_ref[...]
    h2 = jnp.maximum(h2, 0.0)                                        # (36*BB, 16)

    # ---- flatten: contiguous BB-row slabs -> (BB, 576), lane = s*16 + c ----
    hflat = jnp.concatenate([h2[s * BB:(s + 1) * BB, :] for s in range(36)], axis=1)

    # ---- reparametrize: fused fc1|fc2 ----
    muvl = (jnp.dot(hflat.astype(bf16), wfc12_ref[...], preferred_element_type=f32)
            + bfc12_ref[...])                                        # (BB, 20)
    muvl_ref[0] = muvl
    mu = muvl[:, :Z_DIM]
    std = jnp.exp(muvl[:, Z_DIM:] * 0.5)
    z = mu + std * eps_ref[0]                                        # (BB, 10)

    # ---- decoder fc3 (lanes pre-permuted to (ih, iw, ic)) ----
    d = (jnp.dot(z.astype(bf16), wfc3_ref[...], preferred_element_type=f32)
         + bfc3_ref[...])                                            # (BB, 576)

    # ---- deconv1 (ConvT 16->6, k5, s2): H-dilated buffer, batch-interleaved rows ----
    b1buf[...] = jnp.zeros((B1_ROWS, BUF_W), f32)
    for ih in range(D1_IH):
        r = (D1_K - 1) + 2 * ih
        b1buf[r * BB:(r + 1) * BB, 0:96] = d[:, ih * 96:(ih + 1) * 96]
    x1 = jnp.concatenate([b1buf[kh * BB:(kh + D1_OH) * BB, :] for kh in range(D1_K)],
                         axis=1)                                     # (15*BB, 640)
    y1 = jnp.dot(x1.astype(bf16), wd1_ref[...], preferred_element_type=f32) + bd1_ref[...]
    y1 = jnp.maximum(y1, 0.0)            # (15*BB, 90): lanes [even cols | odd cols]

    # ---- deconv2 (ConvT 6->3, k4, s2): buffer keeps the parity-grouped lane layout ----
    b2buf[...] = jnp.zeros((B2_ROWS, BUF_W), f32)
    for ih in range(D2_IH):
        r = (D2_K - 1) + 2 * ih
        b2buf[r * BB:(r + 1) * BB, 0:90] = y1[ih * BB:(ih + 1) * BB, :]
    x2 = jnp.concatenate([b2buf[kh * BB:(kh + D2_OH) * BB, :] for kh in range(D2_K)],
                         axis=1)                                     # (32*BB, 512)
    y2 = jnp.tanh(jnp.dot(x2.astype(bf16), wd2_ref[...], preferred_element_type=f32)
                  + bd2_ref[...])                                    # (32*BB, 96)
    ydec_ref[0] = y2                     # rows (oh, b), lanes (parity, v, oc)


# ---------------------------------------------------------------------------
# One-time parameter preprocessing (all weight layout tricks hoisted here)
# ---------------------------------------------------------------------------
def _deconv_dense(w, K, IC, OC, IW, vps, lane_of):
    """ConvTranspose (stride 2) weights, K-stacked over kernel-row windows.

    Row = kh*BUF_W + buffer_lane(iw, ic); column = parity-concat of (v, oc)
    where output column ow = 2*v + parity.  Zero padding and out-of-range
    input columns are folded in as zero weight rows.
    """
    wf = np.asarray(w, np.float32)[:, :, ::-1, ::-1]       # flipped kernel
    parts = []
    for par in range(2):
        vp = vps[par]
        m = np.zeros((K, BUF_W, vp * OC), np.float32)
        for kh in range(K):
            for kw in range(K):
                if kw % 2 != (K - 1 - par) % 2:
                    continue
                s = (par + kw - (K - 1)) // 2
                for v in range(vp):
                    iw = v + s
                    if 0 <= iw < IW:
                        l0 = lane_of(iw)
                        m[kh, l0:l0 + IC, v * OC:(v + 1) * OC] += wf[:, :, kh, kw]
        parts.append(m.reshape(K * BUF_W, vp * OC))
    return np.concatenate(parts, axis=1)


def prepare_params(p):
    f32 = np.float32
    w1g = np.asarray(p["conv1_w"], f32).transpose(2, 3, 1, 0).reshape(48, 6)
    w1bd = np.kron(np.eye(25, dtype=f32), w1g)                       # (1200, 150)
    b1t = np.tile(np.asarray(p["conv1_b"], f32), 25).reshape(1, 150)
    w2g = np.asarray(p["conv2_w"], f32).transpose(2, 3, 1, 0).reshape(150, 16)
    b2t = np.asarray(p["conv2_b"], f32).reshape(1, 16)

    def fc_in_perm(w):                    # torch (Z,576) -> (576,Z), rows in (s, c) order
        zz = w.shape[0]
        return np.asarray(w, f32).reshape(zz, 16, 36).transpose(2, 1, 0).reshape(576, zz)

    wfc12 = np.concatenate([fc_in_perm(p["fc1_w"]), fc_in_perm(p["fc2_w"])], axis=1)
    bfc12 = np.concatenate([np.asarray(p["fc1_b"], f32),
                            np.asarray(p["fc2_b"], f32)]).reshape(1, 2 * Z_DIM)
    wfc3 = (np.asarray(p["fc3_w"], f32).reshape(16, 36, Z_DIM)
            .transpose(1, 0, 2).reshape(576, Z_DIM).T)               # (10, 576), lanes (ih,iw,ic)
    bfc3 = np.asarray(p["fc3_b"], f32).reshape(16, 36).T.reshape(1, 576)

    wd1 = _deconv_dense(p["deconv1_w"], D1_K, D1_IC, D1_OC, D1_IH, V1,
                        lambda iw: iw * D1_IC)                       # (640, 90)
    bd1 = np.tile(np.asarray(p["deconv1_b"], f32), V1[0] + V1[1]).reshape(1, 90)
    wd2 = _deconv_dense(p["deconv2_w"], D2_K, D2_IC, D2_OC, D2_IH, V2,
                        lambda iw: 48 * (iw % 2) + (iw // 2) * D2_IC)  # (512, 96)
    bd2 = np.tile(np.asarray(p["deconv2_b"], f32), V2[0] + V2[1]).reshape(1, 96)

    bf16 = jnp.bfloat16
    return {
        "w1bd": jnp.asarray(w1bd, bf16), "b1t": jnp.asarray(b1t),
        "w2g": jnp.asarray(w2g, bf16), "b2t": jnp.asarray(b2t),
        "wfc12": jnp.asarray(wfc12, bf16), "bfc12": jnp.asarray(bfc12),
        "wfc3": jnp.asarray(wfc3, bf16), "bfc3": jnp.asarray(bfc3),
        "wd1": jnp.asarray(wd1, bf16), "bd1": jnp.asarray(bd1),
        "wd2": jnp.asarray(wd2, bf16), "bd2": jnp.asarray(bd2),
    }


# ---------------------------------------------------------------------------
# Wrapper: host-side im2col gather (bf16) + pallas_call + layout-only epilogue
# ---------------------------------------------------------------------------
def vae_forward(prep, x_nchw, eps):
    n = x_nchw.shape[0]
    nb = -(-n // BB)
    npad = nb * BB

    # conv2-tap-major im2col of conv1 patches; rows within a block are (s, b).
    x = jnp.transpose(x_nchw, (0, 2, 3, 1)).astype(jnp.float32)       # (N,32,32,3)
    if npad != n:
        x = jnp.pad(x, ((0, npad - n), (0, 0), (0, 0), (0, 0)))
    p1 = [x[:, kh:kh + 29:2, kw:kw + 29:2, :] for kh in range(4) for kw in range(4)]
    cols1 = jnp.stack(p1, axis=3).reshape(npad, 15, 15, 48)
    g = [cols1[:, kh:kh + 11:2, kw:kw + 11:2, :] for kh in range(5) for kw in range(5)]
    cols = jnp.stack(g, axis=3).reshape(npad, 36, 1200)
    cols = (cols.reshape(nb, BB, 36, 1200).transpose(0, 2, 1, 3)
                .reshape(nb, 36 * BB, 1200).astype(jnp.bfloat16))

    eps_p = jnp.pad(eps.astype(jnp.float32),
                    ((0, npad - n), (0, 0))).reshape(nb, BB, Z_DIM)

    cmap = lambda i: (0, 0)
    bmap = lambda i: (i, 0, 0)

    ydec, muvl = pl.pallas_call(
        _vae_kernel,
        out_shape=(jax.ShapeDtypeStruct((nb, 32 * BB, 96), jnp.float32),
                   jax.ShapeDtypeStruct((nb, BB, 2 * Z_DIM), jnp.float32)),
        grid_spec=pltpu.PrefetchScalarGridSpec(
            num_scalar_prefetch=0,
            grid=(nb,),
            in_specs=[
                pl.BlockSpec((1, 36 * BB, 1200), bmap),     # cols (bf16)
                pl.BlockSpec((1, BB, Z_DIM), bmap),         # eps
                pl.BlockSpec((1200, 150), cmap),            # conv1 block-diag
                pl.BlockSpec((1, 150), cmap),
                pl.BlockSpec((150, 16), cmap),              # conv2
                pl.BlockSpec((1, 16), cmap),
                pl.BlockSpec((576, 2 * Z_DIM), cmap),       # fc1|fc2 fused
                pl.BlockSpec((1, 2 * Z_DIM), cmap),
                pl.BlockSpec((Z_DIM, 576), cmap),           # fc3
                pl.BlockSpec((1, 576), cmap),
                pl.BlockSpec((D1_K * BUF_W, 90), cmap),     # deconv1 (K-stacked)
                pl.BlockSpec((1, 90), cmap),
                pl.BlockSpec((D2_K * BUF_W, 96), cmap),     # deconv2 (K-stacked)
                pl.BlockSpec((1, 96), cmap),
            ],
            out_specs=(pl.BlockSpec((1, 32 * BB, 96), bmap),
                       pl.BlockSpec((1, BB, 2 * Z_DIM), bmap)),
            scratch_shapes=[pltpu.VMEM((B1_ROWS, BUF_W), jnp.float32),
                            pltpu.VMEM((B2_ROWS, BUF_W), jnp.float32)]),
        compiler_params=pltpu.CompilerParams(dimension_semantics=("parallel",)),
    )(cols, eps_p,
      prep["w1bd"], prep["b1t"], prep["w2g"], prep["b2t"],
      prep["wfc12"], prep["bfc12"], prep["wfc3"], prep["bfc3"],
      prep["wd1"], prep["bd1"], prep["wd2"], prep["bd2"])

    # XLA epilogue: column-parity interleave + NCHW transpose (layout only).
    y = ydec.reshape(nb, 32, BB, 2, 16, 3)            # (blk, oh, b, parity, v, oc)
    z_decode = jnp.transpose(y, (0, 2, 5, 1, 4, 3)).reshape(npad, 3, 32, 32)[:n]
    muvl = muvl.reshape(npad, 2 * Z_DIM)[:n]
    return z_decode, muvl[:, :Z_DIM], muvl[:, Z_DIM:]


# ---------------------------------------------------------------------------
# Deterministic synthetic parameters (PyTorch-native shapes)
# ---------------------------------------------------------------------------
def init_params(key):
    ks = jax.random.split(key, 14)

    def rnd(k, shape, fan_in):
        return jax.random.normal(k, shape, jnp.float32) / jnp.sqrt(float(fan_in))

    return {
        "conv1_w": rnd(ks[0], (6, 3, 4, 4), 3 * 16),
        "conv1_b": rnd(ks[1], (6,), 3 * 16),
        "conv2_w": rnd(ks[2], (16, 6, 5, 5), 6 * 25),
        "conv2_b": rnd(ks[3], (16,), 6 * 25),
        "fc1_w": rnd(ks[4], (Z_DIM, H_DIM), H_DIM),
        "fc1_b": rnd(ks[5], (Z_DIM,), H_DIM),
        "fc2_w": rnd(ks[6], (Z_DIM, H_DIM), H_DIM),
        "fc2_b": rnd(ks[7], (Z_DIM,), H_DIM),
        "fc3_w": rnd(ks[8], (H_DIM, Z_DIM), Z_DIM),
        "fc3_b": rnd(ks[9], (H_DIM,), Z_DIM),
        "deconv1_w": rnd(ks[10], (16, 6, 5, 5), 16 * 25),
        "deconv1_b": rnd(ks[11], (6,), 16 * 25),
        "deconv2_w": rnd(ks[12], (6, 3, 4, 4), 6 * 16),
        "deconv2_b": rnd(ks[13], (3,), 6 * 16),
    }


if __name__ == "__main__":
    key = jax.random.PRNGKey(0)
    kp, kx, ke = jax.random.split(key, 3)

    raw_params = init_params(kp)
    prep = prepare_params(raw_params)          # one-time weight-layout prep (hoisted)

    # h_dim=576 fixes the encoder input to (N, 3, 32, 32); batch=2 (padded to BB).
    x = jax.random.normal(kx, (2, 3, 32, 32), jnp.float32)
    # TODO(synk): torch.randn_like is replaced by a deterministic eps input
    # (in-kernel pltpu PRNG would also work but is kept out for reproducibility).
    eps = jax.random.normal(ke, (2, Z_DIM), jnp.float32)

    fwd = jax.jit(vae_forward)
    z_decode, mu, logvar = fwd(prep, x, eps)
    jax.block_until_ready((z_decode, mu, logvar))

    assert z_decode.shape == (2, 3, 32, 32) and z_decode.dtype == jnp.float32
    assert mu.shape == (2, Z_DIM) and logvar.shape == (2, Z_DIM)
    print("KERNEL_OK")
</pallas_src>

<mosaic_0001>
module attributes {stable_mosaic.version = 11 : i64} {
  func.func @_vae_kernel(%arg0: i32, %arg1: memref<1x288x1200xbf16, #tpu.memory_space<vmem>>, %arg2: memref<1x8x10xf32, #tpu.memory_space<vmem>>, %arg3: memref<1200x150xbf16, #tpu.memory_space<vmem>>, %arg4: memref<1x150xf32, #tpu.memory_space<vmem>>, %arg5: memref<150x16xbf16, #tpu.memory_space<vmem>>, %arg6: memref<1x16xf32, #tpu.memory_space<vmem>>, %arg7: memref<576x20xbf16, #tpu.memory_space<vmem>>, %arg8: memref<1x20xf32, #tpu.memory_space<vmem>>, %arg9: memref<10x576xbf16, #tpu.memory_space<vmem>>, %arg10: memref<1x576xf32, #tpu.memory_space<vmem>>, %arg11: memref<640x90xbf16, #tpu.memory_space<vmem>>, %arg12: memref<1x90xf32, #tpu.memory_space<vmem>>, %arg13: memref<512x96xbf16, #tpu.memory_space<vmem>>, %arg14: memref<1x96xf32, #tpu.memory_space<vmem>>, %arg15: memref<1x256x96xf32, #tpu.memory_space<vmem>>, %arg16: memref<1x8x20xf32, #tpu.memory_space<vmem>>, %arg17: memref<152x128xf32, #tpu.memory_space<vmem>>, %arg18: memref<280x128xf32, #tpu.memory_space<vmem>>) attributes {dimension_semantics = [#tpu.dimension_semantics<parallel>], iteration_bounds = array<i64: 1>, scalar_prefetch = 0 : i64, scratch_operands = 2 : i64, tpu.core_type = #tpu.core_type<tc>, window_params = [{transform_indices = @transform_0, window_bounds = array<i64: 1, 288, 1200>}, {transform_indices = @transform_1, window_bounds = array<i64: 1, 8, 10>}, {pipeline_mode = #tpu.pipeline_mode<synchronous>, transform_indices = @transform_2, window_bounds = array<i64: 1200, 150>}, {pipeline_mode = #tpu.pipeline_mode<synchronous>, transform_indices = @transform_3, window_bounds = array<i64: 1, 150>}, {pipeline_mode = #tpu.pipeline_mode<synchronous>, transform_indices = @transform_4, window_bounds = array<i64: 150, 16>}, {pipeline_mode = #tpu.pipeline_mode<synchronous>, transform_indices = @transform_5, window_bounds = array<i64: 1, 16>}, {pipeline_mode = #tpu.pipeline_mode<synchronous>, transform_indices = @transform_6, window_bounds = array<i64: 576, 20>}, {pipeline_mode = #tpu.pipeline_mode<synchronous>, transform_indices = @transform_7, window_bounds = array<i64: 1, 20>}, {pipeline_mode = #tpu.pipeline_mode<synchronous>, transform_indices = @transform_8, window_bounds = array<i64: 10, 576>}, {pipeline_mode = #tpu.pipeline_mode<synchronous>, transform_indices = @transform_9, window_bounds = array<i64: 1, 576>}, {pipeline_mode = #tpu.pipeline_mode<synchronous>, transform_indices = @transform_10, window_bounds = array<i64: 640, 90>}, {pipeline_mode = #tpu.pipeline_mode<synchronous>, transform_indices = @transform_11, window_bounds = array<i64: 1, 90>}, {pipeline_mode = #tpu.pipeline_mode<synchronous>, transform_indices = @transform_12, window_bounds = array<i64: 512, 96>}, {pipeline_mode = #tpu.pipeline_mode<synchronous>, transform_indices = @transform_13, window_bounds = array<i64: 1, 96>}, {transform_indices = @transform_14, window_bounds = array<i64: 1, 256, 96>}, {transform_indices = @transform_15, window_bounds = array<i64: 1, 8, 20>}]} {
    %c0 = arith.constant 0 : index
    %c0_0 = arith.constant 0 : index
    %c0_1 = arith.constant 0 : index
    %0 = vector.load %arg1[%c0, %c0_0, %c0_1] : memref<1x288x1200xbf16, #tpu.memory_space<vmem>>, vector<1x288x1200xbf16>
    %1 = vector.shape_cast %0 : vector<1x288x1200xbf16> to vector<288x1200xbf16>
    %c0_2 = arith.constant 0 : index
    %c0_3 = arith.constant 0 : index
    %2 = vector.load %arg3[%c0_2, %c0_3] : memref<1200x150xbf16, #tpu.memory_space<vmem>>, vector<1200x150xbf16>
    %cst = arith.constant dense<0.000000e+00> : vector<288x150xf32>
    %3 = tpu.matmul %1, %2, %cst {dimension_numbers = #tpu.dot_dimension_numbers<[1], [0], [0], [1], [0, 0, 1, 1], [], []>} : vector<288x1200xbf16>, vector<1200x150xbf16>, vector<288x150xf32> -> vector<288x150xf32>
    %c0_4 = arith.constant 0 : index
    %c0_5 = arith.constant 0 : index
    %4 = vector.load %arg4[%c0_4, %c0_5] : memref<1x150xf32, #tpu.memory_space<vmem>>, vector<1x150xf32>
    %5 = vector.broadcast %4 : vector<1x150xf32> to vector<288x150xf32>
    %6 = arith.addf %3, %5 : vector<288x150xf32>
    %cst_6 = arith.constant 0.000000e+00 : f32
    %7 = vector.broadcast %cst_6 : f32 to vector<288x150xf32>
    %8 = arith.maximumf %6, %7 : vector<288x150xf32>
    %9 = arith.truncf %8 : vector<288x150xf32> to vector<288x150xbf16>
    %c0_7 = arith.constant 0 : index
    %c0_8 = arith.constant 0 : index
    %10 = vector.load %arg5[%c0_7, %c0_8] : memref<150x16xbf16, #tpu.memory_space<vmem>>, vector<150x16xbf16>
    %cst_9 = arith.constant dense<0.000000e+00> : vector<288x16xf32>
    %11 = tpu.matmul %9, %10, %cst_9 {dimension_numbers = #tpu.dot_dimension_numbers<[1], [0], [0], [1], [0, 0, 1, 1], [], []>} : vector<288x150xbf16>, vector<150x16xbf16>, vector<288x16xf32> -> vector<288x16xf32>
    %c0_10 = arith.constant 0 : index
    %c0_11 = arith.constant 0 : index
    %12 = vector.load %arg6[%c0_10, %c0_11] : memref<1x16xf32, #tpu.memory_space<vmem>>, vector<1x16xf32>
    %13 = vector.broadcast %12 : vector<1x16xf32> to vector<288x16xf32>
    %14 = arith.addf %11, %13 : vector<288x16xf32>
    %cst_12 = arith.constant 0.000000e+00 : f32
    %15 = vector.broadcast %cst_12 : f32 to vector<288x16xf32>
    %16 = arith.maximumf %14, %15 : vector<288x16xf32>
    %17 = vector.extract_strided_slice %16 {offsets = [0, 0], sizes = [8, 16], strides = [1, 1]} : vector<288x16xf32> to vector<8x16xf32>
    %18 = vector.extract_strided_slice %16 {offsets = [8, 0], sizes = [8, 16], strides = [1, 1]} : vector<288x16xf32> to vector<8x16xf32>
    %19 = vector.extract_strided_slice %16 {offsets = [16, 0], sizes = [8, 16], strides = [1, 1]} : vector<288x16xf32> to vector<8x16xf32>
    %20 = vector.extract_strided_slice %16 {offsets = [24, 0], sizes = [8, 16], strides = [1, 1]} : vector<288x16xf32> to vector<8x16xf32>
    %21 = vector.extract_strided_slice %16 {offsets = [32, 0], sizes = [8, 16], strides = [1, 1]} : vector<288x16xf32> to vector<8x16xf32>
    %22 = vector.extract_strided_slice %16 {offsets = [40, 0], sizes = [8, 16], strides = [1, 1]} : vector<288x16xf32> to vector<8x16xf32>
    %23 = vector.extract_strided_slice %16 {offsets = [48, 0], sizes = [8, 16], strides = [1, 1]} : vector<288x16xf32> to vector<8x16xf32>
    %24 = vector.extract_strided_slice %16 {offsets = [56, 0], sizes = [8, 16], strides = [1, 1]} : vector<288x16xf32> to vector<8x16xf32>
    %25 = vector.extract_strided_slice %16 {offsets = [64, 0], sizes = [8, 16], strides = [1, 1]} : vector<288x16xf32> to vector<8x16xf32>
    %26 = vector.extract_strided_slice %16 {offsets = [72, 0], sizes = [8, 16], strides = [1, 1]} : vector<288x16xf32> to vector<8x16xf32>
    %27 = vector.extract_strided_slice %16 {offsets = [80, 0], sizes = [8, 16], strides = [1, 1]} : vector<288x16xf32> to vector<8x16xf32>
    %28 = vector.extract_strided_slice %16 {offsets = [88, 0], sizes = [8, 16], strides = [1, 1]} : vector<288x16xf32> to vector<8x16xf32>
    %29 = vector.extract_strided_slice %16 {offsets = [96, 0], sizes = [8, 16], strides = [1, 1]} : vector<288x16xf32> to vector<8x16xf32>
    %30 = vector.extract_strided_slice %16 {offsets = [104, 0], sizes = [8, 16], strides = [1, 1]} : vector<288x16xf32> to vector<8x16xf32>
    %31 = vector.extract_strided_slice %16 {offsets = [112, 0], sizes = [8, 16], strides = [1, 1]} : vector<288x16xf32> to vector<8x16xf32>
    %32 = vector.extract_strided_slice %16 {offsets = [120, 0], sizes = [8, 16], strides = [1, 1]} : vector<288x16xf32> to vector<8x16xf32>
    %33 = vector.extract_strided_slice %16 {offsets = [128, 0], sizes = [8, 16], strides = [1, 1]} : vector<288x16xf32> to vector<8x16xf32>
    %34 = vector.extract_strided_slice %16 {offsets = [136, 0], sizes = [8, 16], strides = [1, 1]} : vector<288x16xf32> to vector<8x16xf32>
    %35 = vector.extract_strided_slice %16 {offsets = [144, 0], sizes = [8, 16], strides = [1, 1]} : vector<288x16xf32> to vector<8x16xf32>
    %36 = vector.extract_strided_slice %16 {offsets = [152, 0], sizes = [8, 16], strides = [1, 1]} : vector<288x16xf32> to vector<8x16xf32>
    %37 = vector.extract_strided_slice %16 {offsets = [160, 0], sizes = [8, 16], strides = [1, 1]} : vector<288x16xf32> to vector<8x16xf32>
    %38 = vector.extract_strided_slice %16 {offsets = [168, 0], sizes = [8, 16], strides = [1, 1]} : vector<288x16xf32> to vector<8x16xf32>
    %39 = vector.extract_strided_slice %16 {offsets = [176, 0], sizes = [8, 16], strides = [1, 1]} : vector<288x16xf32> to vector<8x16xf32>
    %40 = vector.extract_strided_slice %16 {offsets = [184, 0], sizes = [8, 16], strides = [1, 1]} : vector<288x16xf32> to vector<8x16xf32>
    %41 = vector.extract_strided_slice %16 {offsets = [192, 0], sizes = [8, 16], strides = [1, 1]} : vector<288x16xf32> to vector<8x16xf32>
    %42 = vector.extract_strided_slice %16 {offsets = [200, 0], sizes = [8, 16], strides = [1, 1]} : vector<288x16xf32> to vector<8x16xf32>
    %43 = vector.extract_strided_slice %16 {offsets = [208, 0], sizes = [8, 16], strides = [1, 1]} : vector<288x16xf32> to vector<8x16xf32>
    %44 = vector.extract_strided_slice %16 {offsets = [216, 0], sizes = [8, 16], strides = [1, 1]} : vector<288x16xf32> to vector<8x16xf32>
    %45 = vector.extract_strided_slice %16 {offsets = [224, 0], sizes = [8, 16], strides = [1, 1]} : vector<288x16xf32> to vector<8x16xf32>
    %46 = vector.extract_strided_slice %16 {offsets = [232, 0], sizes = [8, 16], strides = [1, 1]} : vector<288x16xf32> to vector<8x16xf32>
    %47 = vector.extract_strided_slice %16 {offsets = [240, 0], sizes = [8, 16], strides = [1, 1]} : vector<288x16xf32> to vector<8x16xf32>
    %48 = vector.extract_strided_slice %16 {offsets = [248, 0], sizes = [8, 16], strides = [1, 1]} : vector<288x16xf32> to vector<8x16xf32>
    %49 = vector.extract_strided_slice %16 {offsets = [256, 0], sizes = [8, 16], strides = [1, 1]} : vector<288x16xf32> to vector<8x16xf32>
    %50 = vector.extract_strided_slice %16 {offsets = [264, 0], sizes = [8, 16], strides = [1, 1]} : vector<288x16xf32> to vector<8x16xf32>
    %51 = vector.extract_strided_slice %16 {offsets = [272, 0], sizes = [8, 16], strides = [1, 1]} : vector<288x16xf32> to vector<8x16xf32>
    %52 = vector.extract_strided_slice %16 {offsets = [280, 0], sizes = [8, 16], strides = [1, 1]} : vector<288x16xf32> to vector<8x16xf32>
    %53 = tpu.concatenate %17, %18, %19, %20, %21, %22, %23, %24, %25, %26, %27, %28, %29, %30, %31, %32 in 1 : vector<8x16xf32>, vector<8x16xf32>, vector<8x16xf32>, vector<8x16xf32>, vector<8x16xf32>, vector<8x16xf32>, vector<8x16xf32>, vector<8x16xf32>, vector<8x16xf32>, vector<8x16xf32>, vector<8x16xf32>, vector<8x16xf32>, vector<8x16xf32>, vector<8x16xf32>, vector<8x16xf32>, vector<8x16xf32> -> vector<8x256xf32>
    %54 = tpu.concatenate %33, %34, %35, %36, %37, %38, %39, %40, %41, %42, %43, %44, %45, %46, %47, %48 in 1 : vector<8x16xf32>, vector<8x16xf32>, vector<8x16xf32>, vector<8x16xf32>, vector<8x16xf32>, vector<8x16xf32>, vector<8x16xf32>, vector<8x16xf32>, vector<8x16xf32>, vector<8x16xf32>, vector<8x16xf32>, vector<8x16xf32>, vector<8x16xf32>, vector<8x16xf32>, vector<8x16xf32>, vector<8x16xf32> -> vector<8x256xf32>
    %55 = tpu.concatenate %49, %50, %51, %52 in 1 : vector<8x16xf32>, vector<8x16xf32>, vector<8x16xf32>, vector<8x16xf32> -> vector<8x64xf32>
    %56 = tpu.concatenate %53, %54, %55 in 1 : vector<8x256xf32>, vector<8x256xf32>, vector<8x64xf32> -> vector<8x576xf32>
    %57 = arith.truncf %56 : vector<8x576xf32> to vector<8x576xbf16>
    %c0_13 = arith.constant 0 : index
    %c0_14 = arith.constant 0 : index
    %58 = vector.load %arg7[%c0_13, %c0_14] : memref<576x20xbf16, #tpu.memory_space<vmem>>, vector<576x20xbf16>
    %cst_15 = arith.constant dense<0.000000e+00> : vector<8x20xf32>
    %59 = tpu.matmul %57, %58, %cst_15 {dimension_numbers = #tpu.dot_dimension_numbers<[1], [0], [0], [1], [0, 0, 1, 1], [], []>} : vector<8x576xbf16>, vector<576x20xbf16>, vector<8x20xf32> -> vector<8x20xf32>
    %c0_16 = arith.constant 0 : index
    %c0_17 = arith.constant 0 : index
    %60 = vector.load %arg8[%c0_16, %c0_17] : memref<1x20xf32, #tpu.memory_space<vmem>>, vector<1x20xf32>
    %61 = vector.broadcast %60 : vector<1x20xf32> to vector<8x20xf32>
    %62 = arith.addf %59, %61 : vector<8x20xf32>
    %c0_18 = arith.constant 0 : index
    %c0_19 = arith.constant 0 : index
    %c0_20 = arith.constant 0 : index
    %63 = vector.load %arg16[%c0_18, %c0_19, %c0_20] : memref<1x8x20xf32, #tpu.memory_space<vmem>>, vector<1x8x20xf32>
    %64 = vector.shape_cast %63 : vector<1x8x20xf32> to vector<8x20xf32>
    %65 = vector.shape_cast %62 : vector<8x20xf32> to vector<1x8x20xf32>
    tpu.vector_store %arg16[%c0_18, %c0_19, %c0_20], %65 {strides = array<i32>} : memref<1x8x20xf32, #tpu.memory_space<vmem>>, vector<1x8x20xf32>,
    %66 = vector.extract_strided_slice %62 {offsets = [0, 0], sizes = [8, 10], strides = [1, 1]} : vector<8x20xf32> to vector<8x10xf32>
    %67 = vector.extract_strided_slice %62 {offsets = [0, 10], sizes = [8, 10], strides = [1, 1]} : vector<8x20xf32> to vector<8x10xf32>
    %cst_21 = arith.constant 5.000000e-01 : f32
    %68 = vector.broadcast %cst_21 : f32 to vector<8x10xf32>
    %69 = arith.mulf %67, %68 : vector<8x10xf32>
    %70 = math.exp %69 : vector<8x10xf32>
    %c0_22 = arith.constant 0 : index
    %c0_23 = arith.constant 0 : index
    %c0_24 = arith.constant 0 : index
    %71 = vector.load %arg2[%c0_22, %c0_23, %c0_24] : memref<1x8x10xf32, #tpu.memory_space<vmem>>, vector<1x8x10xf32>
    %72 = vector.shape_cast %71 : vector<1x8x10xf32> to vector<8x10xf32>
    %73 = arith.mulf %70, %72 : vector<8x10xf32>
    %74 = arith.addf %66, %73 : vector<8x10xf32>
    %75 = arith.truncf %74 : vector<8x10xf32> to vector<8x10xbf16>
    %c0_25 = arith.constant 0 : index
    %c0_26 = arith.constant 0 : index
    %76 = vector.load %arg9[%c0_25, %c0_26] : memref<10x576xbf16, #tpu.memory_space<vmem>>, vector<10x576xbf16>
    %cst_27 = arith.constant dense<0.000000e+00> : vector<8x576xf32>
    %77 = tpu.matmul %75, %76, %cst_27 {dimension_numbers = #tpu.dot_dimension_numbers<[1], [0], [0], [1], [0, 0, 1, 1], [], []>} : vector<8x10xbf16>, vector<10x576xbf16>, vector<8x576xf32> -> vector<8x576xf32>
    %c0_28 = arith.constant 0 : index
    %c0_29 = arith.constant 0 : index
    %78 = vector.load %arg10[%c0_28, %c0_29] : memref<1x576xf32, #tpu.memory_space<vmem>>, vector<1x576xf32>
    %79 = vector.broadcast %78 : vector<1x576xf32> to vector<8x576xf32>
    %80 = arith.addf %77, %79 : vector<8x576xf32>
    %cst_30 = arith.constant 0.000000e+00 : f32
    %81 = vector.broadcast %cst_30 : f32 to vector<152x128xf32>
    %c0_31 = arith.constant 0 : index
    %c0_32 = arith.constant 0 : index
    %82 = vector.load %arg17[%c0_31, %c0_32] : memref<152x128xf32, #tpu.memory_space<vmem>>, vector<152x128xf32>
    tpu.vector_store %arg17[%c0_31, %c0_32], %81 {strides = array<i32>} : memref<152x128xf32, #tpu.memory_space<vmem>>, vector<152x128xf32>,
    %83 = vector.extract_strided_slice %80 {offsets = [0, 0], sizes = [8, 96], strides = [1, 1]} : vector<8x576xf32> to vector<8x96xf32>
    %c32 = arith.constant 32 : index
    %c0_33 = arith.constant 0 : index
    %84 = vector.load %arg17[%c32, %c0_33] : memref<152x128xf32, #tpu.memory_space<vmem>>, vector<8x96xf32>
    tpu.vector_store %arg17[%c32, %c0_33], %83 {strides = array<i32>} : memref<152x128xf32, #tpu.memory_space<vmem>>, vector<8x96xf32>,
    %85 = vector.extract_strided_slice %80 {offsets = [0, 96], sizes = [8, 96], strides = [1, 1]} : vector<8x576xf32> to vector<8x96xf32>
    %c48 = arith.constant 48 : index
    %c0_34 = arith.constant 0 : index
    %86 = vector.load %arg17[%c48, %c0_34] : memref<152x128xf32, #tpu.memory_space<vmem>>, vector<8x96xf32>
    tpu.vector_store %arg17[%c48, %c0_34], %85 {strides = array<i32>} : memref<152x128xf32, #tpu.memory_space<vmem>>, vector<8x96xf32>,
    %87 = vector.extract_strided_slice %80 {offsets = [0, 192], sizes = [8, 96], strides = [1, 1]} : vector<8x576xf32> to vector<8x96xf32>
    %c64 = arith.constant 64 : index
    %c0_35 = arith.constant 0 : index
    %88 = vector.load %arg17[%c64, %c0_35] : memref<152x128xf32, #tpu.memory_space<vmem>>, vector<8x96xf32>
    tpu.vector_store %arg17[%c64, %c0_35], %87 {strides = array<i32>} : memref<152x128xf32, #tpu.memory_space<vmem>>, vector<8x96xf32>,
    %89 = vector.extract_strided_slice %80 {offsets = [0, 288], sizes = [8, 96], strides = [1, 1]} : vector<8x576xf32> to vector<8x96xf32>
    %c80 = arith.constant 80 : index
    %c0_36 = arith.constant 0 : index
    %90 = vector.load %arg17[%c80, %c0_36] : memref<152x128xf32, #tpu.memory_space<vmem>>, vector<8x96xf32>
    tpu.vector_store %arg17[%c80, %c0_36], %89 {strides = array<i32>} : memref<152x128xf32, #tpu.memory_space<vmem>>, vector<8x96xf32>,
    %91 = vector.extract_strided_slice %80 {offsets = [0, 384], sizes = [8, 96], strides = [1, 1]} : vector<8x576xf32> to vector<8x96xf32>
    %c96 = arith.constant 96 : index
    %c0_37 = arith.constant 0 : index
    %92 = vector.load %arg17[%c96, %c0_37] : memref<152x128xf32, #tpu.memory_space<vmem>>, vector<8x96xf32>
    tpu.vector_store %arg17[%c96, %c0_37], %91 {strides = array<i32>} : memref<152x128xf32, #tpu.memory_space<vmem>>, vector<8x96xf32>,
    %93 = vector.extract_strided_slice %80 {offsets = [0, 480], sizes = [8, 96], strides = [1, 1]} : vector<8x576xf32> to vector<8x96xf32>
    %c112 = arith.constant 112 : index
    %c0_38 = arith.constant 0 : index
    %94 = vector.load %arg17[%c112, %c0_38] : memref<152x128xf32, #tpu.memory_space<vmem>>, vector<8x96xf32>
    tpu.vector_store %arg17[%c112, %c0_38], %93 {strides = array<i32>} : memref<152x128xf32, #tpu.memory_space<vmem>>, vector<8x96xf32>,
    %c0_39 = arith.constant 0 : index
    %c0_40 = arith.constant 0 : index
    %95 = vector.load %arg17[%c0_39, %c0_40] : memref<152x128xf32, #tpu.memory_space<vmem>>, vector<120x128xf32>
    %c8 = arith.constant 8 : index
    %c0_41 = arith.constant 0 : index
    %96 = vector.load %arg17[%c8, %c0_41] : memref<152x128xf32, #tpu.memory_space<vmem>>, vector<120x128xf32>
    %c16 = arith.constant 16 : index
    %c0_42 = arith.constant 0 : index
    %97 = vector.load %arg17[%c16, %c0_42] : memref<152x128xf32, #tpu.memory_space<vmem>>, vector<120x128xf32>
    %c24 = arith.constant 24 : index
    %c0_43 = arith.constant 0 : index
    %98 = vector.load %arg17[%c24, %c0_43] : memref<152x128xf32, #tpu.memory_space<vmem>>, vector<120x128xf32>
    %c32_44 = arith.constant 32 : index
    %c0_45 = arith.constant 0 : index
    %99 = vector.load %arg17[%c32_44, %c0_45] : memref<152x128xf32, #tpu.memory_space<vmem>>, vector<120x128xf32>
    %100 = tpu.concatenate %95, %96, %97, %98, %99 in 1 : vector<120x128xf32>, vector<120x128xf32>, vector<120x128xf32>, vector<120x128xf32>, vector<120x128xf32> -> vector<120x640xf32>
    %101 = arith.truncf %100 : vector<120x640xf32> to vector<120x640xbf16>
    %c0_46 = arith.constant 0 : index
    %c0_47 = arith.constant 0 : index
    %102 = vector.load %arg11[%c0_46, %c0_47] : memref<640x90xbf16, #tpu.memory_space<vmem>>, vector<640x90xbf16>
    %cst_48 = arith.constant dense<0.000000e+00> : vector<120x90xf32>
    %103 = tpu.matmul %101, %102, %cst_48 {dimension_numbers = #tpu.dot_dimension_numbers<[1], [0], [0], [1], [0, 0, 1, 1], [], []>} : vector<120x640xbf16>, vector<640x90xbf16>, vector<120x90xf32> -> vector<120x90xf32>
    %c0_49 = arith.constant 0 : index
    %c0_50 = arith.constant 0 : index
    %104 = vector.load %arg12[%c0_49, %c0_50] : memref<1x90xf32, #tpu.memory_space<vmem>>, vector<1x90xf32>
    %105 = vector.broadcast %104 : vector<1x90xf32> to vector<120x90xf32>
    %106 = arith.addf %103, %105 : vector<120x90xf32>
    %cst_51 = arith.constant 0.000000e+00 : f32
    %107 = vector.broadcast %cst_51 : f32 to vector<120x90xf32>
    %108 = arith.maximumf %106, %107 : vector<120x90xf32>
    %cst_52 = arith.constant 0.000000e+00 : f32
    %109 = vector.broadcast %cst_52 : f32 to vector<280x128xf32>
    %c0_53 = arith.constant 0 : index
    %c0_54 = arith.constant 0 : index
    %110 = vector.load %arg18[%c0_53, %c0_54] : memref<280x128xf32, #tpu.memory_space<vmem>>, vector<280x128xf32>
    tpu.vector_store %arg18[%c0_53, %c0_54], %109 {strides = array<i32>} : memref<280x128xf32, #tpu.memory_space<vmem>>, vector<280x128xf32>,
    %111 = vector.extract_strided_slice %108 {offsets = [0, 0], sizes = [8, 90], strides = [1, 1]} : vector<120x90xf32> to vector<8x90xf32>
    %c24_55 = arith.constant 24 : index
    %c0_56 = arith.constant 0 : index
    %112 = vector.load %arg18[%c24_55, %c0_56] : memref<280x128xf32, #tpu.memory_space<vmem>>, vector<8x90xf32>
    tpu.vector_store %arg18[%c24_55, %c0_56], %111 {strides = array<i32>} : memref<280x128xf32, #tpu.memory_space<vmem>>, vector<8x90xf32>,
    %113 = vector.extract_strided_slice %108 {offsets = [8, 0], sizes = [8, 90], strides = [1, 1]} : vector<120x90xf32> to vector<8x90xf32>
    %c40 = arith.constant 40 : index
    %c0_57 = arith.constant 0 : index
    %114 = vector.load %arg18[%c40, %c0_57] : memref<280x128xf32, #tpu.memory_space<vmem>>, vector<8x90xf32>
    tpu.vector_store %arg18[%c40, %c0_57], %113 {strides = array<i32>} : memref<280x128xf32, #tpu.memory_space<vmem>>, vector<8x90xf32>,
    %115 = vector.extract_strided_slice %108 {offsets = [16, 0], sizes = [8, 90], strides = [1, 1]} : vector<120x90xf32> to vector<8x90xf32>
    %c56 = arith.constant 56 : index
    %c0_58 = arith.constant 0 : index
    %116 = vector.load %arg18[%c56, %c0_58] : memref<280x128xf32, #tpu.memory_space<vmem>>, vector<8x90xf32>
    tpu.vector_store %arg18[%c56, %c0_58], %115 {strides = array<i32>} : memref<280x128xf32, #tpu.memory_space<vmem>>, vector<8x90xf32>,
    %117 = vector.extract_strided_slice %108 {offsets = [24, 0], sizes = [8, 90], strides = [1, 1]} : vector<120x90xf32> to vector<8x90xf32>
    %c72 = arith.constant 72 : index
    %c0_59 = arith.constant 0 : index
    %118 = vector.load %arg18[%c72, %c0_59] : memref<280x128xf32, #tpu.memory_space<vmem>>, vector<8x90xf32>
    tpu.vector_store %arg18[%c72, %c0_59], %117 {strides = array<i32>} : memref<280x128xf32, #tpu.memory_space<vmem>>, vector<8x90xf32>,
    %119 = vector.extract_strided_slice %108 {offsets = [32, 0], sizes = [8, 90], strides = [1, 1]} : vector<120x90xf32> to vector<8x90xf32>
    %c88 = arith.constant 88 : index
    %c0_60 = arith.constant 0 : index
    %120 = vector.load %arg18[%c88, %c0_60] : memref<280x128xf32, #tpu.memory_space<vmem>>, vector<8x90xf32>
    tpu.vector_store %arg18[%c88, %c0_60], %119 {strides = array<i32>} : memref<280x128xf32, #tpu.memory_space<vmem>>, vector<8x90xf32>,
    %121 = vector.extract_strided_slice %108 {offsets = [40, 0], sizes = [8, 90], strides = [1, 1]} : vector<120x90xf32> to vector<8x90xf32>
    %c104 = arith.constant 104 : index
    %c0_61 = arith.constant 0 : index
    %122 = vector.load %arg18[%c104, %c0_61] : memref<280x128xf32, #tpu.memory_space<vmem>>, vector<8x90xf32>
    tpu.vector_store %arg18[%c104, %c0_61], %121 {strides = array<i32>} : memref<280x128xf32, #tpu.memory_space<vmem>>, vector<8x90xf32>,
    %123 = vector.extract_strided_slice %108 {offsets = [48, 0], sizes = [8, 90], strides = [1, 1]} : vector<120x90xf32> to vector<8x90xf32>
    %c120 = arith.constant 120 : index
    %c0_62 = arith.constant 0 : index
    %124 = vector.load %arg18[%c120, %c0_62] : memref<280x128xf32, #tpu.memory_space<vmem>>, vector<8x90xf32>
    tpu.vector_store %arg18[%c120, %c0_62], %123 {strides = array<i32>} : memref<280x128xf32, #tpu.memory_space<vmem>>, vector<8x90xf32>,
    %125 = vector.extract_strided_slice %108 {offsets = [56, 0], sizes = [8, 90], strides = [1, 1]} : vector<120x90xf32> to vector<8x90xf32>
    %c136 = arith.constant 136 : index
    %c0_63 = arith.constant 0 : index
    %126 = vector.load %arg18[%c136, %c0_63] : memref<280x128xf32, #tpu.memory_space<vmem>>, vector<8x90xf32>
    tpu.vector_store %arg18[%c136, %c0_63], %125 {strides = array<i32>} : memref<280x128xf32, #tpu.memory_space<vmem>>, vector<8x90xf32>,
    %127 = vector.extract_strided_slice %108 {offsets = [64, 0], sizes = [8, 90], strides = [1, 1]} : vector<120x90xf32> to vector<8x90xf32>
    %c152 = arith.constant 152 : index
    %c0_64 = arith.constant 0 : index
    %128 = vector.load %arg18[%c152, %c0_64] : memref<280x128xf32, #tpu.memory_space<vmem>>, vector<8x90xf32>
    tpu.vector_store %arg18[%c152, %c0_64], %127 {strides = array<i32>} : memref<280x128xf32, #tpu.memory_space<vmem>>, vector<8x90xf32>,
    %129 = vector.extract_strided_slice %108 {offsets = [72, 0], sizes = [8, 90], strides = [1, 1]} : vector<120x90xf32> to vector<8x90xf32>
    %c168 = arith.constant 168 : index
    %c0_65 = arith.constant 0 : index
    %130 = vector.load %arg18[%c168, %c0_65] : memref<280x128xf32, #tpu.memory_space<vmem>>, vector<8x90xf32>
    tpu.vector_store %arg18[%c168, %c0_65], %129 {strides = array<i32>} : memref<280x128xf32, #tpu.memory_space<vmem>>, vector<8x90xf32>,
    %131 = vector.extract_strided_slice %108 {offsets = [80, 0], sizes = [8, 90], strides = [1, 1]} : vector<120x90xf32> to vector<8x90xf32>
    %c184 = arith.constant 184 : index
    %c0_66 = arith.constant 0 : index
    %132 = vector.load %arg18[%c184, %c0_66] : memref<280x128xf32, #tpu.memory_space<vmem>>, vector<8x90xf32>
    tpu.vector_store %arg18[%c184, %c0_66], %131 {strides = array<i32>} : memref<280x128xf32, #tpu.memory_space<vmem>>, vector<8x90xf32>,
    %133 = vector.extract_strided_slice %108 {offsets = [88, 0], sizes = [8, 90], strides = [1, 1]} : vector<120x90xf32> to vector<8x90xf32>
    %c200 = arith.constant 200 : index
    %c0_67 = arith.constant 0 : index
    %134 = vector.load %arg18[%c200, %c0_67] : memref<280x128xf32, #tpu.memory_space<vmem>>, vector<8x90xf32>
    tpu.vector_store %arg18[%c200, %c0_67], %133 {strides = array<i32>} : memref<280x128xf32, #tpu.memory_space<vmem>>, vector<8x90xf32>,
    %135 = vector.extract_strided_slice %108 {offsets = [96, 0], sizes = [8, 90], strides = [1, 1]} : vector<120x90xf32> to vector<8x90xf32>
    %c216 = arith.constant 216 : index
    %c0_68 = arith.constant 0 : index
    %136 = vector.load %arg18[%c216, %c0_68] : memref<280x128xf32, #tpu.memory_space<vmem>>, vector<8x90xf32>
    tpu.vector_store %arg18[%c216, %c0_68], %135 {strides = array<i32>} : memref<280x128xf32, #tpu.memory_space<vmem>>, vector<8x90xf32>,
    %137 = vector.extract_strided_slice %108 {offsets = [104, 0], sizes = [8, 90], strides = [1, 1]} : vector<120x90xf32> to vector<8x90xf32>
    %c232 = arith.constant 232 : index
    %c0_69 = arith.constant 0 : index
    %138 = vector.load %arg18[%c232, %c0_69] : memref<280x128xf32, #tpu.memory_space<vmem>>, vector<8x90xf32>
    tpu.vector_store %arg18[%c232, %c0_69], %137 {strides = array<i32>} : memref<280x128xf32, #tpu.memory_space<vmem>>, vector<8x90xf32>,
    %139 = vector.extract_strided_slice %108 {offsets = [112, 0], sizes = [8, 90], strides = [1, 1]} : vector<120x90xf32> to vector<8x90xf32>
    %c248 = arith.constant 248 : index
    %c0_70 = arith.constant 0 : index
    %140 = vector.load %arg18[%c248, %c0_70] : memref<280x128xf32, #tpu.memory_space<vmem>>, vector<8x90xf32>
    tpu.vector_store %arg18[%c248, %c0_70], %139 {strides = array<i32>} : memref<280x128xf32, #tpu.memory_space<vmem>>, vector<8x90xf32>,
    %c0_71 = arith.constant 0 : index
    %c0_72 = arith.constant 0 : index
    %141 = vector.load %arg18[%c0_71, %c0_72] : memref<280x128xf32, #tpu.memory_space<vmem>>, vector<256x128xf32>
    %c8_73 = arith.constant 8 : index
    %c0_74 = arith.constant 0 : index
    %142 = vector.load %arg18[%c8_73, %c0_74] : memref<280x128xf32, #tpu.memory_space<vmem>>, vector<256x128xf32>
    %c16_75 = arith.constant 16 : index
    %c0_76 = arith.constant 0 : index
    %143 = vector.load %arg18[%c16_75, %c0_76] : memref<280x128xf32, #tpu.memory_space<vmem>>, vector<256x128xf32>
    %c24_77 = arith.constant 24 : index
    %c0_78 = arith.constant 0 : index
    %144 = vector.load %arg18[%c24_77, %c0_78] : memref<280x128xf32, #tpu.memory_space<vmem>>, vector<256x128xf32>
    %145 = tpu.concatenate %141, %142, %143, %144 in 1 : vector<256x128xf32>, vector<256x128xf32>, vector<256x128xf32>, vector<256x128xf32> -> vector<256x512xf32>
    %146 = arith.truncf %145 : vector<256x512xf32> to vector<256x512xbf16>
    %c0_79 = arith.constant 0 : index
    %c0_80 = arith.constant 0 : index
    %147 = vector.load %arg13[%c0_79, %c0_80] : memref<512x96xbf16, #tpu.memory_space<vmem>>, vector<512x96xbf16>
    %cst_81 = arith.constant dense<0.000000e+00> : vector<256x96xf32>
    %148 = tpu.matmul %146, %147, %cst_81 {dimension_numbers = #tpu.dot_dimension_numbers<[1], [0], [0], [1], [0, 0, 1, 1], [], []>} : vector<256x512xbf16>, vector<512x96xbf16>, vector<256x96xf32> -> vector<256x96xf32>
    %c0_82 = arith.constant 0 : index
    %c0_83 = arith.constant 0 : index
    %149 = vector.load %arg14[%c0_82, %c0_83] : memref<1x96xf32, #tpu.memory_space<vmem>>, vector<1x96xf32>
    %150 = vector.broadcast %149 : vector<1x96xf32> to vector<256x96xf32>
    %151 = arith.addf %148, %150 : vector<256x96xf32>
    %152 = math.tanh %151 : vector<256x96xf32>
    %c0_84 = arith.constant 0 : index
    %c0_85 = arith.constant 0 : index
    %c0_86 = arith.constant 0 : index
    %153 = vector.load %arg15[%c0_84, %c0_85, %c0_86] : memref<1x256x96xf32, #tpu.memory_space<vmem>>, vector<1x256x96xf32>
    %154 = vector.shape_cast %153 : vector<1x256x96xf32> to vector<256x96xf32>
    %155 = vector.shape_cast %152 : vector<256x96xf32> to vector<1x256x96xf32>
    tpu.vector_store %arg15[%c0_84, %c0_85, %c0_86], %155 {strides = array<i32>} : memref<1x256x96xf32, #tpu.memory_space<vmem>>, vector<1x256x96xf32>,
    return
  }
  func.func @transform_0(%arg0: i32) -> (i32, i32, i32) {
    %c0_i32 = arith.constant 0 : i32
    %c0_i32_0 = arith.constant 0 : i32
    %c0_i32_1 = arith.constant 0 : i32
    return %arg0, %c0_i32, %c0_i32_0 : i32, i32, i32
  }
  func.func @transform_1(%arg0: i32) -> (i32, i32, i32) {
    %c0_i32 = arith.constant 0 : i32
    %c0_i32_0 = arith.constant 0 : i32
    %c0_i32_1 = arith.constant 0 : i32
    return %arg0, %c0_i32, %c0_i32_0 : i32, i32, i32
  }
  func.func @transform_2(%arg0: i32) -> (i32, i32) {
    %c0_i32 = arith.constant 0 : i32
    %c0_i32_0 = arith.constant 0 : i32
    %c0_i32_1 = arith.constant 0 : i32
    return %c0_i32, %c0_i32_0 : i32, i32
  }
  func.func @transform_3(%arg0: i32) -> (i32, i32) {
    %c0_i32 = arith.constant 0 : i32
    %c0_i32_0 = arith.constant 0 : i32
    %c0_i32_1 = arith.constant 0 : i32
    return %c0_i32, %c0_i32_0 : i32, i32
  }
  func.func @transform_4(%arg0: i32) -> (i32, i32) {
    %c0_i32 = arith.constant 0 : i32
    %c0_i32_0 = arith.constant 0 : i32
    %c0_i32_1 = arith.constant 0 : i32
    return %c0_i32, %c0_i32_0 : i32, i32
  }
  func.func @transform_5(%arg0: i32) -> (i32, i32) {
    %c0_i32 = arith.constant 0 : i32
    %c0_i32_0 = arith.constant 0 : i32
    %c0_i32_1 = arith.constant 0 : i32
    return %c0_i32, %c0_i32_0 : i32, i32
  }
  func.func @transform_6(%arg0: i32) -> (i32, i32) {
    %c0_i32 = arith.constant 0 : i32
    %c0_i32_0 = arith.constant 0 : i32
    %c0_i32_1 = arith.constant 0 : i32
    return %c0_i32, %c0_i32_0 : i32, i32
  }
  func.func @transform_7(%arg0: i32) -> (i32, i32) {
    %c0_i32 = arith.constant 0 : i32
    %c0_i32_0 = arith.constant 0 : i32
    %c0_i32_1 = arith.constant 0 : i32
    return %c0_i32, %c0_i32_0 : i32, i32
  }
  func.func @transform_8(%arg0: i32) -> (i32, i32) {
    %c0_i32 = arith.constant 0 : i32
    %c0_i32_0 = arith.constant 0 : i32
    %c0_i32_1 = arith.constant 0 : i32
    return %c0_i32, %c0_i32_0 : i32, i32
  }
  func.func @transform_9(%arg0: i32) -> (i32, i32) {
    %c0_i32 = arith.constant 0 : i32
    %c0_i32_0 = arith.constant 0 : i32
    %c0_i32_1 = arith.constant 0 : i32
    return %c0_i32, %c0_i32_0 : i32, i32
  }
  func.func @transform_10(%arg0: i32) -> (i32, i32) {
    %c0_i32 = arith.constant 0 : i32
    %c0_i32_0 = arith.constant 0 : i32
    %c0_i32_1 = arith.constant 0 : i32
    return %c0_i32, %c0_i32_0 : i32, i32
  }
  func.func @transform_11(%arg0: i32) -> (i32, i32) {
    %c0_i32 = arith.constant 0 : i32
    %c0_i32_0 = arith.constant 0 : i32
    %c0_i32_1 = arith.constant 0 : i32
    return %c0_i32, %c0_i32_0 : i32, i32
  }
  func.func @transform_12(%arg0: i32) -> (i32, i32) {
    %c0_i32 = arith.constant 0 : i32
    %c0_i32_0 = arith.constant 0 : i32
    %c0_i32_1 = arith.constant 0 : i32
    return %c0_i32, %c0_i32_0 : i32, i32
  }
  func.func @transform_13(%arg0: i32) -> (i32, i32) {
    %c0_i32 = arith.constant 0 : i32
    %c0_i32_0 = arith.constant 0 : i32
    %c0_i32_1 = arith.constant 0 : i32
    return %c0_i32, %c0_i32_0 : i32, i32
  }
  func.func @transform_14(%arg0: i32) -> (i32, i32, i32) {
    %c0_i32 = arith.constant 0 : i32
    %c0_i32_0 = arith.constant 0 : i32
    %c0_i32_1 = arith.constant 0 : i32
    return %arg0, %c0_i32, %c0_i32_0 : i32, i32, i32
  }
  func.func @transform_15(%arg0: i32) -> (i32, i32, i32) {
    %c0_i32 = arith.constant 0 : i32
    %c0_i32_0 = arith.constant 0 : i32
    %c0_i32_1 = arith.constant 0 : i32
    return %arg0, %c0_i32, %c0_i32_0 : i32, i32, i32
  }
}

</mosaic_0001>

<llo_original>
// kernel: vae_forward.1
$region0: #{vae_forward.1}
  #allocation0 [shape = 'u32[]', space=smem, size = 0x4, offset = 0x4, fixed_abs, tag = 'smem constant byte address 0x4 - core index']
  #allocation1 [shape = 'u32[144,128]{1,0:T(1,128)}', space=vmem, size = 0x12000, scoped, tag = 'internal scratch']
  #allocation2 [shape = 'f32[152,128]{1,0:T(8,128)}', space=vmem, size = 0x13000, scoped, tag = 'scratch operand']
  #allocation3 [shape = 'f32[280,128]{1,0:T(8,128)}', space=vmem, size = 0x23000, scoped, tag = 'scratch operand']
  %s0 = inlined_call_operand.vmem [shape: bf16[1,288,1200], index: 0, kind: input, shape index: {}]
  %s1 = inlined_call_operand.vmem [shape: f32[1,8,10], index: 1, kind: input, shape index: {}]
  %s2 = inlined_call_operand.vmem [shape: bf16[1200,150], index: 2, kind: input, shape index: {}]
  %s3 = inlined_call_operand.vmem [shape: f32[1,150], index: 3, kind: input, shape index: {}]
  %s4 = inlined_call_operand.vmem [shape: bf16[150,16], index: 4, kind: input, shape index: {}]
  %s5 = inlined_call_operand.vmem [shape: f32[1,16], index: 5, kind: input, shape index: {}]
  %s6 = inlined_call_operand.vmem [shape: bf16[576,20], index: 6, kind: input, shape index: {}]
  %s7 = inlined_call_operand.vmem [shape: f32[1,20], index: 7, kind: input, shape index: {}]
  %s8 = inlined_call_operand.vmem [shape: bf16[10,576], index: 8, kind: input, shape index: {}]
  %s9 = inlined_call_operand.vmem [shape: f32[1,576], index: 9, kind: input, shape index: {}]
  %s10 = inlined_call_operand.vmem [shape: bf16[640,90], index: 10, kind: input, shape index: {}]
  %s11 = inlined_call_operand.vmem [shape: f32[1,90], index: 11, kind: input, shape index: {}]
  %s12 = inlined_call_operand.vmem [shape: bf16[512,96], index: 12, kind: input, shape index: {}]
  %s13 = inlined_call_operand.vmem [shape: f32[1,96], index: 13, kind: input, shape index: {}]
  %s14 = inlined_call_operand.vmem [shape: f32[1,256,96], index: 14, kind: output, shape index: {0}]
  %s15 = inlined_call_operand.vmem [shape: f32[1,8,20], index: 15, kind: output, shape index: {1}]
  %16 = xla_tuple %s14, %s15
  %s17 = sld [smem:[#allocation0]]
  $region74: #{vae_forward.1} parent=0
    _
  %s19 = ssub.s32 1, %s17
  %s20 = scalar_select 0, %s19, %s17
  // Predicated region
  $region2: #{vae_forward.1} parent=0 // pred_check
    _
  $region3: #{vae_forward.1} parent=0 // pred_check_branch
    %22 = sbr.rel (0) target = $region5
  $region4: #{vae_forward.1} parent=0 // pred_region
    _
  $region5: #{vae_forward.1} parent=0 // pred_fallthru
    _
  // Predicated region
  $region6: #{vae_forward.1} parent=0 // pred_check
    _
  $region7: #{vae_forward.1} parent=0 // pred_check_branch
    %24 = sbr.rel (0) target = $region9
  $region8: #{vae_forward.1} parent=0 // pred_region
    _
  $region9: #{vae_forward.1} parent=0 // pred_fallthru
    _
  // Predicated region
  $region10: #{vae_forward.1} parent=0 // pred_check
    _
  $region11: #{vae_forward.1} parent=0 // pred_check_branch
    %26 = sbr.rel (0) target = $region13
  $region12: #{vae_forward.1} parent=0 // pred_region
    _
  $region13: #{vae_forward.1} parent=0 // pred_fallthru
    _
  // Predicated region
  $region14: #{vae_forward.1} parent=0 // pred_check
    _
  $region15: #{vae_forward.1} parent=0 // pred_check_branch
    %28 = sbr.rel (0) target = $region17
  $region16: #{vae_forward.1} parent=0 // pred_region
    _
  $region17: #{vae_forward.1} parent=0 // pred_fallthru
    _
  // Predicated region
  $region18: #{vae_forward.1} parent=0 // pred_check
    _
  $region19: #{vae_forward.1} parent=0 // pred_check_branch
    %30 = sbr.rel (0) target = $region21
  $region20: #{vae_forward.1} parent=0 // pred_region
    _
  $region21: #{vae_forward.1} parent=0 // pred_fallthru
    _
  // Predicated region
  $region22: #{vae_forward.1} parent=0 // pred_check
    _
  $region23: #{vae_forward.1} parent=0 // pred_check_branch
    %32 = sbr.rel (0) target = $region25
  $region24: #{vae_forward.1} parent=0 // pred_region
    _
  $region25: #{vae_forward.1} parent=0 // pred_fallthru
    _
  // Predicated region
  $region26: #{vae_forward.1} parent=0 // pred_check
    _
  $region27: #{vae_forward.1} parent=0 // pred_check_branch
    %34 = sbr.rel (0) target = $region29
  $region28: #{vae_forward.1} parent=0 // pred_region
    _
  $region29: #{vae_forward.1} parent=0 // pred_fallthru
    _
  // Predicated region
  $region30: #{vae_forward.1} parent=0 // pred_check
    _
  $region31: #{vae_forward.1} parent=0 // pred_check_branch
    %36 = sbr.rel (0) target = $region33
  $region32: #{vae_forward.1} parent=0 // pred_region
    _
  $region33: #{vae_forward.1} parent=0 // pred_fallthru
    _
  // Predicated region
  $region34: #{vae_forward.1} parent=0 // pred_check
    _
  $region35: #{vae_forward.1} parent=0 // pred_check_branch
    %38 = sbr.rel (0) target = $region37
  $region36: #{vae_forward.1} parent=0 // pred_region
    _
  $region37: #{vae_forward.1} parent=0 // pred_fallthru
    _
  // Predicated region
  $region38: #{vae_forward.1} parent=0 // pred_check
    _
  $region39: #{vae_forward.1} parent=0 // pred_check_branch
    %40 = sbr.rel (0) target = $region41
  $region40: #{vae_forward.1} parent=0 // pred_region
    _
  $region41: #{vae_forward.1} parent=0 // pred_fallthru
    _
  // Predicated region
  $region42: #{vae_forward.1} parent=0 // pred_check
    _
  $region43: #{vae_forward.1} parent=0 // pred_check_branch
    %42 = sbr.rel (0) target = $region45
  $region44: #{vae_forward.1} parent=0 // pred_region
    _
  $region45: #{vae_forward.1} parent=0 // pred_fallthru
    _
  // Predicated region
  $region46: #{vae_forward.1} parent=0 // pred_check
    _
  $region47: #{vae_forward.1} parent=0 // pred_check_branch
    %44 = sbr.rel (0) target = $region49
  $region48: #{vae_forward.1} parent=0 // pred_region
    _
  $region49: #{vae_forward.1} parent=0 // pred_fallthru
    _
  // Predicated region
  $region50: #{vae_forward.1} parent=0 // pred_check
    _
  $region51: #{vae_forward.1} parent=0 // pred_check_branch
    %46 = sbr.rel (0) target = $region53
  $region52: #{vae_forward.1} parent=0 // pred_region
    _
  $region53: #{vae_forward.1} parent=0 // pred_fallthru
    _
  // Predicated region
  $region54: #{vae_forward.1} parent=0 // pred_check
    _
  $region55: #{vae_forward.1} parent=0 // pred_check_branch
    %48 = sbr.rel (0) target = $region57
  $region56: #{vae_forward.1} parent=0 // pred_region
    _
  $region57: #{vae_forward.1} parent=0 // pred_fallthru
    _
  %v50 = vld [vmem:[%s0] sm:$0xff]
  %v51 = vld [vmem:[%s0 + $0x8] sm:$0xff]
  %v52 = vld [vmem:[%s0 + $0x10] sm:$0xff]
  %v53 = vld [vmem:[%s0 + $0x18] sm:$0xff]
  %v54 = vld [vmem:[%s0 + $0x20] sm:$0xff]
  %v55 = vld [vmem:[%s0 + $0x28] sm:$0xff]
  %v56 = vld [vmem:[%s0 + $0x30] sm:$0xff]
  %v57 = vld [vmem:[%s0 + $0x38] sm:$0xff]
  %v58 = vld [vmem:[%s0 + $0x40] sm:$0xff]
  %v59 = vld [vmem:[%s0 + $0x48] sm:$0xff]
  %v60 = vld [vmem:[%s0 + $0x50] sm:$0xff]
  %v61 = vld [vmem:[%s0 + $0x58] sm:$0xff]
  %v62 = vld [vmem:[%s0 + $0x60] sm:$0xff]
  %v63 = vld [vmem:[%s0 + $0x68] sm:$0xff]
  %v64 = vld [vmem:[%s0 + $0x70] sm:$0xff]
  %v65 = vld [vmem:[%s0 + $0x78] sm:$0xff]
  %v66 = vld [vmem:[%s0 + $0x80] sm:$0xff]
  %v67 = vld [vmem:[%s0 + $0x88] sm:$0xff]
  %v68 = vld [vmem:[%s0 + $0x90] sm:$0xff]
  %v69 = vld [vmem:[%s0 + $0x98] sm:$0xff]
  %v70 = vld [vmem:[%s0 + $0xa0] sm:$0xff]
  %v71 = vld [vmem:[%s0 + $0xa8] sm:$0xff]
  %v72 = vld [vmem:[%s0 + $0xb0] sm:$0xff]
  %v73 = vld [vmem:[%s0 + $0xb8] sm:$0xff]
  %v74 = vld [vmem:[%s0 + $0xc0] sm:$0xff]
  %v75 = vld [vmem:[%s0 + $0xc8] sm:$0xff]
  %v76 = vld [vmem:[%s0 + $0xd0] sm:$0xff]
  %v77 = vld [vmem:[%s0 + $0xd8] sm:$0xff]
  %v78 = vld [vmem:[%s0 + $0xe0] sm:$0xff]
  %v79 = vld [vmem:[%s0 + $0xe8] sm:$0xff]
  %v80 = vld [vmem:[%s0 + $0xf0] sm:$0xff]
  %v81 = vld [vmem:[%s0 + $0xf8] sm:$0xff]
  %v82 = vld [vmem:[%s0 + $0x100] sm:$0xff]
  %v83 = vld [vmem:[%s0 + $0x108] sm:$0xff]
  %v84 = vld [vmem:[%s0 + $0x110] sm:$0xff]
  %v85 = vld [vmem:[%s0 + $0x118] sm:$0xff]
  %v86 = vld [vmem:[%s0 + $0x120] sm:$0xff]
  %v87 = vld [vmem:[%s0 + $0x128] sm:$0xff]
  %v88 = vld [vmem:[%s0 + $0x130] sm:$0xff]
  %v89 = vld [vmem:[%s0 + $0x138] sm:$0xff]
  %v90 = vld [vmem:[%s0 + $0x140] sm:$0xff]
  %v91 = vld [vmem:[%s0 + $0x148] sm:$0xff]
  %v92 = vld [vmem:[%s0 + $0x150] sm:$0xff]
  %v93 = vld [vmem:[%s0 + $0x158] sm:$0xff]
  %v94 = vld [vmem:[%s0 + $0x160] sm:$0xff]
  %v95 = vld [vmem:[%s0 + $0x168] sm:$0xff]
  %v96 = vld [vmem:[%s0 + $0x170] sm:$0xff]
  %v97 = vld [vmem:[%s0 + $0x178] sm:$0xff]
  %v98 = vld [vmem:[%s0 + $0x180] sm:$0xff]
  %v99 = vld [vmem:[%s0 + $0x188] sm:$0xff]
  %v100 = vld [vmem:[%s0 + $0x190] sm:$0xff]
  %v101 = vld [vmem:[%s0 + $0x198] sm:$0xff]
  %v102 = vld [vmem:[%s0 + $0x1a0] sm:$0xff]
  %v103 = vld [vmem:[%s0 + $0x1a8] sm:$0xff]
  %v104 = vld [vmem:[%s0 + $0x1b0] sm:$0xff]
  %v105 = vld [vmem:[%s0 + $0x1b8] sm:$0xff]
  %v106 = vld [vmem:[%s0 + $0x1c0] sm:$0xff]
  %v107 = vld [vmem:[%s0 + $0x1c8] sm:$0xff]
  %v108 = vld [vmem:[%s0 + $0x1d0] sm:$0xff]
  %v109 = vld [vmem:[%s0 + $0x1d8] sm:$0xff]
  %v110 = vld [vmem:[%s0 + $0x1e0] sm:$0xff]
  %v111 = vld [vmem:[%s0 + $0x1e8] sm:$0xff]
  %v112 = vld [vmem:[%s0 + $0x1f0] sm:$0xff]
  %v113 = vld [vmem:[%s0 + $0x1f8] sm:$0xff]
  %v114 = vld [vmem:[%s0 + $0x200] sm:$0xff]
  %v115 = vld [vmem:[%s0 + $0x208] sm:$0xff]
  %v116 = vld [vmem:[%s0 + $0x210] sm:$0xff]
  %v117 = vld [vmem:[%s0 + $0x218] sm:$0xff]
  %v118 = vld [vmem:[%s0 + $0x220] sm:$0xff]
  %v119 = vld [vmem:[%s0 + $0x228] sm:$0xff]
  %v120 = vld [vmem:[%s0 + $0x230] sm:$0xff]
  %v121 = vld [vmem:[%s0 + $0x238] sm:$0xff]
  %v122 = vld [vmem:[%s0 + $0x240] sm:$0xff]
  %v123 = vld [vmem:[%s0 + $0x248] sm:$0xff]
  %v124 = vld [vmem:[%s0 + $0x250] sm:$0xff]
  %v125 = vld [vmem:[%s0 + $0x258] sm:$0xff]
  %v126 = vld [vmem:[%s0 + $0x260] sm:$0xff]
  %v127 = vld [vmem:[%s0 + $0x268] sm:$0xff]
  %v128 = vld [vmem:[%s0 + $0x270] sm:$0xff]
  %v129 = vld [vmem:[%s0 + $0x278] sm:$0xff]
  %v130 = vld [vmem:[%s0 + $0x280] sm:$0xff]
  %v131 = vld [vmem:[%s0 + $0x288] sm:$0xff]
  %v132 = vld [vmem:[%s0 + $0x290] sm:$0xff]
  %v133 = vld [vmem:[%s0 + $0x298] sm:$0xff]
  %v134 = vld [vmem:[%s0 + $0x2a0] sm:$0xff]
  %v135 = vld [vmem:[%s0 + $0x2a8] sm:$0xff]
  %v136 = vld [vmem:[%s0 + $0x2b0] sm:$0xff]
  %v137 = vld [vmem:[%s0 + $0x2b8] sm:$0xff]
  %v138 = vld [vmem:[%s0 + $0x2c0] sm:$0xff]
  %v139 = vld [vmem:[%s0 + $0x2c8] sm:$0xff]
  %v140 = vld [vmem:[%s0 + $0x2d0] sm:$0xff]
  %v141 = vld [vmem:[%s0 + $0x2d8] sm:$0xff]
  %v142 = vld [vmem:[%s0 + $0x2e0] sm:$0xff]
  %v143 = vld [vmem:[%s0 + $0x2e8] sm:$0xff]
  %v144 = vld [vmem:[%s0 + $0x2f0] sm:$0xff]
  %v145 = vld [vmem:[%s0 + $0x2f8] sm:$0xff]
  %v146 = vld [vmem:[%s0 + $0x300] sm:$0xff]
  %v147 = vld [vmem:[%s0 + $0x308] sm:$0xff]
  %v148 = vld [vmem:[%s0 + $0x310] sm:$0xff]
  %v149 = vld [vmem:[%s0 + $0x318] sm:$0xff]
  %v150 = vld [vmem:[%s0 + $0x320] sm:$0xff]
  %v151 = vld [vmem:[%s0 + $0x328] sm:$0xff]
  %v152 = vld [vmem:[%s0 + $0x330] sm:$0xff]
  %v153 = vld [vmem:[%s0 + $0x338] sm:$0xff]
  %v154 = vld [vmem:[%s0 + $0x340] sm:$0xff]
  %v155 = vld [vmem:[%s0 + $0x348] sm:$0xff]
  %v156 = vld [vmem:[%s0 + $0x350] sm:$0xff]
  %v157 = vld [vmem:[%s0 + $0x358] sm:$0xff]
  %v158 = vld [vmem:[%s0 + $0x360] sm:$0xff]
  %v159 = vld [vmem:[%s0 + $0x368] sm:$0xff]
  %v160 = vld [vmem:[%s0 + $0x370] sm:$0xff]
  %v161 = vld [vmem:[%s0 + $0x378] sm:$0xff]
  %v162 = vld [vmem:[%s0 + $0x380] sm:$0xff]
  %v163 = vld [vmem:[%s0 + $0x388] sm:$0xff]
  %v164 = vld [vmem:[%s0 + $0x390] sm:$0xff]
  %v165 = vld [vmem:[%s0 + $0x398] sm:$0xff]
  %v166 = vld [vmem:[%s0 + $0x3a0] sm:$0xff]
  %v167 = vld [vmem:[%s0 + $0x3a8] sm:$0xff]
  %v168 = vld [vmem:[%s0 + $0x3b0] sm:$0xff]
  %v169 = vld [vmem:[%s0 + $0x3b8] sm:$0xff]
  %v170 = vld [vmem:[%s0 + $0x3c0] sm:$0xff]
  %v171 = vld [vmem:[%s0 + $0x3c8] sm:$0xff]
  %v172 = vld [vmem:[%s0 + $0x3d0] sm:$0xff]
  %v173 = vld [vmem:[%s0 + $0x3d8] sm:$0xff]
  %v174 = vld [vmem:[%s0 + $0x3e0] sm:$0xff]
  %v175 = vld [vmem:[%s0 + $0x3e8] sm:$0xff]
  %v176 = vld [vmem:[%s0 + $0x3f0] sm:$0xff]
  %v177 = vld [vmem:[%s0 + $0x3f8] sm:$0xff]
  %v178 = vld [vmem:[%s0 + $0x400] sm:$0xff]
  %v179 = vld [vmem:[%s0 + $0x408] sm:$0xff]
  %v180 = vld [vmem:[%s0 + $0x410] sm:$0xff]
  %v181 = vld [vmem:[%s0 + $0x418] sm:$0xff]
  %v182 = vld [vmem:[%s0 + $0x420] sm:$0xff]
  %v183 = vld [vmem:[%s0 + $0x428] sm:$0xff]
  %v184 = vld [vmem:[%s0 + $0x430] sm:$0xff]
  %v185 = vld [vmem:[%s0 + $0x438] sm:$0xff]
  %v186 = vld [vmem:[%s0 + $0x440] sm:$0xff]
  %v187 = vld [vmem:[%s0 + $0x448] sm:$0xff]
  %v188 = vld [vmem:[%s0 + $0x450] sm:$0xff]
  %v189 = vld [vmem:[%s0 + $0x458] sm:$0xff]
  %v190 = vld [vmem:[%s0 + $0x460] sm:$0xff]
  %v191 = vld [vmem:[%s0 + $0x468] sm:$0xff]
  %v192 = vld [vmem:[%s0 + $0x470] sm:$0xff]
  %v193 = vld [vmem:[%s0 + $0x478] sm:$0xff]
  %v194 = vld [vmem:[%s0 + $0x480] sm:$0xff]
  %v195 = vld [vmem:[%s0 + $0x488] sm:$0xff]
  %v196 = vld [vmem:[%s0 + $0x490] sm:$0xff]
  %v197 = vld [vmem:[%s0 + $0x498] sm:$0xff]
  %v198 = vld [vmem:[%s0 + $0x4a0] sm:$0xff]
  %v199 = vld [vmem:[%s0 + $0x4a8] sm:$0xff]
  %v200 = vld [vmem:[%s0 + $0x4b0] sm:$0xff]
  %v201 = vld [vmem:[%s0 + $0x4b8] sm:$0xff]
  %v202 = vld [vmem:[%s0 + $0x4c0] sm:$0xff]
  %v203 = vld [vmem:[%s0 + $0x4c8] sm:$0xff]
  %v204 = vld [vmem:[%s0 + $0x4d0] sm:$0xff]
  %v205 = vld [vmem:[%s0 + $0x4d8] sm:$0xff]
  %v206 = vld [vmem:[%s0 + $0x4e0] sm:$0xff]
  %v207 = vld [vmem:[%s0 + $0x4e8] sm:$0xff]
  %v208 = vld [vmem:[%s0 + $0x4f0] sm:$0xff]
  %v209 = vld [vmem:[%s0 + $0x4f8] sm:$0xff]
  %v210 = vld [vmem:[%s0 + $0x500] sm:$0xff]
  %v211 = vld [vmem:[%s0 + $0x508] sm:$0xff]
  %v212 = vld [vmem:[%s0 + $0x510] sm:$0xff]
  %v213 = vld [vmem:[%s0 + $0x518] sm:$0xff]
  %v214 = vld [vmem:[%s0 + $0x520] sm:$0xff]
  %v215 = vld [vmem:[%s0 + $0x528] sm:$0xff]
  %v216 = vld [vmem:[%s0 + $0x530] sm:$0xff]
  %v217 = vld [vmem:[%s0 + $0x538] sm:$0xff]
  %v218 = vld [vmem:[%s0 + $0x540] sm:$0xff]
  %v219 = vld [vmem:[%s0 + $0x548] sm:$0xff]
  %v220 = vld [vmem:[%s0 + $0x550] sm:$0xff]
  %v221 = vld [vmem:[%s0 + $0x558] sm:$0xff]
  %v222 = vld [vmem:[%s0 + $0x560] sm:$0xff]
  %v223 = vld [vmem:[%s0 + $0x568] sm:$0xff]
  %v224 = vld [vmem:[%s0 + $0x570] sm:$0xff]
  %v225 = vld [vmem:[%s0 + $0x578] sm:$0xff]
  %v226 = vld [vmem:[%s0 + $0x580] sm:$0xff]
  %v227 = vld [vmem:[%s0 + $0x588] sm:$0xff]
  %v228 = vld [vmem:[%s0 + $0x590] sm:$0xff]
  %v229 = vld [vmem:[%s0 + $0x598] sm:$0xff]
  %v230 = vld [vmem:[%s2] sm:$0xff]
  %v231 = vld [vmem:[%s2 + $0x8] sm:$0xff]
  %v232 = vld [vmem:[%s2 + $0x10] sm:$0xff]
  %v233 = vld [vmem:[%s2 + $0x18] sm:$0xff]
  %v234 = vld [vmem:[%s2 + $0x20] sm:$0xff]
  %v235 = vld [vmem:[%s2 + $0x28] sm:$0xff]
  %v236 = vld [vmem:[%s2 + $0x30] sm:$0xff]
  %v237 = vld [vmem:[%s2 + $0x38] sm:$0xff]
  %v238 = vld [vmem:[%s2 + $0x40] sm:$0xff]
  %v239 = vld [vmem:[%s2 + $0x48] sm:$0xff]
  %v240 = vld [vmem:[%s2 + $0x50] sm:$0xff]
  %v241 = vld [vmem:[%s2 + $0x58] sm:$0xff]
  %v242 = vld [vmem:[%s2 + $0x60] sm:$0xff]
  %v243 = vld [vmem:[%s2 + $0x68] sm:$0xff]
  %v244 = vld [vmem:[%s2 + $0x70] sm:$0xff]
  %v245 = vld [vmem:[%s2 + $0x78] sm:$0xff]
  %v246 = vld [vmem:[%s2 + $0x80] sm:$0xff]
  %v247 = vld [vmem:[%s2 + $0x88] sm:$0xff]
  %v248 = vld [vmem:[%s2 + $0x90] sm:$0xff]
  %v249 = vld [vmem:[%s2 + $0x98] sm:$0xff]
  %v250 = vld [vmem:[%s2 + $0xa0] sm:$0xff]
  %v251 = vld [vmem:[%s2 + $0xa8] sm:$0xff]
  %v252 = vld [vmem:[%s2 + $0xb0] sm:$0xff]
  %v253 = vld [vmem:[%s2 + $0xb8] sm:$0xff]
  %v254 = vld [vmem:[%s2 + $0xc0] sm:$0xff]
  %v255 = vld [vmem:[%s2 + $0xc8] sm:$0xff]
  %v256 = vld [vmem:[%s2 + $0xd0] sm:$0xff]
  %v257 = vld [vmem:[%s2 + $0xd8] sm:$0xff]
  %v258 = vld [vmem:[%s2 + $0xe0] sm:$0xff]
  %v259 = vld [vmem:[%s2 + $0xe8] sm:$0xff]
  %v260 = vld [vmem:[%s2 + $0xf0] sm:$0xff]
  %v261 = vld [vmem:[%s2 + $0xf8] sm:$0xff]
  %v262 = vld [vmem:[%s2 + $0x100] sm:$0xff]
  %v263 = vld [vmem:[%s2 + $0x108] sm:$0xff]
  %v264 = vld [vmem:[%s2 + $0x110] sm:$0xff]
  %v265 = vld [vmem:[%s2 + $0x118] sm:$0xff]
  %v266 = vld [vmem:[%s2 + $0x120] sm:$0xff]
  %v267 = vld [vmem:[%s2 + $0x128] sm:$0xff]
  %v268 = vld [vmem:[%s2 + $0x130] sm:$0xff]
  %v269 = vld [vmem:[%s2 + $0x138] sm:$0xff]
  %v270 = vld [vmem:[%s2 + $0x140] sm:$0xff]
  %v271 = vld [vmem:[%s2 + $0x148] sm:$0xff]
  %v272 = vld [vmem:[%s2 + $0x150] sm:$0xff]
  %v273 = vld [vmem:[%s2 + $0x158] sm:$0xff]
  %v274 = vld [vmem:[%s2 + $0x160] sm:$0xff]
  %v275 = vld [vmem:[%s2 + $0x168] sm:$0xff]
  %v276 = vld [vmem:[%s2 + $0x170] sm:$0xff]
  %v277 = vld [vmem:[%s2 + $0x178] sm:$0xff]
  %v278 = vld [vmem:[%s2 + $0x180] sm:$0xff]
  %v279 = vld [vmem:[%s2 + $0x188] sm:$0xff]
  %v280 = vld [vmem:[%s2 + $0x190] sm:$0xff]
  %v281 = vld [vmem:[%s2 + $0x198] sm:$0xff]
  %v282 = vld [vmem:[%s2 + $0x1a0] sm:$0xff]
  %v283 = vld [vmem:[%s2 + $0x1a8] sm:$0xff]
  %v284 = vld [vmem:[%s2 + $0x1b0] sm:$0xff]
  %v285 = vld [vmem:[%s2 + $0x1b8] sm:$0xff]
  %v286 = vld [vmem:[%s2 + $0x1c0] sm:$0xff]
  %v287 = vld [vmem:[%s2 + $0x1c8] sm:$0xff]
  %v288 = vld [vmem:[%s2 + $0x1d0] sm:$0xff]
  %v289 = vld [vmem:[%s2 + $0x1d8] sm:$0xff]
  %v290 = vld [vmem:[%s2 + $0x1e0] sm:$0xff]
  %v291 = vld [vmem:[%s2 + $0x1e8] sm:$0xff]
  %v292 = vld [vmem:[%s2 + $0x1f0] sm:$0xff]
  %v293 = vld [vmem:[%s2 + $0x1f8] sm:$0xff]
  %v294 = vld [vmem:[%s2 + $0x200] sm:$0xff]
  %v295 = vld [vmem:[%s2 + $0x208] sm:$0xff]
  %v296 = vld [vmem:[%s2 + $0x210] sm:$0xff]
  %v297 = vld [vmem:[%s2 + $0x218] sm:$0xff]
  %v298 = vld [vmem:[%s2 + $0x220] sm:$0xff]
  %v299 = vld [vmem:[%s2 + $0x228] sm:$0xff]
  %v300 = vld [vmem:[%s2 + $0x230] sm:$0xff]
  %v301 = vld [vmem:[%s2 + $0x238] sm:$0xff]
  %v302 = vld [vmem:[%s2 + $0x240] sm:$0xff]
  %v303 = vld [vmem:[%s2 + $0x248] sm:$0xff]
  %v304 = vld [vmem:[%s2 + $0x250] sm:$0xff]
  %v305 = vld [vmem:[%s2 + $0x258] sm:$0xff]
  %v306 = vld [vmem:[%s2 + $0x260] sm:$0xff]
  %v307 = vld [vmem:[%s2 + $0x268] sm:$0xff]
  %v308 = vld [vmem:[%s2 + $0x270] sm:$0xff]
  %v309 = vld [vmem:[%s2 + $0x278] sm:$0xff]
  %v310 = vld [vmem:[%s2 + $0x280] sm:$0xff]
  %v311 = vld [vmem:[%s2 + $0x288] sm:$0xff]
  %v312 = vld [vmem:[%s2 + $0x290] sm:$0xff]
  %v313 = vld [vmem:[%s2 + $0x298] sm:$0xff]
  %v314 = vld [vmem:[%s2 + $0x2a0] sm:$0xff]
  %v315 = vld [vmem:[%s2 + $0x2a8] sm:$0xff]
  %v316 = vld [vmem:[%s2 + $0x2b0] sm:$0xff]
  %v317 = vld [vmem:[%s2 + $0x2b8] sm:$0xff]
  %v318 = vld [vmem:[%s2 + $0x2c0] sm:$0xff]
  %v319 = vld [vmem:[%s2 + $0x2c8] sm:$0xff]
  %v320 = vld [vmem:[%s2 + $0x2d0] sm:$0xff]
  %v321 = vld [vmem:[%s2 + $0x2d8] sm:$0xff]
  %v322 = vld [vmem:[%s2 + $0x2e0] sm:$0xff]
  %v323 = vld [vmem:[%s2 + $0x2e8] sm:$0xff]
  %v324 = vld [vmem:[%s2 + $0x2f0] sm:$0xff]
  %v325 = vld [vmem:[%s2 + $0x2f8] sm:$0xff]
  %v326 = vld [vmem:[%s2 + $0x300] sm:$0xff]
  %v327 = vld [vmem:[%s2 + $0x308] sm:$0xff]
  %v328 = vld [vmem:[%s2 + $0x310] sm:$0xff]
  %v329 = vld [vmem:[%s2 + $0x318] sm:$0xff]
  %v330 = vld [vmem:[%s2 + $0x320] sm:$0xff]
  %v331 = vld [vmem:[%s2 + $0x328] sm:$0xff]
  %v332 = vld [vmem:[%s2 + $0x330] sm:$0xff]
  %v333 = vld [vmem:[%s2 + $0x338] sm:$0xff]
  %v334 = vld [vmem:[%s2 + $0x340] sm:$0xff]
  %v335 = vld [vmem:[%s2 + $0x348] sm:$0xff]
  %v336 = vld [vmem:[%s2 + $0x350] sm:$0xff]
  %v337 = vld [vmem:[%s2 + $0x358] sm:$0xff]
  %v338 = vld [vmem:[%s2 + $0x360] sm:$0xff]
  %v339 = vld [vmem:[%s2 + $0x368] sm:$0xff]
  %v340 = vld [vmem:[%s2 + $0x370] sm:$0xff]
  %v341 = vld [vmem:[%s2 + $0x378] sm:$0xff]
  %v342 = vld [vmem:[%s2 + $0x380] sm:$0xff]
  %v343 = vld [vmem:[%s2 + $0x388] sm:$0xff]
  %v344 = vld [vmem:[%s2 + $0x390] sm:$0xff]
  %v345 = vld [vmem:[%s2 + $0x398] sm:$0xff]
  %v346 = vld [vmem:[%s2 + $0x3a0] sm:$0xff]
  %v347 = vld [vmem:[%s2 + $0x3a8] sm:$0xff]
  %v348 = vld [vmem:[%s2 + $0x3b0] sm:$0xff]
  %v349 = vld [vmem:[%s2 + $0x3b8] sm:$0xff]
  %v350 = vld [vmem:[%s2 + $0x3c0] sm:$0xff]
  %v351 = vld [vmem:[%s2 + $0x3c8] sm:$0xff]
  %v352 = vld [vmem:[%s2 + $0x3d0] sm:$0xff]
  %v353 = vld [vmem:[%s2 + $0x3d8] sm:$0xff]
  %v354 = vld [vmem:[%s2 + $0x3e0] sm:$0xff]
  %v355 = vld [vmem:[%s2 + $0x3e8] sm:$0xff]
  %v356 = vld [vmem:[%s2 + $0x3f0] sm:$0xff]
  %v357 = vld [vmem:[%s2 + $0x3f8] sm:$0xff]
  %v358 = vld [vmem:[%s2 + $0x400] sm:$0xff]
  %v359 = vld [vmem:[%s2 + $0x408] sm:$0xff]
  %v360 = vld [vmem:[%s2 + $0x410] sm:$0xff]
  %v361 = vld [vmem:[%s2 + $0x418] sm:$0xff]
  %v362 = vld [vmem:[%s2 + $0x420] sm:$0xff]
  %v363 = vld [vmem:[%s2 + $0x428] sm:$0xff]
  %v364 = vld [vmem:[%s2 + $0x430] sm:$0xff]
  %v365 = vld [vmem:[%s2 + $0x438] sm:$0xff]
  %v366 = vld [vmem:[%s2 + $0x440] sm:$0xff]
  %v367 = vld [vmem:[%s2 + $0x448] sm:$0xff]
  %v368 = vld [vmem:[%s2 + $0x450] sm:$0xff]
  %v369 = vld [vmem:[%s2 + $0x458] sm:$0xff]
  %v370 = vld [vmem:[%s2 + $0x460] sm:$0xff]
  %v371 = vld [vmem:[%s2 + $0x468] sm:$0xff]
  %v372 = vld [vmem:[%s2 + $0x470] sm:$0xff]
  %v373 = vld [vmem:[%s2 + $0x478] sm:$0xff]
  %v374 = vld [vmem:[%s2 + $0x480] sm:$0xff]
  %v375 = vld [vmem:[%s2 + $0x488] sm:$0xff]
  %v376 = vld [vmem:[%s2 + $0x490] sm:$0xff]
  %v377 = vld [vmem:[%s2 + $0x498] sm:$0xff]
  %v378 = vld [vmem:[%s2 + $0x4a0] sm:$0xff]
  %v379 = vld [vmem:[%s2 + $0x4a8] sm:$0xff]
  %v380 = vld [vmem:[%s3] sm:$0x3]
  %v382 = vlaneseq
  %v383 = vshrl.u32 %v382, 7
  %v384 = vsub.s32 0, %v383
  %v385 = vrot.slane %v380, %v384
  %v386 = vlaneseq
  %v387 = vshrl.u32 %v386, 7
  %v388 = vsub.s32 1, %v387
  %v389 = vrot.slane %v380, %v388
  %v572 = vunpack.c.l.b16 %v50
  %v573 = vunpack.c.h.b16 %v50
  %v574 = vunpack.c.l.b16 %v51
  %v575 = vunpack.c.h.b16 %v51
  %v576 = vunpack.c.l.b16 %v52
  %v577 = vunpack.c.h.b16 %v52
  %v578 = vunpack.c.l.b16 %v53
  %v579 = vunpack.c.h.b16 %v53
  %v580 = vunpack.c.l.b16 %v54
  %v581 = vunpack.c.h.b16 %v54
  %v582 = vunpack.c.l.b16 %v55
  %v583 = vunpack.c.h.b16 %v55
  %v584 = vunpack.c.l.b16 %v56
  %v585 = vunpack.c.h.b16 %v56
  %v586 = vunpack.c.l.b16 %v57
  %v587 = vunpack.c.h.b16 %v57
  %v588 = vunpack.c.l.b16 %v58
  %v589 = vunpack.c.h.b16 %v58
  %v590 = vunpack.c.l.b16 %v59
  %v591 = vunpack.c.h.b16 %v59
  %v592 = vunpack.c.l.b16 %v60
  %v593 = vunpack.c.h.b16 %v60
  %v594 = vunpack.c.l.b16 %v61
  %v595 = vunpack.c.h.b16 %v61
  %v596 = vunpack.c.l.b16 %v62
  %v597 = vunpack.c.h.b16 %v62
  %v598 = vunpack.c.l.b16 %v63
  %v599 = vunpack.c.h.b16 %v63
  %v600 = vunpack.c.l.b16 %v64
  %v601 = vunpack.c.h.b16 %v64
  %v602 = vunpack.c.l.b16 %v65
  %v603 = vunpack.c.h.b16 %v65
  %v604 = vunpack.c.l.b16 %v66
  %v605 = vunpack.c.h.b16 %v66
  %v606 = vunpack.c.l.b16 %v67
  %v607 = vunpack.c.h.b16 %v67
  %v608 = vunpack.c.l.b16 %v68
  %v609 = vunpack.c.h.b16 %v68
  %v610 = vunpack.c.l.b16 %v69
  %v611 = vunpack.c.h.b16 %v69
  %v612 = vunpack.c.l.b16 %v70
  %v613 = vunpack.c.h.b16 %v70
  %v614 = vunpack.c.l.b16 %v71
  %v615 = vunpack.c.h.b16 %v71
  %v616 = vunpack.c.l.b16 %v72
  %v617 = vunpack.c.h.b16 %v72
  %v618 = vunpack.c.l.b16 %v73
  %v619 = vunpack.c.h.b16 %v73
  %v620 = vunpack.c.l.b16 %v74
  %v621 = vunpack.c.h.b16 %v74
  %v622 = vunpack.c.l.b16 %v75
  %v623 = vunpack.c.h.b16 %v75
  %v624 = vunpack.c.l.b16 %v76
  %v625 = vunpack.c.h.b16 %v76
  %v626 = vunpack.c.l.b16 %v77
  %v627 = vunpack.c.h.b16 %v77
  %v628 = vunpack.c.l.b16 %v78
  %v629 = vunpack.c.h.b16 %v78
  %v630 = vunpack.c.l.b16 %v79
  %v631 = vunpack.c.h.b16 %v79
  %v632 = vunpack.c.l.b16 %v80
  %v633 = vunpack.c.h.b16 %v80
  %v634 = vunpack.c.l.b16 %v81
  %v635 = vunpack.c.h.b16 %v81
  %v636 = vunpack.c.l.b16 %v82
  %v637 = vunpack.c.h.b16 %v82
  %v638 = vunpack.c.l.b16 %v83
  %v639 = vunpack.c.h.b16 %v83
  %v640 = vunpack.c.l.b16 %v84
  %v641 = vunpack.c.h.b16 %v84
  %v642 = vunpack.c.l.b16 %v85
  %v643 = vunpack.c.h.b16 %v85
  %v644 = vunpack.c.l.b16 %v86
  %v645 = vunpack.c.h.b16 %v86
  %v646 = vunpack.c.l.b16 %v87
  %v647 = vunpack.c.h.b16 %v87
  %v648 = vunpack.c.l.b16 %v88
  %v649 = vunpack.c.h.b16 %v88
  %v650 = vunpack.c.l.b16 %v89
  %v651 = vunpack.c.h.b16 %v89
  %v652 = vunpack.c.l.b16 %v90
  %v653 = vunpack.c.h.b16 %v90
  %v654 = vunpack.c.l.b16 %v91
  %v655 = vunpack.c.h.b16 %v91
  %v656 = vunpack.c.l.b16 %v92
  %v657 = vunpack.c.h.b16 %v92
  %v658 = vunpack.c.l.b16 %v93
  %v659 = vunpack.c.h.b16 %v93
  %v660 = vunpack.c.l.b16 %v94
  %v661 = vunpack.c.h.b16 %v94
  %v662 = vunpack.c.l.b16 %v95
  %v663 = vunpack.c.h.b16 %v95
  %v664 = vunpack.c.l.b16 %v96
  %v665 = vunpack.c.h.b16 %v96
  %v666 = vunpack.c.l.b16 %v97
  %v667 = vunpack.c.h.b16 %v97
  %v668 = vunpack.c.l.b16 %v98
  %v669 = vunpack.c.h.b16 %v98
  %v670 = vunpack.c.l.b16 %v99
  %v671 = vunpack.c.h.b16 %v99
  %v672 = vunpack.c.l.b16 %v100
  %v673 = vunpack.c.h.b16 %v100
  %v674 = vunpack.c.l.b16 %v101
  %v675 = vunpack.c.h.b16 %v101
  %v676 = vunpack.c.l.b16 %v102
  %v677 = vunpack.c.h.b16 %v102
  %v678 = vunpack.c.l.b16 %v103
  %v679 = vunpack.c.h.b16 %v103
  %v680 = vunpack.c.l.b16 %v104
  %v681 = vunpack.c.h.b16 %v104
  %v682 = vunpack.c.l.b16 %v105
  %v683 = vunpack.c.h.b16 %v105
  %v684 = vunpack.c.l.b16 %v106
  %v685 = vunpack.c.h.b16 %v106
  %v686 = vunpack.c.l.b16 %v107
  %v687 = vunpack.c.h.b16 %v107
  %v688 = vunpack.c.l.b16 %v108
  %v689 = vunpack.c.h.b16 %v108
  %v690 = vunpack.c.l.b16 %v109
  %v691 = vunpack.c.h.b16 %v109
  %v692 = vunpack.c.l.b16 %v110
  %v693 = vunpack.c.h.b16 %v110
  %v694 = vunpack.c.l.b16 %v111
  %v695 = vunpack.c.h.b16 %v111
  %v696 = vunpack.c.l.b16 %v112
  %v697 = vunpack.c.h.b16 %v112
  %v698 = vunpack.c.l.b16 %v113
  %v699 = vunpack.c.h.b16 %v113
  %v700 = vunpack.c.l.b16 %v114
  %v701 = vunpack.c.h.b16 %v114
  %v702 = vunpack.c.l.b16 %v115
  %v703 = vunpack.c.h.b16 %v115
  %v704 = vunpack.c.l.b16 %v116
  %v705 = vunpack.c.h.b16 %v116
  %v706 = vunpack.c.l.b16 %v117
  %v707 = vunpack.c.h.b16 %v117
  %v708 = vunpack.c.l.b16 %v118
  %v709 = vunpack.c.h.b16 %v118
  %v710 = vunpack.c.l.b16 %v119
  %v711 = vunpack.c.h.b16 %v119
  %v712 = vunpack.c.l.b16 %v120
  %v713 = vunpack.c.h.b16 %v120
  %v714 = vunpack.c.l.b16 %v121
  %v715 = vunpack.c.h.b16 %v121
  %v716 = vunpack.c.l.b16 %v122
  %v717 = vunpack.c.h.b16 %v122
  %v718 = vunpack.c.l.b16 %v123
  %v719 = vunpack.c.h.b16 %v123
  %v720 = vunpack.c.l.b16 %v124
  %v721 = vunpack.c.h.b16 %v124
  %v722 = vunpack.c.l.b16 %v125
  %v723 = vunpack.c.h.b16 %v125
  %v724 = vunpack.c.l.b16 %v126
  %v725 = vunpack.c.h.b16 %v126
  %v726 = vunpack.c.l.b16 %v127
  %v727 = vunpack.c.h.b16 %v127
  %v728 = vunpack.c.l.b16 %v128
  %v729 = vunpack.c.h.b16 %v128
  %v730 = vunpack.c.l.b16 %v129
  %v731 = vunpack.c.h.b16 %v129
  %v732 = vunpack.c.l.b16 %v130
  %v733 = vunpack.c.h.b16 %v130
  %v734 = vunpack.c.l.b16 %v131
  %v735 = vunpack.c.h.b16 %v131
  %v736 = vunpack.c.l.b16 %v132
  %v737 = vunpack.c.h.b16 %v132
  %v738 = vunpack.c.l.b16 %v133
  %v739 = vunpack.c.h.b16 %v133
  %v740 = vunpack.c.l.b16 %v134
  %v741 = vunpack.c.h.b16 %v134
  %v742 = vunpack.c.l.b16 %v135
  %v743 = vunpack.c.h.b16 %v135
  %v744 = vunpack.c.l.b16 %v136
  %v745 = vunpack.c.h.b16 %v136
  %v746 = vunpack.c.l.b16 %v137
  %v747 = vunpack.c.h.b16 %v137
  %v748 = vunpack.c.l.b16 %v138
  %v749 = vunpack.c.h.b16 %v138
  %v750 = vunpack.c.l.b16 %v139
  %v751 = vunpack.c.h.b16 %v139
  %v752 = vunpack.c.l.b16 %v140
  %v753 = vunpack.c.h.b16 %v140
  %v754 = vunpack.c.l.b16 %v141
  %v755 = vunpack.c.h.b16 %v141
  %v756 = vunpack.c.l.b16 %v142
  %v757 = vunpack.c.h.b16 %v142
  %v758 = vunpack.c.l.b16 %v143
  %v759 = vunpack.c.h.b16 %v143
  %v760 = vunpack.c.l.b16 %v144
  %v761 = vunpack.c.h.b16 %v144
  %v762 = vunpack.c.l.b16 %v145
  %v763 = vunpack.c.h.b16 %v145
  %v764 = vunpack.c.l.b16 %v146
  %v765 = vunpack.c.h.b16 %v146
  %v766 = vunpack.c.l.b16 %v147
  %v767 = vunpack.c.h.b16 %v147
  %v768 = vunpack.c.l.b16 %v148
  %v769 = vunpack.c.h.b16 %v148
  %v770 = vunpack.c.l.b16 %v149
  %v771 = vunpack.c.h.b16 %v149
  %v772 = vunpack.c.l.b16 %v150
  %v773 = vunpack.c.h.b16 %v150
  %v774 = vunpack.c.l.b16 %v151
  %v775 = vunpack.c.h.b16 %v151
  %v776 = vunpack.c.l.b16 %v152
  %v777 = vunpack.c.h.b16 %v152
  %v778 = vunpack.c.l.b16 %v153
  %v779 = vunpack.c.h.b16 %v153
  %v780 = vunpack.c.l.b16 %v154
  %v781 = vunpack.c.h.b16 %v154
  %v782 = vunpack.c.l.b16 %v155
  %v783 = vunpack.c.h.b16 %v155
  %v784 = vunpack.c.l.b16 %v156
  %v785 = vunpack.c.h.b16 %v156
  %v786 = vunpack.c.l.b16 %v157
  %v787 = vunpack.c.h.b16 %v157
  %v788 = vunpack.c.l.b16 %v158
  %v789 = vunpack.c.h.b16 %v158
  %v790 = vunpack.c.l.b16 %v159
  %v791 = vunpack.c.h.b16 %v159
  %v792 = vunpack.c.l.b16 %v160
  %v793 = vunpack.c.h.b16 %v160
  %v794 = vunpack.c.l.b16 %v161
  %v795 = vunpack.c.h.b16 %v161
  %v796 = vunpack.c.l.b16 %v162
  %v797 = vunpack.c.h.b16 %v162
  %v798 = vunpack.c.l.b16 %v163
  %v799 = vunpack.c.h.b16 %v163
  %v800 = vunpack.c.l.b16 %v164
  %v801 = vunpack.c.h.b16 %v164
  %v802 = vunpack.c.l.b16 %v165
  %v803 = vunpack.c.h.b16 %v165
  %v804 = vunpack.c.l.b16 %v166
  %v805 = vunpack.c.h.b16 %v166
  %v806 = vunpack.c.l.b16 %v167
  %v807 = vunpack.c.h.b16 %v167
  %v808 = vunpack.c.l.b16 %v168
  %v809 = vunpack.c.h.b16 %v168
  %v810 = vunpack.c.l.b16 %v169
  %v811 = vunpack.c.h.b16 %v169
  %v812 = vunpack.c.l.b16 %v170
  %v813 = vunpack.c.h.b16 %v170
  %v814 = vunpack.c.l.b16 %v171
  %v815 = vunpack.c.h.b16 %v171
  %v816 = vunpack.c.l.b16 %v172
  %v817 = vunpack.c.h.b16 %v172
  %v818 = vunpack.c.l.b16 %v173
  %v819 = vunpack.c.h.b16 %v173
  %v820 = vunpack.c.l.b16 %v174
  %v821 = vunpack.c.h.b16 %v174
  %v822 = vunpack.c.l.b16 %v175
  %v823 = vunpack.c.h.b16 %v175
  %v824 = vunpack.c.l.b16 %v176
  %v825 = vunpack.c.h.b16 %v176
  %v826 = vunpack.c.l.b16 %v177
  %v827 = vunpack.c.h.b16 %v177
  %v828 = vunpack.c.l.b16 %v178
  %v829 = vunpack.c.h.b16 %v178
  %v830 = vunpack.c.l.b16 %v179
  %v831 = vunpack.c.h.b16 %v179
  %v832 = vunpack.c.l.b16 %v180
  %v833 = vunpack.c.h.b16 %v180
  %v834 = vunpack.c.l.b16 %v181
  %v835 = vunpack.c.h.b16 %v181
  %v836 = vunpack.c.l.b16 %v182
  %v837 = vunpack.c.h.b16 %v182
  %v838 = vunpack.c.l.b16 %v183
  %v839 = vunpack.c.h.b16 %v183
  %v840 = vunpack.c.l.b16 %v184
  %v841 = vunpack.c.h.b16 %v184
  %v842 = vunpack.c.l.b16 %v185
  %v843 = vunpack.c.h.b16 %v185
  %v844 = vunpack.c.l.b16 %v186
  %v845 = vunpack.c.h.b16 %v186
  %v846 = vunpack.c.l.b16 %v187
  %v847 = vunpack.c.h.b16 %v187
  %v848 = vunpack.c.l.b16 %v188
  %v849 = vunpack.c.h.b16 %v188
  %v850 = vunpack.c.l.b16 %v189
  %v851 = vunpack.c.h.b16 %v189
  %v852 = vunpack.c.l.b16 %v190
  %v853 = vunpack.c.h.b16 %v190
  %v854 = vunpack.c.l.b16 %v191
  %v855 = vunpack.c.h.b16 %v191
  %v856 = vunpack.c.l.b16 %v192
  %v857 = vunpack.c.h.b16 %v192
  %v858 = vunpack.c.l.b16 %v193
  %v859 = vunpack.c.h.b16 %v193
  %v860 = vunpack.c.l.b16 %v194
  %v861 = vunpack.c.h.b16 %v194
  %v862 = vunpack.c.l.b16 %v195
  %v863 = vunpack.c.h.b16 %v195
  %v864 = vunpack.c.l.b16 %v196
  %v865 = vunpack.c.h.b16 %v196
  %v866 = vunpack.c.l.b16 %v197
  %v867 = vunpack.c.h.b16 %v197
  %v868 = vunpack.c.l.b16 %v198
  %v869 = vunpack.c.h.b16 %v198
  %v870 = vunpack.c.l.b16 %v199
  %v871 = vunpack.c.h.b16 %v199
  %v872 = vunpack.c.l.b16 %v200
  %v873 = vunpack.c.h.b16 %v200
  %v874 = vunpack.c.l.b16 %v201
  %v875 = vunpack.c.h.b16 %v201
  %v876 = vunpack.c.l.b16 %v202
  %v877 = vunpack.c.h.b16 %v202
  %v878 = vunpack.c.l.b16 %v203
  %v879 = vunpack.c.h.b16 %v203
  %v880 = vunpack.c.l.b16 %v204
  %v881 = vunpack.c.h.b16 %v204
  %v882 = vunpack.c.l.b16 %v205
  %v883 = vunpack.c.h.b16 %v205
  %v884 = vunpack.c.l.b16 %v206
  %v885 = vunpack.c.h.b16 %v206
  %v886 = vunpack.c.l.b16 %v207
  %v887 = vunpack.c.h.b16 %v207
  %v888 = vunpack.c.l.b16 %v208
  %v889 = vunpack.c.h.b16 %v208
  %v890 = vunpack.c.l.b16 %v209
  %v891 = vunpack.c.h.b16 %v209
  %v892 = vunpack.c.l.b16 %v210
  %v893 = vunpack.c.h.b16 %v210
  %v894 = vunpack.c.l.b16 %v211
  %v895 = vunpack.c.h.b16 %v211
  %v896 = vunpack.c.l.b16 %v212
  %v897 = vunpack.c.h.b16 %v212
  %v898 = vunpack.c.l.b16 %v213
  %v899 = vunpack.c.h.b16 %v213
  %v900 = vunpack.c.l.b16 %v214
  %v901 = vunpack.c.h.b16 %v214
  %v902 = vunpack.c.l.b16 %v215
  %v903 = vunpack.c.h.b16 %v215
  %v904 = vunpack.c.l.b16 %v216
  %v905 = vunpack.c.h.b16 %v216
  %v906 = vunpack.c.l.b16 %v217
  %v907 = vunpack.c.h.b16 %v217
  %v908 = vunpack.c.l.b16 %v218
  %v909 = vunpack.c.h.b16 %v218
  %v910 = vunpack.c.l.b16 %v219
  %v911 = vunpack.c.h.b16 %v219
  %v912 = vunpack.c.l.b16 %v220
  %v913 = vunpack.c.h.b16 %v220
  %v914 = vunpack.c.l.b16 %v221
  %v915 = vunpack.c.h.b16 %v221
  %v916 = vunpack.c.l.b16 %v222
  %v917 = vunpack.c.h.b16 %v222
  %v918 = vunpack.c.l.b16 %v223
  %v919 = vunpack.c.h.b16 %v223
  %v920 = vunpack.c.l.b16 %v224
  %v921 = vunpack.c.h.b16 %v224
  %v922 = vunpack.c.l.b16 %v225
  %v923 = vunpack.c.h.b16 %v225
  %v924 = vunpack.c.l.b16 %v226
  %v925 = vunpack.c.h.b16 %v226
  %v926 = vunpack.c.l.b16 %v227
  %v927 = vunpack.c.h.b16 %v227
  %v928 = vunpack.c.l.b16 %v228
  %v929 = vunpack.c.h.b16 %v228
  %v930 = vunpack.c.l.b16 %v229
  %v931 = vunpack.c.h.b16 %v229
  %v932 = vpack.c.b16 %v582, %v572
  %v933 = vpack.c.b16 %v583, %v573
  %v934 = vpack.c.b16 %v584, %v574
  %v935 = vpack.c.b16 %v585, %v575
  %v936 = vpack.c.b16 %v586, %v576
  %v937 = vpack.c.b16 %v587, %v577
  %v938 = vpack.c.b16 %v588, %v578
  %v939 = vpack.c.b16 %v589, %v579
  %v940 = vpack.c.b16 %v590, %v580
  %v941 = vpack.c.b16 %v591, %v581
  %v942 = vpack.c.b16 %v602, %v592
  %v943 = vpack.c.b16 %v603, %v593
  %v944 = vpack.c.b16 %v604, %v594
  %v945 = vpack.c.b16 %v605, %v595
  %v946 = vpack.c.b16 %v606, %v596
  %v947 = vpack.c.b16 %v607, %v597
  %v948 = vpack.c.b16 %v608, %v598
  %v949 = vpack.c.b16 %v609, %v599
  %v950 = vpack.c.b16 %v610, %v600
  %v951 = vpack.c.b16 %v611, %v601
  %v952 = vpack.c.b16 %v622, %v612
  %v953 = vpack.c.b16 %v623, %v613
  %v954 = vpack.c.b16 %v624, %v614
  %v955 = vpack.c.b16 %v625, %v615
  %v956 = vpack.c.b16 %v626, %v616
  %v957 = vpack.c.b16 %v627, %v617
  %v958 = vpack.c.b16 %v628, %v618
  %v959 = vpack.c.b16 %v629, %v619
  %v960 = vpack.c.b16 %v630, %v620
  %v961 = vpack.c.b16 %v631, %v621
  %v962 = vpack.c.b16 %v642, %v632
  %v963 = vpack.c.b16 %v643, %v633
  %v964 = vpack.c.b16 %v644, %v634
  %v965 = vpack.c.b16 %v645, %v635
  %v966 = vpack.c.b16 %v646, %v636
  %v967 = vpack.c.b16 %v647, %v637
  %v968 = vpack.c.b16 %v648, %v638
  %v969 = vpack.c.b16 %v649, %v639
  %v970 = vpack.c.b16 %v650, %v640
  %v971 = vpack.c.b16 %v651, %v641
  %v972 = vpack.c.b16 %v662, %v652
  %v973 = vpack.c.b16 %v663, %v653
  %v974 = vpack.c.b16 %v664, %v654
  %v975 = vpack.c.b16 %v665, %v655
  %v976 = vpack.c.b16 %v666, %v656
  %v977 = vpack.c.b16 %v667, %v657
  %v978 = vpack.c.b16 %v668, %v658
  %v979 = vpack.c.b16 %v669, %v659
  %v980 = vpack.c.b16 %v670, %v660
  %v981 = vpack.c.b16 %v671, %v661
  %v982 = vpack.c.b16 %v682, %v672
  %v983 = vpack.c.b16 %v683, %v673
  %v984 = vpack.c.b16 %v684, %v674
  %v985 = vpack.c.b16 %v685, %v675
  %v986 = vpack.c.b16 %v686, %v676
  %v987 = vpack.c.b16 %v687, %v677
  %v988 = vpack.c.b16 %v688, %v678
  %v989 = vpack.c.b16 %v689, %v679
  %v990 = vpack.c.b16 %v690, %v680
  %v991 = vpack.c.b16 %v691, %v681
  %v992 = vpack.c.b16 %v702, %v692
  %v993 = vpack.c.b16 %v703, %v693
  %v994 = vpack.c.b16 %v704, %v694
  %v995 = vpack.c.b16 %v705, %v695
  %v996 = vpack.c.b16 %v706, %v696
  %v997 = vpack.c.b16 %v707, %v697
  %v998 = vpack.c.b16 %v708, %v698
  %v999 = vpack.c.b16 %v709, %v699
  %v1000 = vpack.c.b16 %v710, %v700
  %v1001 = vpack.c.b16 %v711, %v701
  %v1002 = vpack.c.b16 %v722, %v712
  %v1003 = vpack.c.b16 %v723, %v713
  %v1004 = vpack.c.b16 %v724, %v714
  %v1005 = vpack.c.b16 %v725, %v715
  %v1006 = vpack.c.b16 %v726, %v716
  %v1007 = vpack.c.b16 %v727, %v717
  %v1008 = vpack.c.b16 %v728, %v718
  %v1009 = vpack.c.b16 %v729, %v719
  %v1010 = vpack.c.b16 %v730, %v720
  %v1011 = vpack.c.b16 %v731, %v721
  %v1012 = vpack.c.b16 %v742, %v732
  %v1013 = vpack.c.b16 %v743, %v733
  %v1014 = vpack.c.b16 %v744, %v734
  %v1015 = vpack.c.b16 %v745, %v735
  %v1016 = vpack.c.b16 %v746, %v736
  %v1017 = vpack.c.b16 %v747, %v737
  %v1018 = vpack.c.b16 %v748, %v738
  %v1019 = vpack.c.b16 %v749, %v739
  %v1020 = vpack.c.b16 %v750, %v740
  %v1021 = vpack.c.b16 %v751, %v741
  %v1022 = vpack.c.b16 %v762, %v752
  %v1023 = vpack.c.b16 %v763, %v753
  %v1024 = vpack.c.b16 %v764, %v754
  %v1025 = vpack.c.b16 %v765, %v755
  %v1026 = vpack.c.b16 %v766, %v756
  %v1027 = vpack.c.b16 %v767, %v757
  %v1028 = vpack.c.b16 %v768, %v758
  %v1029 = vpack.c.b16 %v769, %v759
  %v1030 = vpack.c.b16 %v770, %v760
  %v1031 = vpack.c.b16 %v771, %v761
  %v1032 = vpack.c.b16 %v782, %v772
  %v1033 = vpack.c.b16 %v783, %v773
  %v1034 = vpack.c.b16 %v784, %v774
  %v1035 = vpack.c.b16 %v785, %v775
  %v1036 = vpack.c.b16 %v786, %v776
  %v1037 = vpack.c.b16 %v787, %v777
  %v1038 = vpack.c.b16 %v788, %v778
  %v1039 = vpack.c.b16 %v789, %v779
  %v1040 = vpack.c.b16 %v790, %v780
  %v1041 = vpack.c.b16 %v791, %v781
  %v1042 = vpack.c.b16 %v802, %v792
  %v1043 = vpack.c.b16 %v803, %v793
  %v1044 = vpack.c.b16 %v804, %v794
  %v1045 = vpack.c.b16 %v805, %v795
  %v1046 = vpack.c.b16 %v806, %v796
  %v1047 = vpack.c.b16 %v807, %v797
  %v1048 = vpack.c.b16 %v808, %v798
  %v1049 = vpack.c.b16 %v809, %v799
  %v1050 = vpack.c.b16 %v810, %v800
  %v1051 = vpack.c.b16 %v811, %v801
  %v1052 = vpack.c.b16 %v822, %v812
  %v1053 = vpack.c.b16 %v823, %v813
  %v1054 = vpack.c.b16 %v824, %v814
  %v1055 = vpack.c.b16 %v825, %v815
  %v1056 = vpack.c.b16 %v826, %v816
  %v1057 = vpack.c.b16 %v827, %v817
  %v1058 = vpack.c.b16 %v828, %v818
  %v1059 = vpack.c.b16 %v829, %v819
  %v1060 = vpack.c.b16 %v830, %v820
  %v1061 = vpack.c.b16 %v831, %v821
  %v1062 = vpack.c.b16 %v842, %v832
  %v1063 = vpack.c.b16 %v843, %v833
  %v1064 = vpack.c.b16 %v844, %v834
  %v1065 = vpack.c.b16 %v845, %v835
  %v1066 = vpack.c.b16 %v846, %v836
  %v1067 = vpack.c.b16 %v847, %v837
  %v1068 = vpack.c.b16 %v848, %v838
  %v1069 = vpack.c.b16 %v849, %v839
  %v1070 = vpack.c.b16 %v850, %v840
  %v1071 = vpack.c.b16 %v851, %v841
  %v1072 = vpack.c.b16 %v862, %v852
  %v1073 = vpack.c.b16 %v863, %v853
  %v1074 = vpack.c.b16 %v864, %v854
  %v1075 = vpack.c.b16 %v865, %v855
  %v1076 = vpack.c.b16 %v866, %v856
  %v1077 = vpack.c.b16 %v867, %v857
  %v1078 = vpack.c.b16 %v868, %v858
  %v1079 = vpack.c.b16 %v869, %v859
  %v1080 = vpack.c.b16 %v870, %v860
  %v1081 = vpack.c.b16 %v871, %v861
  %v1082 = vpack.c.b16 %v882, %v872
  %v1083 = vpack.c.b16 %v883, %v873
  %v1084 = vpack.c.b16 %v884, %v874
  %v1085 = vpack.c.b16 %v885, %v875
  %v1086 = vpack.c.b16 %v886, %v876
  %v1087 = vpack.c.b16 %v887, %v877
  %v1088 = vpack.c.b16 %v888, %v878
  %v1089 = vpack.c.b16 %v889, %v879
  %v1090 = vpack.c.b16 %v890, %v880
  %v1091 = vpack.c.b16 %v891, %v881
  %v1092 = vpack.c.b16 %v902, %v892
  %v1093 = vpack.c.b16 %v903, %v893
  %v1094 = vpack.c.b16 %v904, %v894
  %v1095 = vpack.c.b16 %v905, %v895
  %v1096 = vpack.c.b16 %v906, %v896
  %v1097 = vpack.c.b16 %v907, %v897
  %v1098 = vpack.c.b16 %v908, %v898
  %v1099 = vpack.c.b16 %v909, %v899
  %v1100 = vpack.c.b16 %v910, %v900
  %v1101 = vpack.c.b16 %v911, %v901
  %v1102 = vpack.c.b16 %v922, %v912
  %v1103 = vpack.c.b16 %v923, %v913
  %v1104 = vpack.c.b16 %v924, %v914
  %v1105 = vpack.c.b16 %v925, %v915
  %v1106 = vpack.c.b16 %v926, %v916
  %v1107 = vpack.c.b16 %v927, %v917
  %v1108 = vpack.c.b16 %v928, %v918
  %v1109 = vpack.c.b16 %v929, %v919
  %v1110 = vpack.c.b16 %v930, %v920
  %v1111 = vpack.c.b16 %v931, %v921
  %v1424 = vunpack.c.l.b16 %v230
  %v1425 = vunpack.c.h.b16 %v230
  %v1426 = vunpack.c.l.b16 %v231
  %v1427 = vunpack.c.h.b16 %v231
  %v1428 = vunpack.c.l.b16 %v232
  %v1429 = vunpack.c.h.b16 %v232
  %v1430 = vunpack.c.l.b16 %v233
  %v1431 = vunpack.c.h.b16 %v233
  %v1432 = vunpack.c.l.b16 %v234
  %v1433 = vunpack.c.h.b16 %v234
  %v1434 = vunpack.c.l.b16 %v235
  %v1435 = vunpack.c.h.b16 %v235
  %v1436 = vunpack.c.l.b16 %v236
  %v1437 = vunpack.c.h.b16 %v236
  %v1438 = vunpack.c.l.b16 %v237
  %v1439 = vunpack.c.h.b16 %v237
  %v1440 = vunpack.c.l.b16 %v238
  %v1441 = vunpack.c.h.b16 %v238
  %v1442 = vunpack.c.l.b16 %v239
  %v1443 = vunpack.c.h.b16 %v239
  %v1444 = vunpack.c.l.b16 %v240
  %v1445 = vunpack.c.h.b16 %v240
  %v1446 = vunpack.c.l.b16 %v241
  %v1447 = vunpack.c.h.b16 %v241
  %v1448 = vunpack.c.l.b16 %v242
  %v1449 = vunpack.c.h.b16 %v242
  %v1450 = vunpack.c.l.b16 %v243
  %v1451 = vunpack.c.h.b16 %v243
  %v1452 = vunpack.c.l.b16 %v244
  %v1453 = vunpack.c.h.b16 %v244
  %v1454 = vunpack.c.l.b16 %v245
  %v1455 = vunpack.c.h.b16 %v245
  %v1456 = vunpack.c.l.b16 %v246
  %v1457 = vunpack.c.h.b16 %v246
  %v1458 = vunpack.c.l.b16 %v247
  %v1459 = vunpack.c.h.b16 %v247
  %v1460 = vunpack.c.l.b16 %v248
  %v1461 = vunpack.c.h.b16 %v248
  %v1462 = vunpack.c.l.b16 %v249
  %v1463 = vunpack.c.h.b16 %v249
  %v1464 = vunpack.c.l.b16 %v250
  %v1465 = vunpack.c.h.b16 %v250
  %v1466 = vunpack.c.l.b16 %v251
  %v1467 = vunpack.c.h.b16 %v251
  %v1468 = vunpack.c.l.b16 %v252
  %v1469 = vunpack.c.h.b16 %v252
  %v1470 = vunpack.c.l.b16 %v253
  %v1471 = vunpack.c.h.b16 %v253
  %v1472 = vunpack.c.l.b16 %v254
  %v1473 = vunpack.c.h.b16 %v254
  %v1474 = vunpack.c.l.b16 %v255
  %v1475 = vunpack.c.h.b16 %v255
  %v1476 = vunpack.c.l.b16 %v256
  %v1477 = vunpack.c.h.b16 %v256
  %v1478 = vunpack.c.l.b16 %v257
  %v1479 = vunpack.c.h.b16 %v257
  %v1480 = vunpack.c.l.b16 %v258
  %v1481 = vunpack.c.h.b16 %v258
  %v1482 = vunpack.c.l.b16 %v259
  %v1483 = vunpack.c.h.b16 %v259
  %v1484 = vunpack.c.l.b16 %v260
  %v1485 = vunpack.c.h.b16 %v260
  %v1486 = vunpack.c.l.b16 %v261
  %v1487 = vunpack.c.h.b16 %v261
  %v1488 = vunpack.c.l.b16 %v262
  %v1489 = vunpack.c.h.b16 %v262
  %v1490 = vunpack.c.l.b16 %v263
  %v1491 = vunpack.c.h.b16 %v263
  %v1492 = vunpack.c.l.b16 %v264
  %v1493 = vunpack.c.h.b16 %v264
  %v1494 = vunpack.c.l.b16 %v265
  %v1495 = vunpack.c.h.b16 %v265
  %v1496 = vunpack.c.l.b16 %v266
  %v1497 = vunpack.c.h.b16 %v266
  %v1498 = vunpack.c.l.b16 %v267
  %v1499 = vunpack.c.h.b16 %v267
  %v1500 = vunpack.c.l.b16 %v268
  %v1501 = vunpack.c.h.b16 %v268
  %v1502 = vunpack.c.l.b16 %v269
  %v1503 = vunpack.c.h.b16 %v269
  %v1504 = vunpack.c.l.b16 %v270
  %v1505 = vunpack.c.h.b16 %v270
  %v1506 = vunpack.c.l.b16 %v271
  %v1507 = vunpack.c.h.b16 %v271
  %v1508 = vunpack.c.l.b16 %v272
  %v1509 = vunpack.c.h.b16 %v272
  %v1510 = vunpack.c.l.b16 %v273
  %v1511 = vunpack.c.h.b16 %v273
  %v1512 = vunpack.c.l.b16 %v274
  %v1513 = vunpack.c.h.b16 %v274
  %v1514 = vunpack.c.l.b16 %v275
  %v1515 = vunpack.c.h.b16 %v275
  %v1516 = vunpack.c.l.b16 %v276
  %v1517 = vunpack.c.h.b16 %v276
  %v1518 = vunpack.c.l.b16 %v277
  %v1519 = vunpack.c.h.b16 %v277
  %v1520 = vunpack.c.l.b16 %v278
  %v1521 = vunpack.c.h.b16 %v278
  %v1522 = vunpack.c.l.b16 %v279
  %v1523 = vunpack.c.h.b16 %v279
  %v1524 = vunpack.c.l.b16 %v280
  %v1525 = vunpack.c.h.b16 %v280
  %v1526 = vunpack.c.l.b16 %v281
  %v1527 = vunpack.c.h.b16 %v281
  %v1528 = vunpack.c.l.b16 %v282
  %v1529 = vunpack.c.h.b16 %v282
  %v1530 = vunpack.c.l.b16 %v283
  %v1531 = vunpack.c.h.b16 %v283
  %v1532 = vunpack.c.l.b16 %v284
  %v1533 = vunpack.c.h.b16 %v284
  %v1534 = vunpack.c.l.b16 %v285
  %v1535 = vunpack.c.h.b16 %v285
  %v1536 = vunpack.c.l.b16 %v286
  %v1537 = vunpack.c.h.b16 %v286
  %v1538 = vunpack.c.l.b16 %v287
  %v1539 = vunpack.c.h.b16 %v287
  %v1540 = vunpack.c.l.b16 %v288
  %v1541 = vunpack.c.h.b16 %v288
  %v1542 = vunpack.c.l.b16 %v289
  %v1543 = vunpack.c.h.b16 %v289
  %v1544 = vunpack.c.l.b16 %v290
  %v1545 = vunpack.c.h.b16 %v290
  %v1546 = vunpack.c.l.b16 %v291
  %v1547 = vunpack.c.h.b16 %v291
  %v1548 = vunpack.c.l.b16 %v292
  %v1549 = vunpack.c.h.b16 %v292
  %v1550 = vunpack.c.l.b16 %v293
  %v1551 = vunpack.c.h.b16 %v293
  %v1552 = vunpack.c.l.b16 %v294
  %v1553 = vunpack.c.h.b16 %v294
  %v1554 = vunpack.c.l.b16 %v295
  %v1555 = vunpack.c.h.b16 %v295
  %v1556 = vunpack.c.l.b16 %v296
  %v1557 = vunpack.c.h.b16 %v296
  %v1558 = vunpack.c.l.b16 %v297
  %v1559 = vunpack.c.h.b16 %v297
  %v1560 = vunpack.c.l.b16 %v298
  %v1561 = vunpack.c.h.b16 %v298
  %v1562 = vunpack.c.l.b16 %v299
  %v1563 = vunpack.c.h.b16 %v299
  %v1564 = vunpack.c.l.b16 %v300
  %v1565 = vunpack.c.h.b16 %v300
  %v1566 = vunpack.c.l.b16 %v301
  %v1567 = vunpack.c.h.b16 %v301
  %v1568 = vunpack.c.l.b16 %v302
  %v1569 = vunpack.c.h.b16 %v302
  %v1570 = vunpack.c.l.b16 %v303
  %v1571 = vunpack.c.h.b16 %v303
  %v1572 = vunpack.c.l.b16 %v304
  %v1573 = vunpack.c.h.b16 %v304
  %v1574 = vunpack.c.l.b16 %v305
  %v1575 = vunpack.c.h.b16 %v305
  %v1576 = vunpack.c.l.b16 %v306
  %v1577 = vunpack.c.h.b16 %v306
  %v1578 = vunpack.c.l.b16 %v307
  %v1579 = vunpack.c.h.b16 %v307
  %v1580 = vunpack.c.l.b16 %v308
  %v1581 = vunpack.c.h.b16 %v308
  %v1582 = vunpack.c.l.b16 %v309
  %v1583 = vunpack.c.h.b16 %v309
  %v1584 = vunpack.c.l.b16 %v310
  %v1585 = vunpack.c.h.b16 %v310
  %v1586 = vunpack.c.l.b16 %v311
  %v1587 = vunpack.c.h.b16 %v311
  %v1588 = vunpack.c.l.b16 %v312
  %v1589 = vunpack.c.h.b16 %v312
  %v1590 = vunpack.c.l.b16 %v313
  %v1591 = vunpack.c.h.b16 %v313
  %v1592 = vunpack.c.l.b16 %v314
  %v1593 = vunpack.c.h.b16 %v314
  %v1594 = vunpack.c.l.b16 %v315
  %v1595 = vunpack.c.h.b16 %v315
  %v1596 = vunpack.c.l.b16 %v316
  %v1597 = vunpack.c.h.b16 %v316
  %v1598 = vunpack.c.l.b16 %v317
  %v1599 = vunpack.c.h.b16 %v317
  %v1600 = vunpack.c.l.b16 %v318
  %v1601 = vunpack.c.h.b16 %v318
  %v1602 = vunpack.c.l.b16 %v319
  %v1603 = vunpack.c.h.b16 %v319
  %v1604 = vunpack.c.l.b16 %v320
  %v1605 = vunpack.c.h.b16 %v320
  %v1606 = vunpack.c.l.b16 %v321
  %v1607 = vunpack.c.h.b16 %v321
  %v1608 = vunpack.c.l.b16 %v322
  %v1609 = vunpack.c.h.b16 %v322
  %v1610 = vunpack.c.l.b16 %v323
  %v1611 = vunpack.c.h.b16 %v323
  %v1612 = vunpack.c.l.b16 %v324
  %v1613 = vunpack.c.h.b16 %v324
  %v1614 = vunpack.c.l.b16 %v325
  %v1615 = vunpack.c.h.b16 %v325
  %v1616 = vunpack.c.l.b16 %v326
  %v1617 = vunpack.c.h.b16 %v326
  %v1618 = vunpack.c.l.b16 %v327
  %v1619 = vunpack.c.h.b16 %v327
  %v1620 = vunpack.c.l.b16 %v328
  %v1621 = vunpack.c.h.b16 %v328
  %v1622 = vunpack.c.l.b16 %v329
  %v1623 = vunpack.c.h.b16 %v329
  %v1624 = vunpack.c.l.b16 %v330
  %v1625 = vunpack.c.h.b16 %v330
  %v1626 = vunpack.c.l.b16 %v331
  %v1627 = vunpack.c.h.b16 %v331
  %v1628 = vunpack.c.l.b16 %v332
  %v1629 = vunpack.c.h.b16 %v332
  %v1630 = vunpack.c.l.b16 %v333
  %v1631 = vunpack.c.h.b16 %v333
  %v1632 = vunpack.c.l.b16 %v334
  %v1633 = vunpack.c.h.b16 %v334
  %v1634 = vunpack.c.l.b16 %v335
  %v1635 = vunpack.c.h.b16 %v335
  %v1636 = vunpack.c.l.b16 %v336
  %v1637 = vunpack.c.h.b16 %v336
  %v1638 = vunpack.c.l.b16 %v337
  %v1639 = vunpack.c.h.b16 %v337
  %v1640 = vunpack.c.l.b16 %v338
  %v1641 = vunpack.c.h.b16 %v338
  %v1642 = vunpack.c.l.b16 %v339
  %v1643 = vunpack.c.h.b16 %v339
  %v1644 = vunpack.c.l.b16 %v340
  %v1645 = vunpack.c.h.b16 %v340
  %v1646 = vunpack.c.l.b16 %v341
  %v1647 = vunpack.c.h.b16 %v341
  %v1648 = vunpack.c.l.b16 %v342
  %v1649 = vunpack.c.h.b16 %v342
  %v1650 = vunpack.c.l.b16 %v343
  %v1651 = vunpack.c.h.b16 %v343
  %v1652 = vunpack.c.l.b16 %v344
  %v1653 = vunpack.c.h.b16 %v344
  %v1654 = vunpack.c.l.b16 %v345
  %v1655 = vunpack.c.h.b16 %v345
  %v1656 = vunpack.c.l.b16 %v346
  %v1657 = vunpack.c.h.b16 %v346
  %v1658 = vunpack.c.l.b16 %v347
  %v1659 = vunpack.c.h.b16 %v347
  %v1660 = vunpack.c.l.b16 %v348
  %v1661 = vunpack.c.h.b16 %v348
  %v1662 = vunpack.c.l.b16 %v349
  %v1663 = vunpack.c.h.b16 %v349
  %v1664 = vunpack.c.l.b16 %v350
  %v1665 = vunpack.c.h.b16 %v350
  %v1666 = vunpack.c.l.b16 %v351
  %v1667 = vunpack.c.h.b16 %v351
  %v1668 = vunpack.c.l.b16 %v352
  %v1669 = vunpack.c.h.b16 %v352
  %v1670 = vunpack.c.l.b16 %v353
  %v1671 = vunpack.c.h.b16 %v353
  %v1672 = vunpack.c.l.b16 %v354
  %v1673 = vunpack.c.h.b16 %v354
  %v1674 = vunpack.c.l.b16 %v355
  %v1675 = vunpack.c.h.b16 %v355
  %v1676 = vunpack.c.l.b16 %v356
  %v1677 = vunpack.c.h.b16 %v356
  %v1678 = vunpack.c.l.b16 %v357
  %v1679 = vunpack.c.h.b16 %v357
  %v1680 = vunpack.c.l.b16 %v358
  %v1681 = vunpack.c.h.b16 %v358
  %v1682 = vunpack.c.l.b16 %v359
  %v1683 = vunpack.c.h.b16 %v359
  %v1684 = vunpack.c.l.b16 %v360
  %v1685 = vunpack.c.h.b16 %v360
  %v1686 = vunpack.c.l.b16 %v361
  %v1687 = vunpack.c.h.b16 %v361
  %v1688 = vunpack.c.l.b16 %v362
  %v1689 = vunpack.c.h.b16 %v362
  %v1690 = vunpack.c.l.b16 %v363
  %v1691 = vunpack.c.h.b16 %v363
  %v1692 = vunpack.c.l.b16 %v364
  %v1693 = vunpack.c.h.b16 %v364
  %v1694 = vunpack.c.l.b16 %v365
  %v1695 = vunpack.c.h.b16 %v365
  %v1696 = vunpack.c.l.b16 %v366
  %v1697 = vunpack.c.h.b16 %v366
  %v1698 = vunpack.c.l.b16 %v367
  %v1699 = vunpack.c.h.b16 %v367
  %v1700 = vunpack.c.l.b16 %v368
  %v1701 = vunpack.c.h.b16 %v368
  %v1702 = vunpack.c.l.b16 %v369
  %v1703 = vunpack.c.h.b16 %v369
  %v1704 = vunpack.c.l.b16 %v370
  %v1705 = vunpack.c.h.b16 %v370
  %v1706 = vunpack.c.l.b16 %v371
  %v1707 = vunpack.c.h.b16 %v371
  %v1708 = vunpack.c.l.b16 %v372
  %v1709 = vunpack.c.h.b16 %v372
  %v1710 = vunpack.c.l.b16 %v373
  %v1711 = vunpack.c.h.b16 %v373
  %v1712 = vunpack.c.l.b16 %v374
  %v1713 = vunpack.c.h.b16 %v374
  %v1714 = vunpack.c.l.b16 %v375
  %v1715 = vunpack.c.h.b16 %v375
  %v1716 = vunpack.c.l.b16 %v376
  %v1717 = vunpack.c.h.b16 %v376
  %v1718 = vunpack.c.l.b16 %v377
  %v1719 = vunpack.c.h.b16 %v377
  %v1720 = vunpack.c.l.b16 %v378
  %v1721 = vunpack.c.h.b16 %v378
  %v1722 = vunpack.c.l.b16 %v379
  %v1723 = vunpack.c.h.b16 %v379
  %v1724 = vpack.c.b16 %v1426, %v1424
  %v1725 = vpack.c.b16 %v1427, %v1425
  %v1726 = vpack.c.b16 %v1430, %v1428
  %v1727 = vpack.c.b16 %v1431, %v1429
  %v1728 = vpack.c.b16 %v1434, %v1432
  %v1729 = vpack.c.b16 %v1435, %v1433
  %v1730 = vpack.c.b16 %v1438, %v1436
  %v1731 = vpack.c.b16 %v1439, %v1437
  %v1732 = vpack.c.b16 %v1442, %v1440
  %v1733 = vpack.c.b16 %v1443, %v1441
  %v1734 = vpack.c.b16 %v1446, %v1444
  %v1735 = vpack.c.b16 %v1447, %v1445
  %v1736 = vpack.c.b16 %v1450, %v1448
  %v1737 = vpack.c.b16 %v1451, %v1449
  %v1738 = vpack.c.b16 %v1454, %v1452
  %v1739 = vpack.c.b16 %v1455, %v1453
  %v1740 = vpack.c.b16 %v1458, %v1456
  %v1741 = vpack.c.b16 %v1459, %v1457
  %v1742 = vpack.c.b16 %v1462, %v1460
  %v1743 = vpack.c.b16 %v1463, %v1461
  %v1744 = vpack.c.b16 %v1466, %v1464
  %v1745 = vpack.c.b16 %v1467, %v1465
  %v1746 = vpack.c.b16 %v1470, %v1468
  %v1747 = vpack.c.b16 %v1471, %v1469
  %v1748 = vpack.c.b16 %v1474, %v1472
  %v1749 = vpack.c.b16 %v1475, %v1473
  %v1750 = vpack.c.b16 %v1478, %v1476
  %v1751 = vpack.c.b16 %v1479, %v1477
  %v1752 = vpack.c.b16 %v1482, %v1480
  %v1753 = vpack.c.b16 %v1483, %v1481
  %v1754 = vpack.c.b16 %v1486, %v1484
  %v1755 = vpack.c.b16 %v1487, %v1485
  %v1756 = vpack.c.b16 %v1490, %v1488
  %v1757 = vpack.c.b16 %v1491, %v1489
  %v1758 = vpack.c.b16 %v1494, %v1492
  %v1759 = vpack.c.b16 %v1495, %v1493
  %v1760 = vpack.c.b16 %v1498, %v1496
  %v1761 = vpack.c.b16 %v1499, %v1497
  %v1762 = vpack.c.b16 %v1502, %v1500
  %v1763 = vpack.c.b16 %v1503, %v1501
  %v1764 = vpack.c.b16 %v1506, %v1504
  %v1765 = vpack.c.b16 %v1507, %v1505
  %v1766 = vpack.c.b16 %v1510, %v1508
  %v1767 = vpack.c.b16 %v1511, %v1509
  %v1768 = vpack.c.b16 %v1514, %v1512
  %v1769 = vpack.c.b16 %v1515, %v1513
  %v1770 = vpack.c.b16 %v1518, %v1516
  %v1771 = vpack.c.b16 %v1519, %v1517
  %v1772 = vpack.c.b16 %v1522, %v1520
  %v1773 = vpack.c.b16 %v1523, %v1521
  %v1774 = vpack.c.b16 %v1526, %v1524
  %v1775 = vpack.c.b16 %v1527, %v1525
  %v1776 = vpack.c.b16 %v1530, %v1528
  %v1777 = vpack.c.b16 %v1531, %v1529
  %v1778 = vpack.c.b16 %v1534, %v1532
  %v1779 = vpack.c.b16 %v1535, %v1533
  %v1780 = vpack.c.b16 %v1538, %v1536
  %v1781 = vpack.c.b16 %v1539, %v1537
  %v1782 = vpack.c.b16 %v1542, %v1540
  %v1783 = vpack.c.b16 %v1543, %v1541
  %v1784 = vpack.c.b16 %v1546, %v1544
  %v1785 = vpack.c.b16 %v1547, %v1545
  %v1786 = vpack.c.b16 %v1550, %v1548
  %v1787 = vpack.c.b16 %v1551, %v1549
  %v1788 = vpack.c.b16 %v1554, %v1552
  %v1789 = vpack.c.b16 %v1555, %v1553
  %v1790 = vpack.c.b16 %v1558, %v1556
  %v1791 = vpack.c.b16 %v1559, %v1557
  %v1792 = vpack.c.b16 %v1562, %v1560
  %v1793 = vpack.c.b16 %v1563, %v1561
  %v1794 = vpack.c.b16 %v1566, %v1564
  %v1795 = vpack.c.b16 %v1567, %v1565
  %v1796 = vpack.c.b16 %v1570, %v1568
  %v1797 = vpack.c.b16 %v1571, %v1569
  %v1798 = vpack.c.b16 %v1574, %v1572
  %v1799 = vpack.c.b16 %v1575, %v1573
  %v1800 = vpack.c.b16 %v1578, %v1576
  %v1801 = vpack.c.b16 %v1579, %v1577
  %v1802 = vpack.c.b16 %v1582, %v1580
  %v1803 = vpack.c.b16 %v1583, %v1581
  %v1804 = vpack.c.b16 %v1586, %v1584
  %v1805 = vpack.c.b16 %v1587, %v1585
  %v1806 = vpack.c.b16 %v1590, %v1588
  %v1807 = vpack.c.b16 %v1591, %v1589
  %v1808 = vpack.c.b16 %v1594, %v1592
  %v1809 = vpack.c.b16 %v1595, %v1593
  %v1810 = vpack.c.b16 %v1598, %v1596
  %v1811 = vpack.c.b16 %v1599, %v1597
  %v1812 = vpack.c.b16 %v1602, %v1600
  %v1813 = vpack.c.b16 %v1603, %v1601
  %v1814 = vpack.c.b16 %v1606, %v1604
  %v1815 = vpack.c.b16 %v1607, %v1605
  %v1816 = vpack.c.b16 %v1610, %v1608
  %v1817 = vpack.c.b16 %v1611, %v1609
  %v1818 = vpack.c.b16 %v1614, %v1612
  %v1819 = vpack.c.b16 %v1615, %v1613
  %v1820 = vpack.c.b16 %v1618, %v1616
  %v1821 = vpack.c.b16 %v1619, %v1617
  %v1822 = vpack.c.b16 %v1622, %v1620
  %v1823 = vpack.c.b16 %v1623, %v1621
  %v1824 = vpack.c.b16 %v1626, %v1624
  %v1825 = vpack.c.b16 %v1627, %v1625
  %v1826 = vpack.c.b16 %v1630, %v1628
  %v1827 = vpack.c.b16 %v1631, %v1629
  %v1828 = vpack.c.b16 %v1634, %v1632
  %v1829 = vpack.c.b16 %v1635, %v1633
  %v1830 = vpack.c.b16 %v1638, %v1636
  %v1831 = vpack.c.b16 %v1639, %v1637
  %v1832 = vpack.c.b16 %v1642, %v1640
  %v1833 = vpack.c.b16 %v1643, %v1641
  %v1834 = vpack.c.b16 %v1646, %v1644
  %v1835 = vpack.c.b16 %v1647, %v1645
  %v1836 = vpack.c.b16 %v1650, %v1648
  %v1837 = vpack.c.b16 %v1651, %v1649
  %v1838 = vpack.c.b16 %v1654, %v1652
  %v1839 = vpack.c.b16 %v1655, %v1653
  %v1840 = vpack.c.b16 %v1658, %v1656
  %v1841 = vpack.c.b16 %v1659, %v1657
  %v1842 = vpack.c.b16 %v1662, %v1660
  %v1843 = vpack.c.b16 %v1663, %v1661
  %v1844 = vpack.c.b16 %v1666, %v1664
  %v1845 = vpack.c.b16 %v1667, %v1665
  %v1846 = vpack.c.b16 %v1670, %v1668
  %v1847 = vpack.c.b16 %v1671, %v1669
  %v1848 = vpack.c.b16 %v1674, %v1672
  %v1849 = vpack.c.b16 %v1675, %v1673
  %v1850 = vpack.c.b16 %v1678, %v1676
  %v1851 = vpack.c.b16 %v1679, %v1677
  %v1852 = vpack.c.b16 %v1682, %v1680
  %v1853 = vpack.c.b16 %v1683, %v1681
  %v1854 = vpack.c.b16 %v1686, %v1684
  %v1855 = vpack.c.b16 %v1687, %v1685
  %v1856 = vpack.c.b16 %v1690, %v1688
  %v1857 = vpack.c.b16 %v1691, %v1689
  %v1858 = vpack.c.b16 %v1694, %v1692
  %v1859 = vpack.c.b16 %v1695, %v1693
  %v1860 = vpack.c.b16 %v1698, %v1696
  %v1861 = vpack.c.b16 %v1699, %v1697
  %v1862 = vpack.c.b16 %v1702, %v1700
  %v1863 = vpack.c.b16 %v1703, %v1701
  %v1864 = vpack.c.b16 %v1706, %v1704
  %v1865 = vpack.c.b16 %v1707, %v1705
  %v1866 = vpack.c.b16 %v1710, %v1708
  %v1867 = vpack.c.b16 %v1711, %v1709
  %v1868 = vpack.c.b16 %v1714, %v1712
  %v1869 = vpack.c.b16 %v1715, %v1713
  %v1870 = vpack.c.b16 %v1718, %v1716
  %v1871 = vpack.c.b16 %v1719, %v1717
  %v1872 = vpack.c.b16 %v1722, %v1720
  %v1873 = vpack.c.b16 %v1723, %v1721
  %vm2024 = vcmask 392192
  %v2026 = vsel %vm2024, %v941, 0
  %v2029 = vsel %vm2024, %v951, 0
  %v2032 = vsel %vm2024, %v961, 0
  %v2035 = vsel %vm2024, %v971, 0
  %v2038 = vsel %vm2024, %v981, 0
  %v2041 = vsel %vm2024, %v991, 0
  %v2044 = vsel %vm2024, %v1001, 0
  %v2047 = vsel %vm2024, %v1011, 0
  %v2050 = vsel %vm2024, %v1021, 0
  %v2053 = vsel %vm2024, %v1031, 0
  %v2056 = vsel %vm2024, %v1041, 0
  %v2059 = vsel %vm2024, %v1051, 0
  %v2062 = vsel %vm2024, %v1061, 0
  %v2065 = vsel %vm2024, %v1071, 0
  %v2068 = vsel %vm2024, %v1081, 0
  %v2071 = vsel %vm2024, %v1091, 0
  %v2074 = vsel %vm2024, %v1101, 0
  %v2077 = vsel %vm2024, %v1111, 0
  %2079 = vmatprep.subr.bf16.mxu0 %v1725
  %2080 = vmatpush1.bf16.msra.mxu0 %v1724
  %2081 = vmatprep.subr.bf16.mxu0 %v1727
  %2082 = vmatpush1.bf16.msra.mxu0 %v1726
  %2083 = vmatprep.subr.bf16.mxu0 %v1729
  %2084 = vmatpush1.bf16.msra.mxu0 %v1728
  %2085 = vmatprep.subr.bf16.mxu0 %v1731
  %2086 = vmatpush1.bf16.msra.mxu0 %v1730
  %2087 = vmatprep.subr.bf16.mxu0 %v1733
  %2088 = vmatpush1.bf16.msra.mxu0 %v1732
  %2089 = vmatprep.subr.bf16.mxu0 %v1735
  %2090 = vmatpush1.bf16.msra.mxu0 %v1734
  %2091 = vmatprep.subr.bf16.mxu0 %v1737
  %2092 = vmatpush1.bf16.msra.mxu0 %v1736
  %2093 = vmatprep.subr.bf16.mxu0 %v1739
  %2094 = vmatpush1.bf16.msra.mxu0 %v1738
  %2095 = vmatprep.subr.bf16.mxu0 %v1741
  %2096 = vmatpush1.bf16.msra.mxu0 %v1740
  %2097 = vmatprep.subr.bf16.mxu0 %v1743
  %2098 = vmatpush1.bf16.msra.mxu0 %v1742
  %2099 = vmatprep.subr.bf16.mxu0 %v1745
  %2100 = vmatpush1.bf16.msra.mxu0 %v1744
  %2101 = vmatprep.subr.bf16.mxu0 %v1747
  %2102 = vmatpush1.bf16.msra.mxu0 %v1746
  %2103 = vmatprep.subr.bf16.mxu0 %v1749
  %2104 = vmatpush1.bf16.msra.mxu0 %v1748
  %2105 = vmatprep.subr.bf16.mxu0 %v1751
  %2106 = vmatpush1.bf16.msra.mxu0 %v1750
  %2107 = vmatprep.subr.bf16.mxu0 %v1753
  %2108 = vmatpush1.bf16.msra.mxu0 %v1752
  %2109 = vmatprep.subr.bf16.mxu0 %v1755
  %2110 = vmatpush1.bf16.msra.mxu0 %v1754
  %2111 = vmatprep.mubr.bf16.mxu0 %v933
  %2112 = vmatmul.mubr.bf16.gmra.mrb[0].mxu0 %v932
  %v2113 = vpop.f32.mrb[0].mxu0
  %v2114 = vadd.f32 %v385, %v2113
  %v2115 = vpop.f32.mrb[0].mxu0
  %v2116 = vadd.f32 %v389, %v2115
  %v2117 = vpop.f32.mrb[0].mxu0
  %v2118 = vadd.f32 %v385, %v2117
  %v2119 = vpop.f32.mrb[0].mxu0
  %v2120 = vadd.f32 %v389, %v2119
  %2121 = vmatprep.mubr.bf16.mxu0 %v943
  %2122 = vmatmul.mubr.bf16.gmra.mrb[0].mxu0 %v942
  %v2123 = vpop.f32.mrb[0].mxu0
  %v2124 = vadd.f32 %v385, %v2123
  %v2125 = vpop.f32.mrb[0].mxu0
  %v2126 = vadd.f32 %v389, %v2125
  %v2127 = vpop.f32.mrb[0].mxu0
  %v2128 = vadd.f32 %v385, %v2127
  %v2129 = vpop.f32.mrb[0].mxu0
  %v2130 = vadd.f32 %v389, %v2129
  %2131 = vmatprep.mubr.bf16.mxu0 %v953
  %2132 = vmatmul.mubr.bf16.gmra.mrb[0].mxu0 %v952
  %v2133 = vpop.f32.mrb[0].mxu0
  %v2134 = vadd.f32 %v385, %v2133
  %v2135 = vpop.f32.mrb[0].mxu0
  %v2136 = vadd.f32 %v389, %v2135
  %v2137 = vpop.f32.mrb[0].mxu0
  %v2138 = vadd.f32 %v385, %v2137
  %v2139 = vpop.f32.mrb[0].mxu0
  %v2140 = vadd.f32 %v389, %v2139
  %2141 = vmatprep.mubr.bf16.mxu0 %v963
  %2142 = vmatmul.mubr.bf16.gmra.mrb[0].mxu0 %v962
  %v2143 = vpop.f32.mrb[0].mxu0
  %v2144 = vadd.f32 %v385, %v2143
  %v2145 = vpop.f32.mrb[0].mxu0
  %v2146 = vadd.f32 %v389, %v2145
  %v2147 = vpop.f32.mrb[0].mxu0
  %v2148 = vadd.f32 %v385, %v2147
  %v2149 = vpop.f32.mrb[0].mxu0
  %v2150 = vadd.f32 %v389, %v2149
  %2151 = vmatprep.mubr.bf16.mxu0 %v973
  %2152 = vmatmul.mubr.bf16.gmra.mrb[0].mxu0 %v972
  %v2153 = vpop.f32.mrb[0].mxu0
  %v2154 = vadd.f32 %v385, %v2153
  %v2155 = vpop.f32.mrb[0].mxu0
  %v2156 = vadd.f32 %v389, %v2155
  %v2157 = vpop.f32.mrb[0].mxu0
  %v2158 = vadd.f32 %v385, %v2157
  %v2159 = vpop.f32.mrb[0].mxu0
  %v2160 = vadd.f32 %v389, %v2159
  %2161 = vmatprep.mubr.bf16.mxu0 %v983
  %2162 = vmatmul.mubr.bf16.gmra.mrb[0].mxu0 %v982
  %v2163 = vpop.f32.mrb[0].mxu0
  %v2164 = vadd.f32 %v385, %v2163
  %v2165 = vpop.f32.mrb[0].mxu0
  %v2166 = vadd.f32 %v389, %v2165
  %v2167 = vpop.f32.mrb[0].mxu0
  %v2168 = vadd.f32 %v385, %v2167
  %v2169 = vpop.f32.mrb[0].mxu0
  %v2170 = vadd.f32 %v389, %v2169
  %2171 = vmatprep.mubr.bf16.mxu0 %v993
  %2172 = vmatmul.mubr.bf16.gmra.mrb[0].mxu0 %v992
  %v2173 = vpop.f32.mrb[0].mxu0
  %v2174 = vadd.f32 %v385, %v2173
  %v2175 = vpop.f32.mrb[0].mxu0
  %v2176 = vadd.f32 %v389, %v2175
  %v2177 = vpop.f32.mrb[0].mxu0
  %v2178 = vadd.f32 %v385, %v2177
  %v2179 = vpop.f32.mrb[0].mxu0
  %v2180 = vadd.f32 %v389, %v2179
  %2181 = vmatprep.mubr.bf16.mxu0 %v1003
  %2182 = vmatmul.mubr.bf16.gmra.mrb[0].mxu0 %v1002
  %v2183 = vpop.f32.mrb[0].mxu0
  %v2184 = vadd.f32 %v385, %v2183
  %v2185 = vpop.f32.mrb[0].mxu0
  %v2186 = vadd.f32 %v389, %v2185
  %v2187 = vpop.f32.mrb[0].mxu0
  %v2188 = vadd.f32 %v385, %v2187
  %v2189 = vpop.f32.mrb[0].mxu0
  %v2190 = vadd.f32 %v389, %v2189
  %2191 = vmatprep.mubr.bf16.mxu0 %v1013
  %2192 = vmatmul.mubr.bf16.gmra.mrb[0].mxu0 %v1012
  %v2193 = vpop.f32.mrb[0].mxu0
  %v2194 = vadd.f32 %v385, %v2193
  %v2195 = vpop.f32.mrb[0].mxu0
  %v2196 = vadd.f32 %v389, %v2195
  %v2197 = vpop.f32.mrb[0].mxu0
  %v2198 = vadd.f32 %v385, %v2197
  %v2199 = vpop.f32.mrb[0].mxu0
  %v2200 = vadd.f32 %v389, %v2199
  %2201 = vmatprep.mubr.bf16.mxu0 %v1023
  %2202 = vmatmul.mubr.bf16.gmra.mrb[0].mxu0 %v1022
  %v2203 = vpop.f32.mrb[0].mxu0
  %v2204 = vadd.f32 %v385, %v2203
  %v2205 = vpop.f32.mrb[0].mxu0
  %v2206 = vadd.f32 %v389, %v2205
  %v2207 = vpop.f32.mrb[0].mxu0
  %v2208 = vadd.f32 %v385, %v2207
  %v2209 = vpop.f32.mrb[0].mxu0
  %v2210 = vadd.f32 %v389, %v2209
  %2211 = vmatprep.mubr.bf16.mxu0 %v1033
  %2212 = vmatmul.mubr.bf16.gmra.mrb[0].mxu0 %v1032
  %v2213 = vpop.f32.mrb[0].mxu0
  %v2214 = vadd.f32 %v385, %v2213
  %v2215 = vpop.f32.mrb[0].mxu0
  %v2216 = vadd.f32 %v389, %v2215
  %v2217 = vpop.f32.mrb[0].mxu0
  %v2218 = vadd.f32 %v385, %v2217
  %v2219 = vpop.f32.mrb[0].mxu0
  %v2220 = vadd.f32 %v389, %v2219
  %2221 = vmatprep.mubr.bf16.mxu0 %v1043
  %2222 = vmatmul.mubr.bf16.gmra.mrb[0].mxu0 %v1042
  %v2223 = vpop.f32.mrb[0].mxu0
  %v2224 = vadd.f32 %v385, %v2223
  %v2225 = vpop.f32.mrb[0].mxu0
  %v2226 = vadd.f32 %v389, %v2225
  %v2227 = vpop.f32.mrb[0].mxu0
  %v2228 = vadd.f32 %v385, %v2227
  %v2229 = vpop.f32.mrb[0].mxu0
  %v2230 = vadd.f32 %v389, %v2229
  %2231 = vmatprep.mubr.bf16.mxu0 %v1053
  %2232 = vmatmul.mubr.bf16.gmra.mrb[0].mxu0 %v1052
  %v2233 = vpop.f32.mrb[0].mxu0
  %v2234 = vadd.f32 %v385, %v2233
  %v2235 = vpop.f32.mrb[0].mxu0
  %v2236 = vadd.f32 %v389, %v2235
  %v2237 = vpop.f32.mrb[0].mxu0
  %v2238 = vadd.f32 %v385, %v2237
  %v2239 = vpop.f32.mrb[0].mxu0
  %v2240 = vadd.f32 %v389, %v2239
  %2241 = vmatprep.mubr.bf16.mxu0 %v1063
  %2242 = vmatmul.mubr.bf16.gmra.mrb[0].mxu0 %v1062
  %v2243 = vpop.f32.mrb[0].mxu0
  %v2244 = vadd.f32 %v385, %v2243
  %v2245 = vpop.f32.mrb[0].mxu0
  %v2246 = vadd.f32 %v389, %v2245
  %v2247 = vpop.f32.mrb[0].mxu0
  %v2248 = vadd.f32 %v385, %v2247
  %v2249 = vpop.f32.mrb[0].mxu0
  %v2250 = vadd.f32 %v389, %v2249
  %2251 = vmatprep.mubr.bf16.mxu0 %v1073
  %2252 = vmatmul.mubr.bf16.gmra.mrb[0].mxu0 %v1072
  %v2253 = vpop.f32.mrb[0].mxu0
  %v2254 = vadd.f32 %v385, %v2253
  %v2255 = vpop.f32.mrb[0].mxu0
  %v2256 = vadd.f32 %v389, %v2255
  %v2257 = vpop.f32.mrb[0].mxu0
  %v2258 = vadd.f32 %v385, %v2257
  %v2259 = vpop.f32.mrb[0].mxu0
  %v2260 = vadd.f32 %v389, %v2259
  %2261 = vmatprep.mubr.bf16.mxu0 %v1083
  %2262 = vmatmul.mubr.bf16.gmra.mrb[0].mxu0 %v1082
  %v2263 = vpop.f32.mrb[0].mxu0
  %v2264 = vadd.f32 %v385, %v2263
  %v2265 = vpop.f32.mrb[0].mxu0
  %v2266 = vadd.f32 %v389, %v2265
  %v2267 = vpop.f32.mrb[0].mxu0
  %v2268 = vadd.f32 %v385, %v2267
  %v2269 = vpop.f32.mrb[0].mxu0
  %v2270 = vadd.f32 %v389, %v2269
  %2271 = vmatprep.mubr.bf16.mxu0 %v1093
  %2272 = vmatmul.mubr.bf16.gmra.mrb[0].mxu0 %v1092
  %v2273 = vpop.f32.mrb[0].mxu0
  %v2274 = vadd.f32 %v385, %v2273
  %v2275 = vpop.f32.mrb[0].mxu0
  %v2276 = vadd.f32 %v389, %v2275
  %v2277 = vpop.f32.mrb[0].mxu0
  %v2278 = vadd.f32 %v385, %v2277
  %v2279 = vpop.f32.mrb[0].mxu0
  %v2280 = vadd.f32 %v389, %v2279
  %2281 = vmatprep.mubr.bf16.mxu0 %v1103
  %2282 = vmatmul.mubr.bf16.gmra.mrb[0].mxu0 %v1102
  %v2283 = vpop.f32.mrb[0].mxu0
  %v2284 = vadd.f32 %v385, %v2283
  %v2285 = vpop.f32.mrb[0].mxu0
  %v2286 = vadd.f32 %v389, %v2285
  %v2287 = vpop.f32.mrb[0].mxu0
  %v2288 = vadd.f32 %v385, %v2287
  %v2289 = vpop.f32.mrb[0].mxu0
  %v2290 = vadd.f32 %v389, %v2289
  %2291 = vdwg.mxu0
  %2292 = vmatprep.subr.bf16.mxu0 %v1757
  %2293 = vmatpush1.bf16.msra.mxu0 %v1756
  %2294 = vmatprep.subr.bf16.mxu0 %v1759
  %2295 = vmatpush1.bf16.msra.mxu0 %v1758
  %2296 = vmatprep.subr.bf16.mxu0 %v1761
  %2297 = vmatpush1.bf16.msra.mxu0 %v1760
  %2298 = vmatprep.subr.bf16.mxu0 %v1763
  %2299 = vmatpush1.bf16.msra.mxu0 %v1762
  %2300 = vmatprep.subr.bf16.mxu0 %v1765
  %2301 = vmatpush1.bf16.msra.mxu0 %v1764
  %2302 = vmatprep.subr.bf16.mxu0 %v1767
  %2303 = vmatpush1.bf16.msra.mxu0 %v1766
  %2304 = vmatprep.subr.bf16.mxu0 %v1769
  %2305 = vmatpush1.bf16.msra.mxu0 %v1768
  %2306 = vmatprep.subr.bf16.mxu0 %v1771
  %2307 = vmatpush1.bf16.msra.mxu0 %v1770
  %2308 = vmatprep.subr.bf16.mxu0 %v1773
  %2309 = vmatpush1.bf16.msra.mxu0 %v1772
  %2310 = vmatprep.subr.bf16.mxu0 %v1775
  %2311 = vmatpush1.bf16.msra.mxu0 %v1774
  %2312 = vmatprep.subr.bf16.mxu0 %v1777
  %2313 = vmatpush1.bf16.msra.mxu0 %v1776
  %2314 = vmatprep.subr.bf16.mxu0 %v1779
  %2315 = vmatpush1.bf16.msra.mxu0 %v1778
  %2316 = vmatprep.subr.bf16.mxu0 %v1781
  %2317 = vmatpush1.bf16.msra.mxu0 %v1780
  %2318 = vmatprep.subr.bf16.mxu0 %v1783
  %2319 = vmatpush1.bf16.msra.mxu0 %v1782
  %2320 = vmatprep.subr.bf16.mxu0 %v1785
  %2321 = vmatpush1.bf16.msra.mxu0 %v1784
  %2322 = vmatprep.subr.bf16.mxu0 %v1787
  %2323 = vmatpush1.bf16.msra.mxu0 %v1786
  %2324 = vmatprep.mubr.bf16.mxu0 %v935
  %2325 = vmatmul.mubr.bf16.gmra.mrb[0].mxu0 %v934
  %v2326 = vpop.f32.mrb[0].mxu0
  %v2327 = vadd.f32 %v2114, %v2326
  %v2328 = vpop.f32.mrb[0].mxu0
  %v2329 = vadd.f32 %v2116, %v2328
  %v2330 = vpop.f32.mrb[0].mxu0
  %v2331 = vadd.f32 %v2118, %v2330
  %v2332 = vpop.f32.mrb[0].mxu0
  %v2333 = vadd.f32 %v2120, %v2332
  %2334 = vmatprep.mubr.bf16.mxu0 %v945
  %2335 = vmatmul.mubr.bf16.gmra.mrb[0].mxu0 %v944
  %v2336 = vpop.f32.mrb[0].mxu0
  %v2337 = vadd.f32 %v2124, %v2336
  %v2338 = vpop.f32.mrb[0].mxu0
  %v2339 = vadd.f32 %v2126, %v2338
  %v2340 = vpop.f32.mrb[0].mxu0
  %v2341 = vadd.f32 %v2128, %v2340
  %v2342 = vpop.f32.mrb[0].mxu0
  %v2343 = vadd.f32 %v2130, %v2342
  %2344 = vmatprep.mubr.bf16.mxu0 %v955
  %2345 = vmatmul.mubr.bf16.gmra.mrb[0].mxu0 %v954
  %v2346 = vpop.f32.mrb[0].mxu0
  %v2347 = vadd.f32 %v2134, %v2346
  %v2348 = vpop.f32.mrb[0].mxu0
  %v2349 = vadd.f32 %v2136, %v2348
  %v2350 = vpop.f32.mrb[0].mxu0
  %v2351 = vadd.f32 %v2138, %v2350
  %v2352 = vpop.f32.mrb[0].mxu0
  %v2353 = vadd.f32 %v2140, %v2352
  %2354 = vmatprep.mubr.bf16.mxu0 %v965
  %2355 = vmatmul.mubr.bf16.gmra.mrb[0].mxu0 %v964
  %v2356 = vpop.f32.mrb[0].mxu0
  %v2357 = vadd.f32 %v2144, %v2356
  %v2358 = vpop.f32.mrb[0].mxu0
  %v2359 = vadd.f32 %v2146, %v2358
  %v2360 = vpop.f32.mrb[0].mxu0
  %v2361 = vadd.f32 %v2148, %v2360
  %v2362 = vpop.f32.mrb[0].mxu0
  %v2363 = vadd.f32 %v2150, %v2362
  %2364 = vmatprep.mubr.bf16.mxu0 %v975
  %2365 = vmatmul.mubr.bf16.gmra.mrb[0].mxu0 %v974
  %v2366 = vpop.f32.mrb[0].mxu0
  %v2367 = vadd.f32 %v2154, %v2366
  %v2368 = vpop.f32.mrb[0].mxu0
  %v2369 = vadd.f32 %v2156, %v2368
  %v2370 = vpop.f32.mrb[0].mxu0
  %v2371 = vadd.f32 %v2158, %v2370
  %v2372 = vpop.f32.mrb[0].mxu0
  %v2373 = vadd.f32 %v2160, %v2372
  %2374 = vmatprep.mubr.bf16.mxu0 %v985
  %2375 = vmatmul.mubr.bf16.gmra.mrb[0].mxu0 %v984
  %v2376 = vpop.f32.mrb[0].mxu0
  %v2377 = vadd.f32 %v2164, %v2376
  %v2378 = vpop.f32.mrb[0].mxu0
  %v2379 = vadd.f32 %v2166, %v2378
  %v2380 = vpop.f32.mrb[0].mxu0
  %v2381 = vadd.f32 %v2168, %v2380
  %v2382 = vpop.f32.mrb[0].mxu0
  %v2383 = vadd.f32 %v2170, %v2382
  %2384 = vmatprep.mubr.bf16.mxu0 %v995
  %2385 = vmatmul.mubr.bf16.gmra.mrb[0].mxu0 %v994
  %v2386 = vpop.f32.mrb[0].mxu0
  %v2387 = vadd.f32 %v2174, %v2386
  %v2388 = vpop.f32.mrb[0].mxu0
  %v2389 = vadd.f32 %v2176, %v2388
  %v2390 = vpop.f32.mrb[0].mxu0
  %v2391 = vadd.f32 %v2178, %v2390
  %v2392 = vpop.f32.mrb[0].mxu0
  %v2393 = vadd.f32 %v2180, %v2392
  %2394 = vmatprep.mubr.bf16.mxu0 %v1005
  %2395 = vmatmul.mubr.bf16.gmra.mrb[0].mxu0 %v1004
  %v2396 = vpop.f32.mrb[0].mxu0
  %v2397 = vadd.f32 %v2184, %v2396
  %v2398 = vpop.f32.mrb[0].mxu0
  %v2399 = vadd.f32 %v2186, %v2398
  %v2400 = vpop.f32.mrb[0].mxu0
  %v2401 = vadd.f32 %v2188, %v2400
  %v2402 = vpop.f32.mrb[0].mxu0
  %v2403 = vadd.f32 %v2190, %v2402
  %2404 = vmatprep.mubr.bf16.mxu0 %v1015
  %2405 = vmatmul.mubr.bf16.gmra.mrb[0].mxu0 %v1014
  %v2406 = vpop.f32.mrb[0].mxu0
  %v2407 = vadd.f32 %v2194, %v2406
  %v2408 = vpop.f32.mrb[0].mxu0
  %v2409 = vadd.f32 %v2196, %v2408
  %v2410 = vpop.f32.mrb[0].mxu0
  %v2411 = vadd.f32 %v2198, %v2410
  %v2412 = vpop.f32.mrb[0].mxu0
  %v2413 = vadd.f32 %v2200, %v2412
  %2414 = vmatprep.mubr.bf16.mxu0 %v1025
  %2415 = vmatmul.mubr.bf16.gmra.mrb[0].mxu0 %v1024
  %v2416 = vpop.f32.mrb[0].mxu0
  %v2417 = vadd.f32 %v2204, %v2416
  %v2418 = vpop.f32.mrb[0].mxu0
  %v2419 = vadd.f32 %v2206, %v2418
  %v2420 = vpop.f32.mrb[0].mxu0
  %v2421 = vadd.f32 %v2208, %v2420
  %v2422 = vpop.f32.mrb[0].mxu0
  %v2423 = vadd.f32 %v2210, %v2422
  %2424 = vmatprep.mubr.bf16.mxu0 %v1035
  %2425 = vmatmul.mubr.bf16.gmra.mrb[0].mxu0 %v1034
  %v2426 = vpop.f32.mrb[0].mxu0
  %v2427 = vadd.f32 %v2214, %v2426
  %v2428 = vpop.f32.mrb[0].mxu0
  %v2429 = vadd.f32 %v2216, %v2428
  %v2430 = vpop.f32.mrb[0].mxu0
  %v2431 = vadd.f32 %v2218, %v2430
  %v2432 = vpop.f32.mrb[0].mxu0
  %v2433 = vadd.f32 %v2220, %v2432
  %2434 = vmatprep.mubr.bf16.mxu0 %v1045
  %2435 = vmatmul.mubr.bf16.gmra.mrb[0].mxu0 %v1044
  %v2436 = vpop.f32.mrb[0].mxu0
  %v2437 = vadd.f32 %v2224, %v2436
  %v2438 = vpop.f32.mrb[0].mxu0
  %v2439 = vadd.f32 %v2226, %v2438
  %v2440 = vpop.f32.mrb[0].mxu0
  %v2441 = vadd.f32 %v2228, %v2440
  %v2442 = vpop.f32.mrb[0].mxu0
  %v2443 = vadd.f32 %v2230, %v2442
  %2444 = vmatprep.mubr.bf16.mxu0 %v1055
  %2445 = vmatmul.mubr.bf16.gmra.mrb[0].mxu0 %v1054
  %v2446 = vpop.f32.mrb[0].mxu0
  %v2447 = vadd.f32 %v2234, %v2446
  %v2448 = vpop.f32.mrb[0].mxu0
  %v2449 = vadd.f32 %v2236, %v2448
  %v2450 = vpop.f32.mrb[0].mxu0
  %v2451 = vadd.f32 %v2238, %v2450
  %v2452 = vpop.f32.mrb[0].mxu0
  %v2453 = vadd.f32 %v2240, %v2452
  %2454 = vmatprep.mubr.bf16.mxu0 %v1065
  %2455 = vmatmul.mubr.bf16.gmra.mrb[0].mxu0 %v1064
  %v2456 = vpop.f32.mrb[0].mxu0
  %v2457 = vadd.f32 %v2244, %v2456
  %v2458 = vpop.f32.mrb[0].mxu0
  %v2459 = vadd.f32 %v2246, %v2458
  %v2460 = vpop.f32.mrb[0].mxu0
  %v2461 = vadd.f32 %v2248, %v2460
  %v2462 = vpop.f32.mrb[0].mxu0
  %v2463 = vadd.f32 %v2250, %v2462
  %2464 = vmatprep.mubr.bf16.mxu0 %v1075
  %2465 = vmatmul.mubr.bf16.gmra.mrb[0].mxu0 %v1074
  %v2466 = vpop.f32.mrb[0].mxu0
  %v2467 = vadd.f32 %v2254, %v2466
  %v2468 = vpop.f32.mrb[0].mxu0
  %v2469 = vadd.f32 %v2256, %v2468
  %v2470 = vpop.f32.mrb[0].mxu0
  %v2471 = vadd.f32 %v2258, %v2470
  %v2472 = vpop.f32.mrb[0].mxu0
  %v2473 = vadd.f32 %v2260, %v2472
  %2474 = vmatprep.mubr.bf16.mxu0 %v1085
  %2475 = vmatmul.mubr.bf16.gmra.mrb[0].mxu0 %v1084
  %v2476 = vpop.f32.mrb[0].mxu0
  %v2477 = vadd.f32 %v2264, %v2476
  %v2478 = vpop.f32.mrb[0].mxu0
  %v2479 = vadd.f32 %v2266, %v2478
  %v2480 = vpop.f32.mrb[0].mxu0
  %v2481 = vadd.f32 %v2268, %v2480
  %v2482 = vpop.f32.mrb[0].mxu0
  %v2483 = vadd.f32 %v2270, %v2482
  %2484 = vmatprep.mubr.bf16.mxu0 %v1095
  %2485 = vmatmul.mubr.bf16.gmra.mrb[0].mxu0 %v1094
  %v2486 = vpop.f32.mrb[0].mxu0
  %v2487 = vadd.f32 %v2274, %v2486
  %v2488 = vpop.f32.mrb[0].mxu0
  %v2489 = vadd.f32 %v2276, %v2488
  %v2490 = vpop.f32.mrb[0].mxu0
  %v2491 = vadd.f32 %v2278, %v2490
  %v2492 = vpop.f32.mrb[0].mxu0
  %v2493 = vadd.f32 %v2280, %v2492
  %2494 = vmatprep.mubr.bf16.mxu0 %v1105
  %2495 = vmatmul.mubr.bf16.gmra.mrb[0].mxu0 %v1104
  %v2496 = vpop.f32.mrb[0].mxu0
  %v2497 = vadd.f32 %v2284, %v2496
  %v2498 = vpop.f32.mrb[0].mxu0
  %v2499 = vadd.f32 %v2286, %v2498
  %v2500 = vpop.f32.mrb[0].mxu0
  %v2501 = vadd.f32 %v2288, %v2500
  %v2502 = vpop.f32.mrb[0].mxu0
  %v2503 = vadd.f32 %v2290, %v2502
  %2504 = vdwg.mxu0
  %2505 = vmatprep.subr.bf16.mxu0 %v1789
  %2506 = vmatpush1.bf16.msra.mxu0 %v1788
  %2507 = vmatprep.subr.bf16.mxu0 %v1791
  %2508 = vmatpush1.bf16.msra.mxu0 %v1790
  %2509 = vmatprep.subr.bf16.mxu0 %v1793
  %2510 = vmatpush1.bf16.msra.mxu0 %v1792
  %2511 = vmatprep.subr.bf16.mxu0 %v1795
  %2512 = vmatpush1.bf16.msra.mxu0 %v1794
  %2513 = vmatprep.subr.bf16.mxu0 %v1797
  %2514 = vmatpush1.bf16.msra.mxu0 %v1796
  %2515 = vmatprep.subr.bf16.mxu0 %v1799
  %2516 = vmatpush1.bf16.msra.mxu0 %v1798
  %2517 = vmatprep.subr.bf16.mxu0 %v1801
  %2518 = vmatpush1.bf16.msra.mxu0 %v1800
  %2519 = vmatprep.subr.bf16.mxu0 %v1803
  %2520 = vmatpush1.bf16.msra.mxu0 %v1802
  %2521 = vmatprep.subr.bf16.mxu0 %v1805
  %2522 = vmatpush1.bf16.msra.mxu0 %v1804
  %2523 = vmatprep.subr.bf16.mxu0 %v1807
  %2524 = vmatpush1.bf16.msra.mxu0 %v1806
  %2525 = vmatprep.subr.bf16.mxu0 %v1809
  %2526 = vmatpush1.bf16.msra.mxu0 %v1808
  %2527 = vmatprep.subr.bf16.mxu0 %v1811
  %2528 = vmatpush1.bf16.msra.mxu0 %v1810
  %2529 = vmatprep.subr.bf16.mxu0 %v1813
  %2530 = vmatpush1.bf16.msra.mxu0 %v1812
  %2531 = vmatprep.subr.bf16.mxu0 %v1815
  %2532 = vmatpush1.bf16.msra.mxu0 %v1814
  %2533 = vmatprep.subr.bf16.mxu0 %v1817
  %2534 = vmatpush1.bf16.msra.mxu0 %v1816
  %2535 = vmatprep.subr.bf16.mxu0 %v1819
  %2536 = vmatpush1.bf16.msra.mxu0 %v1818
  %2537 = vmatprep.mubr.bf16.mxu0 %v937
  %2538 = vmatmul.mubr.bf16.gmra.mrb[0].mxu0 %v936
  %v2539 = vpop.f32.mrb[0].mxu0
  %v2540 = vadd.f32 %v2327, %v2539
  %v2541 = vpop.f32.mrb[0].mxu0
  %v2542 = vadd.f32 %v2329, %v2541
  %v2543 = vpop.f32.mrb[0].mxu0
  %v2544 = vadd.f32 %v2331, %v2543
  %v2545 = vpop.f32.mrb[0].mxu0
  %v2546 = vadd.f32 %v2333, %v2545
  %2547 = vmatprep.mubr.bf16.mxu0 %v947
  %2548 = vmatmul.mubr.bf16.gmra.mrb[0].mxu0 %v946
  %v2549 = vpop.f32.mrb[0].mxu0
  %v2550 = vadd.f32 %v2337, %v2549
  %v2551 = vpop.f32.mrb[0].mxu0
  %v2552 = vadd.f32 %v2339, %v2551
  %v2553 = vpop.f32.mrb[0].mxu0
  %v2554 = vadd.f32 %v2341, %v2553
  %v2555 = vpop.f32.mrb[0].mxu0
  %v2556 = vadd.f32 %v2343, %v2555
  %2557 = vmatprep.mubr.bf16.mxu0 %v957
  %2558 = vmatmul.mubr.bf16.gmra.mrb[0].mxu0 %v956
  %v2559 = vpop.f32.mrb[0].mxu0
  %v2560 = vadd.f32 %v2347, %v2559
  %v2561 = vpop.f32.mrb[0].mxu0
  %v2562 = vadd.f32 %v2349, %v2561
  %v2563 = vpop.f32.mrb[0].mxu0
  %v2564 = vadd.f32 %v2351, %v2563
  %v2565 = vpop.f32.mrb[0].mxu0
  %v2566 = vadd.f32 %v2353, %v2565
  %2567 = vmatprep.mubr.bf16.mxu0 %v967
  %2568 = vmatmul.mubr.bf16.gmra.mrb[0].mxu0 %v966
  %v2569 = vpop.f32.mrb[0].mxu0
  %v2570 = vadd.f32 %v2357, %v2569
  %v2571 = vpop.f32.mrb[0].mxu0
  %v2572 = vadd.f32 %v2359, %v2571
  %v2573 = vpop.f32.mrb[0].mxu0
  %v2574 = vadd.f32 %v2361, %v2573
  %v2575 = vpop.f32.mrb[0].mxu0
  %v2576 = vadd.f32 %v2363, %v2575
  %2577 = vmatprep.mubr.bf16.mxu0 %v977
  %2578 = vmatmul.mubr.bf16.gmra.mrb[0].mxu0 %v976
  %v2579 = vpop.f32.mrb[0].mxu0
  %v2580 = vadd.f32 %v2367, %v2579
  %v2581 = vpop.f32.mrb[0].mxu0
  %v2582 = vadd.f32 %v2369, %v2581
  %v2583 = vpop.f32.mrb[0].mxu0
  %v2584 = vadd.f32 %v2371, %v2583
  %v2585 = vpop.f32.mrb[0].mxu0
  %v2586 = vadd.f32 %v2373, %v2585
  %2587 = vmatprep.mubr.bf16.mxu0 %v987
  %2588 = vmatmul.mubr.bf16.gmra.mrb[0].mxu0 %v986
  %v2589 = vpop.f32.mrb[0].mxu0
  %v2590 = vadd.f32 %v2377, %v2589
  %v2591 = vpop.f32.mrb[0].mxu0
  %v2592 = vadd.f32 %v2379, %v2591
  %v2593 = vpop.f32.mrb[0].mxu0
  %v2594 = vadd.f32 %v2381, %v2593
  %v2595 = vpop.f32.mrb[0].mxu0
  %v2596 = vadd.f32 %v2383, %v2595
  %2597 = vmatprep.mubr.bf16.mxu0 %v997
  %2598 = vmatmul.mubr.bf16.gmra.mrb[0].mxu0 %v996
  %v2599 = vpop.f32.mrb[0].mxu0
  %v2600 = vadd.f32 %v2387, %v2599
  %v2601 = vpop.f32.mrb[0].mxu0
  %v2602 = vadd.f32 %v2389, %v2601
  %v2603 = vpop.f32.mrb[0].mxu0
  %v2604 = vadd.f32 %v2391, %v2603
  %v2605 = vpop.f32.mrb[0].mxu0
  %v2606 = vadd.f32 %v2393, %v2605
  %2607 = vmatprep.mubr.bf16.mxu0 %v1007
  %2608 = vmatmul.mubr.bf16.gmra.mrb[0].mxu0 %v1006
  %v2609 = vpop.f32.mrb[0].mxu0
  %v2610 = vadd.f32 %v2397, %v2609
  %v2611 = vpop.f32.mrb[0].mxu0
  %v2612 = vadd.f32 %v2399, %v2611
  %v2613 = vpop.f32.mrb[0].mxu0
  %v2614 = vadd.f32 %v2401, %v2613
  %v2615 = vpop.f32.mrb[0].mxu0
  %v2616 = vadd.f32 %v2403, %v2615
  %2617 = vmatprep.mubr.bf16.mxu0 %v1017
  %2618 = vmatmul.mubr.bf16.gmra.mrb[0].mxu0 %v1016
  %v2619 = vpop.f32.mrb[0].mxu0
  %v2620 = vadd.f32 %v2407, %v2619
  %v2621 = vpop.f32.mrb[0].mxu0
  %v2622 = vadd.f32 %v2409, %v2621
  %v2623 = vpop.f32.mrb[0].mxu0
  %v2624 = vadd.f32 %v2411, %v2623
  %v2625 = vpop.f32.mrb[0].mxu0
  %v2626 = vadd.f32 %v2413, %v2625
  %2627 = vmatprep.mubr.bf16.mxu0 %v1027
  %2628 = vmatmul.mubr.bf16.gmra.mrb[0].mxu0 %v1026
  %v2629 = vpop.f32.mrb[0].mxu0
  %v2630 = vadd.f32 %v2417, %v2629
  %v2631 = vpop.f32.mrb[0].mxu0
  %v2632 = vadd.f32 %v2419, %v2631
  %v2633 = vpop.f32.mrb[0].mxu0
  %v2634 = vadd.f32 %v2421, %v2633
  %v2635 = vpop.f32.mrb[0].mxu0
  %v2636 = vadd.f32 %v2423, %v2635
  %2637 = vmatprep.mubr.bf16.mxu0 %v1037
  %2638 = vmatmul.mubr.bf16.gmra.mrb[0].mxu0 %v1036
  %v2639 = vpop.f32.mrb[0].mxu0
  %v2640 = vadd.f32 %v2427, %v2639
  %v2641 = vpop.f32.mrb[0].mxu0
  %v2642 = vadd.f32 %v2429, %v2641
  %v2643 = vpop.f32.mrb[0].mxu0
  %v2644 = vadd.f32 %v2431, %v2643
  %v2645 = vpop.f32.mrb[0].mxu0
  %v2646 = vadd.f32 %v2433, %v2645
  %2647 = vmatprep.mubr.bf16.mxu0 %v1047
  %2648 = vmatmul.mubr.bf16.gmra.mrb[0].mxu0 %v1046
  %v2649 = vpop.f32.mrb[0].mxu0
  %v2650 = vadd.f32 %v2437, %v2649
  %v2651 = vpop.f32.mrb[0].mxu0
  %v2652 = vadd.f32 %v2439, %v2651
  %v2653 = vpop.f32.mrb[0].mxu0
  %v2654 = vadd.f32 %v2441, %v2653
  %v2655 = vpop.f32.mrb[0].mxu0
  %v2656 = vadd.f32 %v2443, %v2655
  %2657 = vmatprep.mubr.bf16.mxu0 %v1057
  %2658 = vmatmul.mubr.bf16.gmra.mrb[0].mxu0 %v1056
  %v2659 = vpop.f32.mrb[0].mxu0
  %v2660 = vadd.f32 %v2447, %v2659
  %v2661 = vpop.f32.mrb[0].mxu0
  %v2662 = vadd.f32 %v2449, %v2661
  %v2663 = vpop.f32.mrb[0].mxu0
  %v2664 = vadd.f32 %v2451, %v2663
  %v2665 = vpop.f32.mrb[0].mxu0
  %v2666 = vadd.f32 %v2453, %v2665
  %2667 = vmatprep.mubr.bf16.mxu0 %v1067
  %2668 = vmatmul.mubr.bf16.gmra.mrb[0].mxu0 %v1066
  %v2669 = vpop.f32.mrb[0].mxu0
  %v2670 = vadd.f32 %v2457, %v2669
  %v2671 = vpop.f32.mrb[0].mxu0
  %v2672 = vadd.f32 %v2459, %v2671
  %v2673 = vpop.f32.mrb[0].mxu0
  %v2674 = vadd.f32 %v2461, %v2673
  %v2675 = vpop.f32.mrb[0].mxu0
  %v2676 = vadd.f32 %v2463, %v2675
  %2677 = vmatprep.mubr.bf16.mxu0 %v1077
  %2678 = vmatmul.mubr.bf16.gmra.mrb[0].mxu0 %v1076
  %v2679 = vpop.f32.mrb[0].mxu0
  %v2680 = vadd.f32 %v2467, %v2679
  %v2681 = vpop.f32.mrb[0].mxu0
  %v2682 = vadd.f32 %v2469, %v2681
  %v2683 = vpop.f32.mrb[0].mxu0
  %v2684 = vadd.f32 %v2471, %v2683
  %v2685 = vpop.f32.mrb[0].mxu0
  %v2686 = vadd.f32 %v2473, %v2685
  %2687 = vmatprep.mubr.bf16.mxu0 %v1087
  %2688 = vmatmul.mubr.bf16.gmra.mrb[0].mxu0 %v1086
  %v2689 = vpop.f32.mrb[0].mxu0
  %v2690 = vadd.f32 %v2477, %v2689
  %v2691 = vpop.f32.mrb[0].mxu0
  %v2692 = vadd.f32 %v2479, %v2691
  %v2693 = vpop.f32.mrb[0].mxu0
  %v2694 = vadd.f32 %v2481, %v2693
  %v2695 = vpop.f32.mrb[0].mxu0
  %v2696 = vadd.f32 %v2483, %v2695
  %2697 = vmatprep.mubr.bf16.mxu0 %v1097
  %2698 = vmatmul.mubr.bf16.gmra.mrb[0].mxu0 %v1096
  %v2699 = vpop.f32.mrb[0].mxu0
  %v2700 = vadd.f32 %v2487, %v2699
  %v2701 = vpop.f32.mrb[0].mxu0
  %v2702 = vadd.f32 %v2489, %v2701
  %v2703 = vpop.f32.mrb[0].mxu0
  %v2704 = vadd.f32 %v2491, %v2703
  %v2705 = vpop.f32.mrb[0].mxu0
  %v2706 = vadd.f32 %v2493, %v2705
  %2707 = vmatprep.mubr.bf16.mxu0 %v1107
  %2708 = vmatmul.mubr.bf16.gmra.mrb[0].mxu0 %v1106
  %v2709 = vpop.f32.mrb[0].mxu0
  %v2710 = vadd.f32 %v2497, %v2709
  %v2711 = vpop.f32.mrb[0].mxu0
  %v2712 = vadd.f32 %v2499, %v2711
  %v2713 = vpop.f32.mrb[0].mxu0
  %v2714 = vadd.f32 %v2501, %v2713
  %v2715 = vpop.f32.mrb[0].mxu0
  %v2716 = vadd.f32 %v2503, %v2715
  %2717 = vdwg.mxu0
  %2718 = vmatprep.subr.bf16.mxu0 %v1821
  %2719 = vmatpush1.bf16.msra.mxu0 %v1820
  %2720 = vmatprep.subr.bf16.mxu0 %v1823
  %2721 = vmatpush1.bf16.msra.mxu0 %v1822
  %2722 = vmatprep.subr.bf16.mxu0 %v1825
  %2723 = vmatpush1.bf16.msra.mxu0 %v1824
  %2724 = vmatprep.subr.bf16.mxu0 %v1827
  %2725 = vmatpush1.bf16.msra.mxu0 %v1826
  %2726 = vmatprep.subr.bf16.mxu0 %v1829
  %2727 = vmatpush1.bf16.msra.mxu0 %v1828
  %2728 = vmatprep.subr.bf16.mxu0 %v1831
  %2729 = vmatpush1.bf16.msra.mxu0 %v1830
  %2730 = vmatprep.subr.bf16.mxu0 %v1833
  %2731 = vmatpush1.bf16.msra.mxu0 %v1832
  %2732 = vmatprep.subr.bf16.mxu0 %v1835
  %2733 = vmatpush1.bf16.msra.mxu0 %v1834
  %2734 = vmatprep.subr.bf16.mxu0 %v1837
  %2735 = vmatpush1.bf16.msra.mxu0 %v1836
  %2736 = vmatprep.subr.bf16.mxu0 %v1839
  %2737 = vmatpush1.bf16.msra.mxu0 %v1838
  %2738 = vmatprep.subr.bf16.mxu0 %v1841
  %2739 = vmatpush1.bf16.msra.mxu0 %v1840
  %2740 = vmatprep.subr.bf16.mxu0 %v1843
  %2741 = vmatpush1.bf16.msra.mxu0 %v1842
  %2742 = vmatprep.subr.bf16.mxu0 %v1845
  %2743 = vmatpush1.bf16.msra.mxu0 %v1844
  %2744 = vmatprep.subr.bf16.mxu0 %v1847
  %2745 = vmatpush1.bf16.msra.mxu0 %v1846
  %2746 = vmatprep.subr.bf16.mxu0 %v1849
  %2747 = vmatpush1.bf16.msra.mxu0 %v1848
  %2748 = vmatprep.subr.bf16.mxu0 %v1851
  %2749 = vmatpush1.bf16.msra.mxu0 %v1850
  %2750 = vmatprep.mubr.bf16.mxu0 %v939
  %2751 = vmatmul.mubr.bf16.gmra.mrb[0].mxu0 %v938
  %v2752 = vpop.f32.mrb[0].mxu0
  %v2753 = vadd.f32 %v2540, %v2752
  %v2754 = vpop.f32.mrb[0].mxu0
  %v2755 = vadd.f32 %v2542, %v2754
  %v2756 = vpop.f32.mrb[0].mxu0
  %v2757 = vadd.f32 %v2544, %v2756
  %v2758 = vpop.f32.mrb[0].mxu0
  %v2759 = vadd.f32 %v2546, %v2758
  %2760 = vmatprep.mubr.bf16.mxu0 %v949
  %2761 = vmatmul.mubr.bf16.gmra.mrb[0].mxu0 %v948
  %v2762 = vpop.f32.mrb[0].mxu0
  %v2763 = vadd.f32 %v2550, %v2762
  %v2764 = vpop.f32.mrb[0].mxu0
  %v2765 = vadd.f32 %v2552, %v2764
  %v2766 = vpop.f32.mrb[0].mxu0
  %v2767 = vadd.f32 %v2554, %v2766
  %v2768 = vpop.f32.mrb[0].mxu0
  %v2769 = vadd.f32 %v2556, %v2768
  %2770 = vmatprep.mubr.bf16.mxu0 %v959
  %2771 = vmatmul.mubr.bf16.gmra.mrb[0].mxu0 %v958
  %v2772 = vpop.f32.mrb[0].mxu0
  %v2773 = vadd.f32 %v2560, %v2772
  %v2774 = vpop.f32.mrb[0].mxu0
  %v2775 = vadd.f32 %v2562, %v2774
  %v2776 = vpop.f32.mrb[0].mxu0
  %v2777 = vadd.f32 %v2564, %v2776
  %v2778 = vpop.f32.mrb[0].mxu0
  %v2779 = vadd.f32 %v2566, %v2778
  %2780 = vmatprep.mubr.bf16.mxu0 %v969
  %2781 = vmatmul.mubr.bf16.gmra.mrb[0].mxu0 %v968
  %v2782 = vpop.f32.mrb[0].mxu0
  %v2783 = vadd.f32 %v2570, %v2782
  %v2784 = vpop.f32.mrb[0].mxu0
  %v2785 = vadd.f32 %v2572, %v2784
  %v2786 = vpop.f32.mrb[0].mxu0
  %v2787 = vadd.f32 %v2574, %v2786
  %v2788 = vpop.f32.mrb[0].mxu0
  %v2789 = vadd.f32 %v2576, %v2788
  %2790 = vmatprep.mubr.bf16.mxu0 %v979
  %2791 = vmatmul.mubr.bf16.gmra.mrb[0].mxu0 %v978
  %v2792 = vpop.f32.mrb[0].mxu0
  %v2793 = vadd.f32 %v2580, %v2792
  %v2794 = vpop.f32.mrb[0].mxu0
  %v2795 = vadd.f32 %v2582, %v2794
  %v2796 = vpop.f32.mrb[0].mxu0
  %v2797 = vadd.f32 %v2584, %v2796
  %v2798 = vpop.f32.mrb[0].mxu0
  %v2799 = vadd.f32 %v2586, %v2798
  %2800 = vmatprep.mubr.bf16.mxu0 %v989
  %2801 = vmatmul.mubr.bf16.gmra.mrb[0].mxu0 %v988
  %v2802 = vpop.f32.mrb[0].mxu0
  %v2803 = vadd.f32 %v2590, %v2802
  %v2804 = vpop.f32.mrb[0].mxu0
  %v2805 = vadd.f32 %v2592, %v2804
  %v2806 = vpop.f32.mrb[0].mxu0
  %v2807 = vadd.f32 %v2594, %v2806
  %v2808 = vpop.f32.mrb[0].mxu0
  %v2809 = vadd.f32 %v2596, %v2808
  %2810 = vmatprep.mubr.bf16.mxu0 %v999
  %2811 = vmatmul.mubr.bf16.gmra.mrb[0].mxu0 %v998
  %v2812 = vpop.f32.mrb[0].mxu0
  %v2813 = vadd.f32 %v2600, %v2812
  %v2814 = vpop.f32.mrb[0].mxu0
  %v2815 = vadd.f32 %v2602, %v2814
  %v2816 = vpop.f32.mrb[0].mxu0
  %v2817 = vadd.f32 %v2604, %v2816
  %v2818 = vpop.f32.mrb[0].mxu0
  %v2819 = vadd.f32 %v2606, %v2818
  %2820 = vmatprep.mubr.bf16.mxu0 %v1009
  %2821 = vmatmul.mubr.bf16.gmra.mrb[0].mxu0 %v1008
  %v2822 = vpop.f32.mrb[0].mxu0
  %v2823 = vadd.f32 %v2610, %v2822
  %v2824 = vpop.f32.mrb[0].mxu0
  %v2825 = vadd.f32 %v2612, %v2824
  %v2826 = vpop.f32.mrb[0].mxu0
  %v2827 = vadd.f32 %v2614, %v2826
  %v2828 = vpop.f32.mrb[0].mxu0
  %v2829 = vadd.f32 %v2616, %v2828
  %2830 = vmatprep.mubr.bf16.mxu0 %v1019
  %2831 = vmatmul.mubr.bf16.gmra.mrb[0].mxu0 %v1018
  %v2832 = vpop.f32.mrb[0].mxu0
  %v2833 = vadd.f32 %v2620, %v2832
  %v2834 = vpop.f32.mrb[0].mxu0
  %v2835 = vadd.f32 %v2622, %v2834
  %v2836 = vpop.f32.mrb[0].mxu0
  %v2837 = vadd.f32 %v2624, %v2836
  %v2838 = vpop.f32.mrb[0].mxu0
  %v2839 = vadd.f32 %v2626, %v2838
  %2840 = vmatprep.mubr.bf16.mxu0 %v1029
  %2841 = vmatmul.mubr.bf16.gmra.mrb[0].mxu0 %v1028
  %v2842 = vpop.f32.mrb[0].mxu0
  %v2843 = vadd.f32 %v2630, %v2842
  %v2844 = vpop.f32.mrb[0].mxu0
  %v2845 = vadd.f32 %v2632, %v2844
  %v2846 = vpop.f32.mrb[0].mxu0
  %v2847 = vadd.f32 %v2634, %v2846
  %v2848 = vpop.f32.mrb[0].mxu0
  %v2849 = vadd.f32 %v2636, %v2848
  %2850 = vmatprep.mubr.bf16.mxu0 %v1039
  %2851 = vmatmul.mubr.bf16.gmra.mrb[0].mxu0 %v1038
  %v2852 = vpop.f32.mrb[0].mxu0
  %v2853 = vadd.f32 %v2640, %v2852
  %v2854 = vpop.f32.mrb[0].mxu0
  %v2855 = vadd.f32 %v2642, %v2854
  %v2856 = vpop.f32.mrb[0].mxu0
  %v2857 = vadd.f32 %v2644, %v2856
  %v2858 = vpop.f32.mrb[0].mxu0
  %v2859 = vadd.f32 %v2646, %v2858
  %2860 = vmatprep.mubr.bf16.mxu0 %v1049
  %2861 = vmatmul.mubr.bf16.gmra.mrb[0].mxu0 %v1048
  %v2862 = vpop.f32.mrb[0].mxu0
  %v2863 = vadd.f32 %v2650, %v2862
  %v2864 = vpop.f32.mrb[0].mxu0
  %v2865 = vadd.f32 %v2652, %v2864
  %v2866 = vpop.f32.mrb[0].mxu0
  %v2867 = vadd.f32 %v2654, %v2866
  %v2868 = vpop.f32.mrb[0].mxu0
  %v2869 = vadd.f32 %v2656, %v2868
  %2870 = vmatprep.mubr.bf16.mxu0 %v1059
  %2871 = vmatmul.mubr.bf16.gmra.mrb[0].mxu0 %v1058
  %v2872 = vpop.f32.mrb[0].mxu0
  %v2873 = vadd.f32 %v2660, %v2872
  %v2874 = vpop.f32.mrb[0].mxu0
  %v2875 = vadd.f32 %v2662, %v2874
  %v2876 = vpop.f32.mrb[0].mxu0
  %v2877 = vadd.f32 %v2664, %v2876
  %v2878 = vpop.f32.mrb[0].mxu0
  %v2879 = vadd.f32 %v2666, %v2878
  %2880 = vmatprep.mubr.bf16.mxu0 %v1069
  %2881 = vmatmul.mubr.bf16.gmra.mrb[0].mxu0 %v1068
  %v2882 = vpop.f32.mrb[0].mxu0
  %v2883 = vadd.f32 %v2670, %v2882
  %v2884 = vpop.f32.mrb[0].mxu0
  %v2885 = vadd.f32 %v2672, %v2884
  %v2886 = vpop.f32.mrb[0].mxu0
  %v2887 = vadd.f32 %v2674, %v2886
  %v2888 = vpop.f32.mrb[0].mxu0
  %v2889 = vadd.f32 %v2676, %v2888
  %2890 = vmatprep.mubr.bf16.mxu0 %v1079
  %2891 = vmatmul.mubr.bf16.gmra.mrb[0].mxu0 %v1078
  %v2892 = vpop.f32.mrb[0].mxu0
  %v2893 = vadd.f32 %v2680, %v2892
  %v2894 = vpop.f32.mrb[0].mxu0
  %v2895 = vadd.f32 %v2682, %v2894
  %v2896 = vpop.f32.mrb[0].mxu0
  %v2897 = vadd.f32 %v2684, %v2896
  %v2898 = vpop.f32.mrb[0].mxu0
  %v2899 = vadd.f32 %v2686, %v2898
  %2900 = vmatprep.mubr.bf16.mxu0 %v1089
  %2901 = vmatmul.mubr.bf16.gmra.mrb[0].mxu0 %v1088
  %v2902 = vpop.f32.mrb[0].mxu0
  %v2903 = vadd.f32 %v2690, %v2902
  %v2904 = vpop.f32.mrb[0].mxu0
  %v2905 = vadd.f32 %v2692, %v2904
  %v2906 = vpop.f32.mrb[0].mxu0
  %v2907 = vadd.f32 %v2694, %v2906
  %v2908 = vpop.f32.mrb[0].mxu0
  %v2909 = vadd.f32 %v2696, %v2908
  %2910 = vmatprep.mubr.bf16.mxu0 %v1099
  %2911 = vmatmul.mubr.bf16.gmra.mrb[0].mxu0 %v1098
  %v2912 = vpop.f32.mrb[0].mxu0
  %v2913 = vadd.f32 %v2700, %v2912
  %v2914 = vpop.f32.mrb[0].mxu0
  %v2915 = vadd.f32 %v2702, %v2914
  %v2916 = vpop.f32.mrb[0].mxu0
  %v2917 = vadd.f32 %v2704, %v2916
  %v2918 = vpop.f32.mrb[0].mxu0
  %v2919 = vadd.f32 %v2706, %v2918
  %2920 = vmatprep.mubr.bf16.mxu0 %v1109
  %2921 = vmatmul.mubr.bf16.gmra.mrb[0].mxu0 %v1108
  %v2922 = vpop.f32.mrb[0].mxu0
  %v2923 = vadd.f32 %v2710, %v2922
  %v2924 = vpop.f32.mrb[0].mxu0
  %v2925 = vadd.f32 %v2712, %v2924
  %v2926 = vpop.f32.mrb[0].mxu0
  %v2927 = vadd.f32 %v2714, %v2926
  %v2928 = vpop.f32.mrb[0].mxu0
  %v2929 = vadd.f32 %v2716, %v2928
  %2930 = vdwg.mxu0
  %2931 = vmatprep.subr.bf16.mxu0 %v1853
  %2932 = vmatpush1.bf16.msra.mxu0 %v1852
  %2933 = vmatprep.subr.bf16.mxu0 %v1855
  %2934 = vmatpush1.bf16.msra.mxu0 %v1854
  %2935 = vmatprep.subr.bf16.mxu0 %v1857
  %2936 = vmatpush1.bf16.msra.mxu0 %v1856
  %2937 = vmatprep.subr.bf16.mxu0 %v1859
  %2938 = vmatpush1.bf16.msra.mxu0 %v1858
  %2939 = vmatprep.subr.bf16.mxu0 %v1861
  %2940 = vmatpush1.bf16.msra.mxu0 %v1860
  %2941 = vmatprep.subr.bf16.mxu0 %v1863
  %2942 = vmatpush1.bf16.msra.mxu0 %v1862
  %2943 = vmatprep.subr.bf16.mxu0 %v1865
  %2944 = vmatpush1.bf16.msra.mxu0 %v1864
  %2945 = vmatprep.subr.bf16.mxu0 %v1867
  %2946 = vmatpush1.bf16.msra.mxu0 %v1866
  %2947 = vmatprep.subr.bf16.mxu0 %v1869
  %2948 = vmatpush1.bf16.msra.mxu0 %v1868
  %2949 = vmatprep.subr.bf16.mxu0 %v1871
  %2950 = vmatpush1.bf16.msra.mxu0 %v1870
  %2951 = vmatprep.subr.bf16.mxu0 %v1873
  %2952 = vmatpush1.bf16.msra.mxu0 %v1872
  %2953 = vmatprep.subr.bf16.mxu0 0
  %2954 = vmatpush1.bf16.msra.mxu0 0
  %2955 = vmatprep.subr.bf16.mxu0 0
  %2956 = vmatpush1.bf16.msra.mxu0 0
  %2957 = vmatprep.subr.bf16.mxu0 0
  %2958 = vmatpush1.bf16.msra.mxu0 0
  %2959 = vmatprep.subr.bf16.mxu0 0
  %2960 = vmatpush1.bf16.msra.mxu0 0
  %2961 = vmatprep.subr.bf16.mxu0 0
  %2962 = vmatpush1.bf16.msra.mxu0 0
  %2963 = vmatprep.mubr.bf16.mxu0 %v2026
  %2964 = vmatmul.mubr.bf16.gmra.mrb[0].mxu0 %v940
  %v2965 = vpop.f32.mrb[0].mxu0
  %v2966 = vadd.f32 %v2753, %v2965
  %v2967 = vpop.f32.mrb[0].mxu0
  %v2968 = vadd.f32 %v2755, %v2967
  %v2969 = vpop.f32.mrb[0].mxu0
  %v2970 = vadd.f32 %v2757, %v2969
  %v2971 = vpop.f32.mrb[0].mxu0
  %v2972 = vadd.f32 %v2759, %v2971
  %2973 = vmatprep.mubr.bf16.mxu0 %v2029
  %2974 = vmatmul.mubr.bf16.gmra.mrb[0].mxu0 %v950
  %v2975 = vpop.f32.mrb[0].mxu0
  %v2976 = vadd.f32 %v2763, %v2975
  %v2977 = vpop.f32.mrb[0].mxu0
  %v2978 = vadd.f32 %v2765, %v2977
  %v2979 = vpop.f32.mrb[0].mxu0
  %v2980 = vadd.f32 %v2767, %v2979
  %v2981 = vpop.f32.mrb[0].mxu0
  %v2982 = vadd.f32 %v2769, %v2981
  %2983 = vmatprep.mubr.bf16.mxu0 %v2032
  %2984 = vmatmul.mubr.bf16.gmra.mrb[0].mxu0 %v960
  %v2985 = vpop.f32.mrb[0].mxu0
  %v2986 = vadd.f32 %v2773, %v2985
  %v2987 = vpop.f32.mrb[0].mxu0
  %v2988 = vadd.f32 %v2775, %v2987
  %v2989 = vpop.f32.mrb[0].mxu0
  %v2990 = vadd.f32 %v2777, %v2989
  %v2991 = vpop.f32.mrb[0].mxu0
  %v2992 = vadd.f32 %v2779, %v2991
  %2993 = vmatprep.mubr.bf16.mxu0 %v2035
  %2994 = vmatmul.mubr.bf16.gmra.mrb[0].mxu0 %v970
  %v2995 = vpop.f32.mrb[0].mxu0
  %v2996 = vadd.f32 %v2783, %v2995
  %v2997 = vpop.f32.mrb[0].mxu0
  %v2998 = vadd.f32 %v2785, %v2997
  %v2999 = vpop.f32.mrb[0].mxu0
  %v3000 = vadd.f32 %v2787, %v2999
  %v3001 = vpop.f32.mrb[0].mxu0
  %v3002 = vadd.f32 %v2789, %v3001
  %3003 = vmatprep.mubr.bf16.mxu0 %v2038
  %3004 = vmatmul.mubr.bf16.gmra.mrb[0].mxu0 %v980
  %v3005 = vpop.f32.mrb[0].mxu0
  %v3006 = vadd.f32 %v2793, %v3005
  %v3007 = vpop.f32.mrb[0].mxu0
  %v3008 = vadd.f32 %v2795, %v3007
  %v3009 = vpop.f32.mrb[0].mxu0
  %v3010 = vadd.f32 %v2797, %v3009
  %v3011 = vpop.f32.mrb[0].mxu0
  %v3012 = vadd.f32 %v2799, %v3011
  %3013 = vmatprep.mubr.bf16.mxu0 %v2041
  %3014 = vmatmul.mubr.bf16.gmra.mrb[0].mxu0 %v990
  %v3015 = vpop.f32.mrb[0].mxu0
  %v3016 = vadd.f32 %v2803, %v3015
  %v3017 = vpop.f32.mrb[0].mxu0
  %v3018 = vadd.f32 %v2805, %v3017
  %v3019 = vpop.f32.mrb[0].mxu0
  %v3020 = vadd.f32 %v2807, %v3019
  %v3021 = vpop.f32.mrb[0].mxu0
  %v3022 = vadd.f32 %v2809, %v3021
  %3023 = vmatprep.mubr.bf16.mxu0 %v2044
  %3024 = vmatmul.mubr.bf16.gmra.mrb[0].mxu0 %v1000
  %v3025 = vpop.f32.mrb[0].mxu0
  %v3026 = vadd.f32 %v2813, %v3025
  %v3027 = vpop.f32.mrb[0].mxu0
  %v3028 = vadd.f32 %v2815, %v3027
  %v3029 = vpop.f32.mrb[0].mxu0
  %v3030 = vadd.f32 %v2817, %v3029
  %v3031 = vpop.f32.mrb[0].mxu0
  %v3032 = vadd.f32 %v2819, %v3031
  %3033 = vmatprep.mubr.bf16.mxu0 %v2047
  %3034 = vmatmul.mubr.bf16.gmra.mrb[0].mxu0 %v1010
  %v3035 = vpop.f32.mrb[0].mxu0
  %v3036 = vadd.f32 %v2823, %v3035
  %v3037 = vpop.f32.mrb[0].mxu0
  %v3038 = vadd.f32 %v2825, %v3037
  %v3039 = vpop.f32.mrb[0].mxu0
  %v3040 = vadd.f32 %v2827, %v3039
  %v3041 = vpop.f32.mrb[0].mxu0
  %v3042 = vadd.f32 %v2829, %v3041
  %3043 = vmatprep.mubr.bf16.mxu0 %v2050
  %3044 = vmatmul.mubr.bf16.gmra.mrb[0].mxu0 %v1020
  %v3045 = vpop.f32.mrb[0].mxu0
  %v3046 = vadd.f32 %v2833, %v3045
  %v3047 = vpop.f32.mrb[0].mxu0
  %v3048 = vadd.f32 %v2835, %v3047
  %v3049 = vpop.f32.mrb[0].mxu0
  %v3050 = vadd.f32 %v2837, %v3049
  %v3051 = vpop.f32.mrb[0].mxu0
  %v3052 = vadd.f32 %v2839, %v3051
  %3053 = vmatprep.mubr.bf16.mxu0 %v2053
  %3054 = vmatmul.mubr.bf16.gmra.mrb[0].mxu0 %v1030
  %v3055 = vpop.f32.mrb[0].mxu0
  %v3056 = vadd.f32 %v2843, %v3055
  %v3057 = vpop.f32.mrb[0].mxu0
  %v3058 = vadd.f32 %v2845, %v3057
  %v3059 = vpop.f32.mrb[0].mxu0
  %v3060 = vadd.f32 %v2847, %v3059
  %v3061 = vpop.f32.mrb[0].mxu0
  %v3062 = vadd.f32 %v2849, %v3061
  %3063 = vmatprep.mubr.bf16.mxu0 %v2056
  %3064 = vmatmul.mubr.bf16.gmra.mrb[0].mxu0 %v1040
  %v3065 = vpop.f32.mrb[0].mxu0
  %v3066 = vadd.f32 %v2853, %v3065
  %v3067 = vpop.f32.mrb[0].mxu0
  %v3068 = vadd.f32 %v2855, %v3067
  %v3069 = vpop.f32.mrb[0].mxu0
  %v3070 = vadd.f32 %v2857, %v3069
  %v3071 = vpop.f32.mrb[0].mxu0
  %v3072 = vadd.f32 %v2859, %v3071
  %3073 = vmatprep.mubr.bf16.mxu0 %v2059
  %3074 = vmatmul.mubr.bf16.gmra.mrb[0].mxu0 %v1050
  %v3075 = vpop.f32.mrb[0].mxu0
  %v3076 = vadd.f32 %v2863, %v3075
  %v3077 = vpop.f32.mrb[0].mxu0
  %v3078 = vadd.f32 %v2865, %v3077
  %v3079 = vpop.f32.mrb[0].mxu0
  %v3080 = vadd.f32 %v2867, %v3079
  %v3081 = vpop.f32.mrb[0].mxu0
  %v3082 = vadd.f32 %v2869, %v3081
  %3083 = vmatprep.mubr.bf16.mxu0 %v2062
  %3084 = vmatmul.mubr.bf16.gmra.mrb[0].mxu0 %v1060
  %v3085 = vpop.f32.mrb[0].mxu0
  %v3086 = vadd.f32 %v2873, %v3085
  %v3087 = vpop.f32.mrb[0].mxu0
  %v3088 = vadd.f32 %v2875, %v3087
  %v3089 = vpop.f32.mrb[0].mxu0
  %v3090 = vadd.f32 %v2877, %v3089
  %v3091 = vpop.f32.mrb[0].mxu0
  %v3092 = vadd.f32 %v2879, %v3091
  %3093 = vmatprep.mubr.bf16.mxu0 %v2065
  %3094 = vmatmul.mubr.bf16.gmra.mrb[0].mxu0 %v1070
  %v3095 = vpop.f32.mrb[0].mxu0
  %v3096 = vadd.f32 %v2883, %v3095
  %v3097 = vpop.f32.mrb[0].mxu0
  %v3098 = vadd.f32 %v2885, %v3097
  %v3099 = vpop.f32.mrb[0].mxu0
  %v3100 = vadd.f32 %v2887, %v3099
  %v3101 = vpop.f32.mrb[0].mxu0
  %v3102 = vadd.f32 %v2889, %v3101
  %3103 = vmatprep.mubr.bf16.mxu0 %v2068
  %3104 = vmatmul.mubr.bf16.gmra.mrb[0].mxu0 %v1080
  %v3105 = vpop.f32.mrb[0].mxu0
  %v3106 = vadd.f32 %v2893, %v3105
  %v3107 = vpop.f32.mrb[0].mxu0
  %v3108 = vadd.f32 %v2895, %v3107
  %v3109 = vpop.f32.mrb[0].mxu0
  %v3110 = vadd.f32 %v2897, %v3109
  %v3111 = vpop.f32.mrb[0].mxu0
  %v3112 = vadd.f32 %v2899, %v3111
  %3113 = vmatprep.mubr.bf16.mxu0 %v2071
  %3114 = vmatmul.mubr.bf16.gmra.mrb[0].mxu0 %v1090
  %v3115 = vpop.f32.mrb[0].mxu0
  %v3116 = vadd.f32 %v2903, %v3115
  %v3117 = vpop.f32.mrb[0].mxu0
  %v3118 = vadd.f32 %v2905, %v3117
  %v3119 = vpop.f32.mrb[0].mxu0
  %v3120 = vadd.f32 %v2907, %v3119
  %v3121 = vpop.f32.mrb[0].mxu0
  %v3122 = vadd.f32 %v2909, %v3121
  %3123 = vmatprep.mubr.bf16.mxu0 %v2074
  %3124 = vmatmul.mubr.bf16.gmra.mrb[0].mxu0 %v1100
  %v3125 = vpop.f32.mrb[0].mxu0
  %v3126 = vadd.f32 %v2913, %v3125
  %v3127 = vpop.f32.mrb[0].mxu0
  %v3128 = vadd.f32 %v2915, %v3127
  %v3129 = vpop.f32.mrb[0].mxu0
  %v3130 = vadd.f32 %v2917, %v3129
  %v3131 = vpop.f32.mrb[0].mxu0
  %v3132 = vadd.f32 %v2919, %v3131
  %3133 = vmatprep.mubr.bf16.mxu0 %v2077
  %3134 = vmatmul.mubr.bf16.gmra.mrb[0].mxu0 %v1110
  %v3135 = vpop.f32.mrb[0].mxu0
  %v3136 = vadd.f32 %v2923, %v3135
  %v3137 = vpop.f32.mrb[0].mxu0
  %v3138 = vadd.f32 %v2925, %v3137
  %v3139 = vpop.f32.mrb[0].mxu0
  %v3140 = vadd.f32 %v2927, %v3139
  %v3141 = vpop.f32.mrb[0].mxu0
  %v3142 = vadd.f32 %v2929, %v3141
  %3143 = vdwg.mxu0
  %v3144 = vmax.f32 %v2966, 0.0
  %v3145 = vmax.f32 %v2968, 0.0
  %v3146 = vmax.f32 %v2970, 0.0
  %v3147 = vmax.f32 %v2972, 0.0
  %v3148 = vmax.f32 %v2976, 0.0
  %v3149 = vmax.f32 %v2978, 0.0
  %v3150 = vmax.f32 %v2980, 0.0
  %v3151 = vmax.f32 %v2982, 0.0
  %v3152 = vmax.f32 %v2986, 0.0
  %v3153 = vmax.f32 %v2988, 0.0
  %v3154 = vmax.f32 %v2990, 0.0
  %v3155 = vmax.f32 %v2992, 0.0
  %v3156 = vmax.f32 %v2996, 0.0
  %v3157 = vmax.f32 %v2998, 0.0
  %v3158 = vmax.f32 %v3000, 0.0
  %v3159 = vmax.f32 %v3002, 0.0
  %v3160 = vmax.f32 %v3006, 0.0
  %v3161 = vmax.f32 %v3008, 0.0
  %v3162 = vmax.f32 %v3010, 0.0
  %v3163 = vmax.f32 %v3012, 0.0
  %v3164 = vmax.f32 %v3016, 0.0
  %v3165 = vmax.f32 %v3018, 0.0
  %v3166 = vmax.f32 %v3020, 0.0
  %v3167 = vmax.f32 %v3022, 0.0
  %v3168 = vmax.f32 %v3026, 0.0
  %v3169 = vmax.f32 %v3028, 0.0
  %v3170 = vmax.f32 %v3030, 0.0
  %v3171 = vmax.f32 %v3032, 0.0
  %v3172 = vmax.f32 %v3036, 0.0
  %v3173 = vmax.f32 %v3038, 0.0
  %v3174 = vmax.f32 %v3040, 0.0
  %v3175 = vmax.f32 %v3042, 0.0
  %v3176 = vmax.f32 %v3046, 0.0
  %v3177 = vmax.f32 %v3048, 0.0
  %v3178 = vmax.f32 %v3050, 0.0
  %v3179 = vmax.f32 %v3052, 0.0
  %v3180 = vmax.f32 %v3056, 0.0
  %v3181 = vmax.f32 %v3058, 0.0
  %v3182 = vmax.f32 %v3060, 0.0
  %v3183 = vmax.f32 %v3062, 0.0
  %v3184 = vmax.f32 %v3066, 0.0
  %v3185 = vmax.f32 %v3068, 0.0
  %v3186 = vmax.f32 %v3070, 0.0
  %v3187 = vmax.f32 %v3072, 0.0
  %v3188 = vmax.f32 %v3076, 0.0
  %v3189 = vmax.f32 %v3078, 0.0
  %v3190 = vmax.f32 %v3080, 0.0
  %v3191 = vmax.f32 %v3082, 0.0
  %v3192 = vmax.f32 %v3086, 0.0
  %v3193 = vmax.f32 %v3088, 0.0
  %v3194 = vmax.f32 %v3090, 0.0
  %v3195 = vmax.f32 %v3092, 0.0
  %v3196 = vmax.f32 %v3096, 0.0
  %v3197 = vmax.f32 %v3098, 0.0
  %v3198 = vmax.f32 %v3100, 0.0
  %v3199 = vmax.f32 %v3102, 0.0
  %v3200 = vmax.f32 %v3106, 0.0
  %v3201 = vmax.f32 %v3108, 0.0
  %v3202 = vmax.f32 %v3110, 0.0
  %v3203 = vmax.f32 %v3112, 0.0
  %v3204 = vmax.f32 %v3116, 0.0
  %v3205 = vmax.f32 %v3118, 0.0
  %v3206 = vmax.f32 %v3120, 0.0
  %v3207 = vmax.f32 %v3122, 0.0
  %v3208 = vmax.f32 %v3126, 0.0
  %v3209 = vmax.f32 %v3128, 0.0
  %v3210 = vmax.f32 %v3130, 0.0
  %v3211 = vmax.f32 %v3132, 0.0
  %v3212 = vmax.f32 %v3136, 0.0
  %v3213 = vmax.f32 %v3138, 0.0
  %v3214 = vmax.f32 %v3140, 0.0
  %v3215 = vmax.f32 %v3142, 0.0
  %v3216 = vpack.c.bf16 %v3146, %v3144
  %v3217 = vpack.c.bf16 %v3147, %v3145
  %v3218 = vpack.c.bf16 %v3150, %v3148
  %v3219 = vpack.c.bf16 %v3151, %v3149
  %v3220 = vpack.c.bf16 %v3154, %v3152
  %v3221 = vpack.c.bf16 %v3155, %v3153
  %v3222 = vpack.c.bf16 %v3158, %v3156
  %v3223 = vpack.c.bf16 %v3159, %v3157
  %v3224 = vpack.c.bf16 %v3162, %v3160
  %v3225 = vpack.c.bf16 %v3163, %v3161
  %v3226 = vpack.c.bf16 %v3166, %v3164
  %v3227 = vpack.c.bf16 %v3167, %v3165
  %v3228 = vpack.c.bf16 %v3170, %v3168
  %v3229 = vpack.c.bf16 %v3171, %v3169
  %v3230 = vpack.c.bf16 %v3174, %v3172
  %v3231 = vpack.c.bf16 %v3175, %v3173
  %v3232 = vpack.c.bf16 %v3178, %v3176
  %v3233 = vpack.c.bf16 %v3179, %v3177
  %v3234 = vpack.c.bf16 %v3182, %v3180
  %v3235 = vpack.c.bf16 %v3183, %v3181
  %v3236 = vpack.c.bf16 %v3186, %v3184
  %v3237 = vpack.c.bf16 %v3187, %v3185
  %v3238 = vpack.c.bf16 %v3190, %v3188
  %v3239 = vpack.c.bf16 %v3191, %v3189
  %v3240 = vpack.c.bf16 %v3194, %v3192
  %v3241 = vpack.c.bf16 %v3195, %v3193
  %v3242 = vpack.c.bf16 %v3198, %v3196
  %v3243 = vpack.c.bf16 %v3199, %v3197
  %v3244 = vpack.c.bf16 %v3202, %v3200
  %v3245 = vpack.c.bf16 %v3203, %v3201
  %v3246 = vpack.c.bf16 %v3206, %v3204
  %v3247 = vpack.c.bf16 %v3207, %v3205
  %v3248 = vpack.c.bf16 %v3210, %v3208
  %v3249 = vpack.c.bf16 %v3211, %v3209
  %v3250 = vpack.c.bf16 %v3214, %v3212
  %v3251 = vpack.c.bf16 %v3215, %v3213
  %v3252 = vld [vmem:[%s4] sm:$0xf]
  %v3253 = vld [vmem:[%s4 + $0x4] sm:$0xf]
  %v3254 = vld [vmem:[%s4 + $0x8] sm:$0xf]
  %v3255 = vld [vmem:[%s4 + $0xc] sm:$0xf]
  %v3256 = vld [vmem:[%s4 + $0x10] sm:$0xf]
  %v3257 = vld [vmem:[%s4 + $0x14] sm:$0xf]
  %v3258 = vld [vmem:[%s4 + $0x18] sm:$0xf]
  %v3259 = vld [vmem:[%s4 + $0x1c] sm:$0xf]
  %v3260 = vld [vmem:[%s4 + $0x20] sm:$0xf]
  %v3261 = vld [vmem:[%s4 + $0x24] sm:$0xf]
  %v3262 = vld [vmem:[%s4 + $0x28] sm:$0xf]
  %v3263 = vld [vmem:[%s4 + $0x2c] sm:$0xf]
  %v3264 = vld [vmem:[%s4 + $0x30] sm:$0xf]
  %v3265 = vld [vmem:[%s4 + $0x34] sm:$0xf]
  %v3266 = vld [vmem:[%s4 + $0x38] sm:$0xf]
  %v3267 = vld [vmem:[%s4 + $0x3c] sm:$0xf]
  %v3268 = vld [vmem:[%s4 + $0x40] sm:$0xf]
  %v3269 = vld [vmem:[%s4 + $0x44] sm:$0xf]
  %v3270 = vld [vmem:[%s4 + $0x48] sm:$0x7]
  %v3271 = vld [vmem:[%s5] sm:$0x1]
  %v3273 = vlaneseq
  %v3274 = vshrl.u32 %v3273, 7
  %v3275 = vsub.s32 0, %v3274
  %v3276 = vrot.slane %v3271, %v3275
  %v3297 = vunpack.c.l.b16 %v3252
  %v3298 = vunpack.c.l.b16 %v3253
  %v3299 = vunpack.c.l.b16 %v3254
  %v3300 = vunpack.c.l.b16 %v3255
  %v3301 = vunpack.c.l.b16 %v3256
  %v3302 = vunpack.c.l.b16 %v3257
  %v3303 = vunpack.c.l.b16 %v3258
  %v3304 = vunpack.c.l.b16 %v3259
  %v3305 = vunpack.c.l.b16 %v3260
  %v3306 = vunpack.c.l.b16 %v3261
  %v3307 = vunpack.c.l.b16 %v3262
  %v3308 = vunpack.c.l.b16 %v3263
  %v3309 = vunpack.c.l.b16 %v3264
  %v3310 = vunpack.c.l.b16 %v3265
  %v3311 = vunpack.c.l.b16 %v3266
  %v3312 = vunpack.c.l.b16 %v3267
  %v3313 = vunpack.c.l.b16 %v3268
  %v3314 = vunpack.c.l.b16 %v3269
  %v3315 = vunpack.c.l.b16 %v3270
  %v3316 = vpack.c.b16 %v3298, %v3297
  %v3317 = vpack.c.b16 %v3300, %v3299
  %v3318 = vpack.c.b16 %v3302, %v3301
  %v3319 = vpack.c.b16 %v3304, %v3303
  %v3320 = vpack.c.b16 %v3306, %v3305
  %v3321 = vpack.c.b16 %v3308, %v3307
  %v3322 = vpack.c.b16 %v3310, %v3309
  %v3323 = vpack.c.b16 %v3312, %v3311
  %v3324 = vpack.c.b16 %v3314, %v3313
  %v3325 = vpack.c.b16 %v3315, %v3315
  %vm3335 = vcmask 179200
  %v3337 = vsel %vm3335, %v3217, 0
  %v3340 = vsel %vm3335, %v3219, 0
  %v3343 = vsel %vm3335, %v3221, 0
  %v3346 = vsel %vm3335, %v3223, 0
  %v3349 = vsel %vm3335, %v3225, 0
  %v3352 = vsel %vm3335, %v3227, 0
  %v3355 = vsel %vm3335, %v3229, 0
  %v3358 = vsel %vm3335, %v3231, 0
  %v3361 = vsel %vm3335, %v3233, 0
  %v3364 = vsel %vm3335, %v3235, 0
  %v3367 = vsel %vm3335, %v3237, 0
  %v3370 = vsel %vm3335, %v3239, 0
  %v3373 = vsel %vm3335, %v3241, 0
  %v3376 = vsel %vm3335, %v3243, 0
  %v3379 = vsel %vm3335, %v3245, 0
  %v3382 = vsel %vm3335, %v3247, 0
  %v3385 = vsel %vm3335, %v3249, 0
  %v3388 = vsel %vm3335, %v3251, 0
  %vm3390 = vcmask 1042432
  %v3392 = vsel %vm3390, %v3325, 0
  %3394 = vmatprep.subr.bf16.mxu0 0
  %3395 = vmatpush1.bf16.msra.mxu0 %v3316
  %3396 = vmatprep.subr.bf16.mxu0 0
  %3397 = vmatpush1.bf16.msra.mxu0 %v3317
  %3398 = vmatprep.subr.bf16.mxu0 0
  %3399 = vmatpush1.bf16.msra.mxu0 %v3318
  %3400 = vmatprep.subr.bf16.mxu0 0
  %3401 = vmatpush1.bf16.msra.mxu0 %v3319
  %3402 = vmatprep.subr.bf16.mxu0 0
  %3403 = vmatpush1.bf16.msra.mxu0 %v3320
  %3404 = vmatprep.subr.bf16.mxu0 0
  %3405 = vmatpush1.bf16.msra.mxu0 %v3321
  %3406 = vmatprep.subr.bf16.mxu0 0
  %3407 = vmatpush1.bf16.msra.mxu0 %v3322
  %3408 = vmatprep.subr.bf16.mxu0 0
  %3409 = vmatpush1.bf16.msra.mxu0 %v3323
  %3410 = vmatprep.subr.bf16.mxu0 0
  %3411 = vmatpush1.bf16.msra.mxu0 %v3324
  %3412 = vmatprep.subr.bf16.mxu0 0
  %3413 = vmatpush1.bf16.msra.mxu0 %v3392
  %3414 = vmatprep.subr.bf16.mxu0 0
  %3415 = vmatpush1.bf16.msra.mxu0 0
  %3416 = vmatprep.subr.bf16.mxu0 0
  %3417 = vmatpush1.bf16.msra.mxu0 0
  %3418 = vmatprep.subr.bf16.mxu0 0
  %3419 = vmatpush1.bf16.msra.mxu0 0
  %3420 = vmatprep.subr.bf16.mxu0 0
  %3421 = vmatpush1.bf16.msra.mxu0 0
  %3422 = vmatprep.subr.bf16.mxu0 0
  %3423 = vmatpush1.bf16.msra.mxu0 0
  %3424 = vmatprep.subr.bf16.mxu0 0
  %3425 = vmatpush1.bf16.msra.mxu0 0
  %3426 = vmatprep.mubr.bf16.mxu0 %v3337
  %3427 = vmatmul.mubr.bf16.gmra.mrb[0].mxu0 %v3216
  %v3428 = vpop.f32.mrb[0].mxu0
  %v3429 = vadd.f32 %v3276, %v3428
  %v3430 = vpop.f32.mrb[0].mxu0
  %v3431 = vpop.f32.mrb[0].mxu0
  %v3432 = vadd.f32 %v3276, %v3431
  %v3433 = vpop.f32.mrb[0].mxu0
  %3434 = vmatprep.mubr.bf16.mxu0 %v3340
  %3435 = vmatmul.mubr.bf16.gmra.mrb[0].mxu0 %v3218
  %v3436 = vpop.f32.mrb[0].mxu0
  %v3437 = vadd.f32 %v3276, %v3436
  %v3438 = vpop.f32.mrb[0].mxu0
  %v3439 = vpop.f32.mrb[0].mxu0
  %v3440 = vadd.f32 %v3276, %v3439
  %v3441 = vpop.f32.mrb[0].mxu0
  %3442 = vmatprep.mubr.bf16.mxu0 %v3343
  %3443 = vmatmul.mubr.bf16.gmra.mrb[0].mxu0 %v3220
  %v3444 = vpop.f32.mrb[0].mxu0
  %v3445 = vadd.f32 %v3276, %v3444
  %v3446 = vpop.f32.mrb[0].mxu0
  %v3447 = vpop.f32.mrb[0].mxu0
  %v3448 = vadd.f32 %v3276, %v3447
  %v3449 = vpop.f32.mrb[0].mxu0
  %3450 = vmatprep.mubr.bf16.mxu0 %v3346
  %3451 = vmatmul.mubr.bf16.gmra.mrb[0].mxu0 %v3222
  %v3452 = vpop.f32.mrb[0].mxu0
  %v3453 = vadd.f32 %v3276, %v3452
  %v3454 = vpop.f32.mrb[0].mxu0
  %v3455 = vpop.f32.mrb[0].mxu0
  %v3456 = vadd.f32 %v3276, %v3455
  %v3457 = vpop.f32.mrb[0].mxu0
  %3458 = vmatprep.mubr.bf16.mxu0 %v3349
  %3459 = vmatmul.mubr.bf16.gmra.mrb[0].mxu0 %v3224
  %v3460 = vpop.f32.mrb[0].mxu0
  %v3461 = vadd.f32 %v3276, %v3460
  %v3462 = vpop.f32.mrb[0].mxu0
  %v3463 = vpop.f32.mrb[0].mxu0
  %v3464 = vadd.f32 %v3276, %v3463
  %v3465 = vpop.f32.mrb[0].mxu0
  %3466 = vmatprep.mubr.bf16.mxu0 %v3352
  %3467 = vmatmul.mubr.bf16.gmra.mrb[0].mxu0 %v3226
  %v3468 = vpop.f32.mrb[0].mxu0
  %v3469 = vadd.f32 %v3276, %v3468
  %v3470 = vpop.f32.mrb[0].mxu0
  %v3471 = vpop.f32.mrb[0].mxu0
  %v3472 = vadd.f32 %v3276, %v3471
  %v3473 = vpop.f32.mrb[0].mxu0
  %3474 = vmatprep.mubr.bf16.mxu0 %v3355
  %3475 = vmatmul.mubr.bf16.gmra.mrb[0].mxu0 %v3228
  %v3476 = vpop.f32.mrb[0].mxu0
  %v3477 = vadd.f32 %v3276, %v3476
  %v3478 = vpop.f32.mrb[0].mxu0
  %v3479 = vpop.f32.mrb[0].mxu0
  %v3480 = vadd.f32 %v3276, %v3479
  %v3481 = vpop.f32.mrb[0].mxu0
  %3482 = vmatprep.mubr.bf16.mxu0 %v3358
  %3483 = vmatmul.mubr.bf16.gmra.mrb[0].mxu0 %v3230
  %v3484 = vpop.f32.mrb[0].mxu0
  %v3485 = vadd.f32 %v3276, %v3484
  %v3486 = vpop.f32.mrb[0].mxu0
  %v3487 = vpop.f32.mrb[0].mxu0
  %v3488 = vadd.f32 %v3276, %v3487
  %v3489 = vpop.f32.mrb[0].mxu0
  %3490 = vmatprep.mubr.bf16.mxu0 %v3361
  %3491 = vmatmul.mubr.bf16.gmra.mrb[0].mxu0 %v3232
  %v3492 = vpop.f32.mrb[0].mxu0
  %v3493 = vadd.f32 %v3276, %v3492
  %v3494 = vpop.f32.mrb[0].mxu0
  %v3495 = vpop.f32.mrb[0].mxu0
  %v3496 = vadd.f32 %v3276, %v3495
  %v3497 = vpop.f32.mrb[0].mxu0
  %3498 = vmatprep.mubr.bf16.mxu0 %v3364
  %3499 = vmatmul.mubr.bf16.gmra.mrb[0].mxu0 %v3234
  %v3500 = vpop.f32.mrb[0].mxu0
  %v3501 = vadd.f32 %v3276, %v3500
  %v3502 = vpop.f32.mrb[0].mxu0
  %v3503 = vpop.f32.mrb[0].mxu0
  %v3504 = vadd.f32 %v3276, %v3503
  %v3505 = vpop.f32.mrb[0].mxu0
  %3506 = vmatprep.mubr.bf16.mxu0 %v3367
  %3507 = vmatmul.mubr.bf16.gmra.mrb[0].mxu0 %v3236
  %v3508 = vpop.f32.mrb[0].mxu0
  %v3509 = vadd.f32 %v3276, %v3508
  %v3510 = vpop.f32.mrb[0].mxu0
  %v3511 = vpop.f32.mrb[0].mxu0
  %v3512 = vadd.f32 %v3276, %v3511
  %v3513 = vpop.f32.mrb[0].mxu0
  %3514 = vmatprep.mubr.bf16.mxu0 %v3370
  %3515 = vmatmul.mubr.bf16.gmra.mrb[0].mxu0 %v3238
  %v3516 = vpop.f32.mrb[0].mxu0
  %v3517 = vadd.f32 %v3276, %v3516
  %v3518 = vpop.f32.mrb[0].mxu0
  %v3519 = vpop.f32.mrb[0].mxu0
  %v3520 = vadd.f32 %v3276, %v3519
  %v3521 = vpop.f32.mrb[0].mxu0
  %3522 = vmatprep.mubr.bf16.mxu0 %v3373
  %3523 = vmatmul.mubr.bf16.gmra.mrb[0].mxu0 %v3240
  %v3524 = vpop.f32.mrb[0].mxu0
  %v3525 = vadd.f32 %v3276, %v3524
  %v3526 = vpop.f32.mrb[0].mxu0
  %v3527 = vpop.f32.mrb[0].mxu0
  %v3528 = vadd.f32 %v3276, %v3527
  %v3529 = vpop.f32.mrb[0].mxu0
  %3530 = vmatprep.mubr.bf16.mxu0 %v3376
  %3531 = vmatmul.mubr.bf16.gmra.mrb[0].mxu0 %v3242
  %v3532 = vpop.f32.mrb[0].mxu0
  %v3533 = vadd.f32 %v3276, %v3532
  %v3534 = vpop.f32.mrb[0].mxu0
  %v3535 = vpop.f32.mrb[0].mxu0
  %v3536 = vadd.f32 %v3276, %v3535
  %v3537 = vpop.f32.mrb[0].mxu0
  %3538 = vmatprep.mubr.bf16.mxu0 %v3379
  %3539 = vmatmul.mubr.bf16.gmra.mrb[0].mxu0 %v3244
  %v3540 = vpop.f32.mrb[0].mxu0
  %v3541 = vadd.f32 %v3276, %v3540
  %v3542 = vpop.f32.mrb[0].mxu0
  %v3543 = vpop.f32.mrb[0].mxu0
  %v3544 = vadd.f32 %v3276, %v3543
  %v3545 = vpop.f32.mrb[0].mxu0
  %3546 = vmatprep.mubr.bf16.mxu0 %v3382
  %3547 = vmatmul.mubr.bf16.gmra.mrb[0].mxu0 %v3246
  %v3548 = vpop.f32.mrb[0].mxu0
  %v3549 = vadd.f32 %v3276, %v3548
  %v3550 = vpop.f32.mrb[0].mxu0
  %v3551 = vpop.f32.mrb[0].mxu0
  %v3552 = vadd.f32 %v3276, %v3551
  %v3553 = vpop.f32.mrb[0].mxu0
  %3554 = vmatprep.mubr.bf16.mxu0 %v3385
  %3555 = vmatmul.mubr.bf16.gmra.mrb[0].mxu0 %v3248
  %v3556 = vpop.f32.mrb[0].mxu0
  %v3557 = vadd.f32 %v3276, %v3556
  %v3558 = vpop.f32.mrb[0].mxu0
  %v3559 = vpop.f32.mrb[0].mxu0
  %v3560 = vadd.f32 %v3276, %v3559
  %v3561 = vpop.f32.mrb[0].mxu0
  %3562 = vmatprep.mubr.bf16.mxu0 %v3388
  %3563 = vmatmul.mubr.bf16.gmra.mrb[0].mxu0 %v3250
  %v3564 = vpop.f32.mrb[0].mxu0
  %v3565 = vadd.f32 %v3276, %v3564
  %v3566 = vpop.f32.mrb[0].mxu0
  %v3567 = vpop.f32.mrb[0].mxu0
  %v3568 = vadd.f32 %v3276, %v3567
  %v3569 = vpop.f32.mrb[0].mxu0
  %3570 = vdwg.mxu0
  %v3571 = vmax.f32 %v3429, 0.0
  %v3572 = vmax.f32 %v3432, 0.0
  %v3573 = vmax.f32 %v3437, 0.0
  %v3574 = vmax.f32 %v3440, 0.0
  %v3575 = vmax.f32 %v3445, 0.0
  %v3576 = vmax.f32 %v3448, 0.0
  %v3577 = vmax.f32 %v3453, 0.0
  %v3578 = vmax.f32 %v3456, 0.0
  %v3579 = vmax.f32 %v3461, 0.0
  %v3580 = vmax.f32 %v3464, 0.0
  %v3581 = vmax.f32 %v3469, 0.0
  %v3582 = vmax.f32 %v3472, 0.0
  %v3583 = vmax.f32 %v3477, 0.0
  %v3584 = vmax.f32 %v3480, 0.0
  %v3585 = vmax.f32 %v3485, 0.0
  %v3586 = vmax.f32 %v3488, 0.0
  %v3587 = vmax.f32 %v3493, 0.0
  %v3588 = vmax.f32 %v3496, 0.0
  %v3589 = vmax.f32 %v3501, 0.0
  %v3590 = vmax.f32 %v3504, 0.0
  %v3591 = vmax.f32 %v3509, 0.0
  %v3592 = vmax.f32 %v3512, 0.0
  %v3593 = vmax.f32 %v3517, 0.0
  %v3594 = vmax.f32 %v3520, 0.0
  %v3595 = vmax.f32 %v3525, 0.0
  %v3596 = vmax.f32 %v3528, 0.0
  %v3597 = vmax.f32 %v3533, 0.0
  %v3598 = vmax.f32 %v3536, 0.0
  %v3599 = vmax.f32 %v3541, 0.0
  %v3600 = vmax.f32 %v3544, 0.0
  %v3601 = vmax.f32 %v3549, 0.0
  %v3602 = vmax.f32 %v3552, 0.0
  %v3603 = vmax.f32 %v3557, 0.0
  %v3604 = vmax.f32 %v3560, 0.0
  %v3605 = vmax.f32 %v3565, 0.0
  %v3606 = vmax.f32 %v3568, 0.0
  %3608 = vrot.lane.b32.xlu0 %v3572, 16
  %v3609 = vpop.permute.xlu0 %3608
  %3612 = vrot.lane.b32.xlu0 %v3573, 32
  %v3613 = vpop.permute.xlu0 %3612
  %3616 = vrot.lane.b32.xlu0 %v3574, 48
  %v3617 = vpop.permute.xlu0 %3616
  %3620 = vrot.lane.b32.xlu0 %v3575, 64
  %v3621 = vpop.permute.xlu0 %3620
  %3624 = vrot.lane.b32.xlu0 %v3576, 80
  %v3625 = vpop.permute.xlu0 %3624
  %3628 = vrot.lane.b32.xlu0 %v3577, 96
  %v3629 = vpop.permute.xlu0 %3628
  %3632 = vrot.lane.b32.xlu0 %v3578, 112
  %v3633 = vpop.permute.xlu0 %3632
  %3636 = vrot.lane.b32.xlu0 %v3580, 16
  %v3637 = vpop.permute.xlu0 %3636
  %3640 = vrot.lane.b32.xlu0 %v3581, 32
  %v3641 = vpop.permute.xlu0 %3640
  %3644 = vrot.lane.b32.xlu0 %v3582, 48
  %v3645 = vpop.permute.xlu0 %3644
  %3648 = vrot.lane.b32.xlu0 %v3583, 64
  %v3649 = vpop.permute.xlu0 %3648
  %3652 = vrot.lane.b32.xlu0 %v3584, 80
  %v3653 = vpop.permute.xlu0 %3652
  %3656 = vrot.lane.b32.xlu0 %v3585, 96
  %v3657 = vpop.permute.xlu0 %3656
  %3660 = vrot.lane.b32.xlu0 %v3586, 112
  %v3661 = vpop.permute.xlu0 %3660
  %vm3663 = vcmask 130048
  %v3664 = vsel %vm3663, %v3571, %v3609
  %vm3665 = vcmask 261120
  %v3666 = vsel %vm3665, %v3664, %v3613
  %v3667 = vsel %vm2024, %v3666, %v3617
  %vm3668 = vcmask 523264
  %v3669 = vsel %vm3668, %v3667, %v3621
  %vm3670 = vcmask 654336
  %v3671 = vsel %vm3670, %v3669, %v3625
  %vm3672 = vcmask 785408
  %v3673 = vsel %vm3672, %v3671, %v3629
  %vm3674 = vcmask 916480
  %v3675 = vsel %vm3674, %v3673, %v3633
  %v3676 = vsel %vm3663, %v3579, %v3637
  %v3677 = vsel %vm3665, %v3676, %v3641
  %v3678 = vsel %vm2024, %v3677, %v3645
  %v3679 = vsel %vm3668, %v3678, %v3649
  %v3680 = vsel %vm3670, %v3679, %v3653
  %v3681 = vsel %vm3672, %v3680, %v3657
  %v3682 = vsel %vm3674, %v3681, %v3661
  %3684 = vrot.lane.b32.xlu0 %v3588, 16
  %v3685 = vpop.permute.xlu0 %3684
  %3688 = vrot.lane.b32.xlu0 %v3589, 32
  %v3689 = vpop.permute.xlu0 %3688
  %3692 = vrot.lane.b32.xlu0 %v3590, 48
  %v3693 = vpop.permute.xlu0 %3692
  %3696 = vrot.lane.b32.xlu0 %v3591, 64
  %v3697 = vpop.permute.xlu0 %3696
  %3700 = vrot.lane.b32.xlu0 %v3592, 80
  %v3701 = vpop.permute.xlu0 %3700
  %3704 = vrot.lane.b32.xlu0 %v3593, 96
  %v3705 = vpop.permute.xlu0 %3704
  %3708 = vrot.lane.b32.xlu0 %v3594, 112
  %v3709 = vpop.permute.xlu0 %3708
  %3712 = vrot.lane.b32.xlu0 %v3596, 16
  %v3713 = vpop.permute.xlu0 %3712
  %3716 = vrot.lane.b32.xlu0 %v3597, 32
  %v3717 = vpop.permute.xlu0 %3716
  %3720 = vrot.lane.b32.xlu0 %v3598, 48
  %v3721 = vpop.permute.xlu0 %3720
  %3724 = vrot.lane.b32.xlu0 %v3599, 64
  %v3725 = vpop.permute.xlu0 %3724
  %3728 = vrot.lane.b32.xlu0 %v3600, 80
  %v3729 = vpop.permute.xlu0 %3728
  %3732 = vrot.lane.b32.xlu0 %v3601, 96
  %v3733 = vpop.permute.xlu0 %3732
  %3736 = vrot.lane.b32.xlu0 %v3602, 112
  %v3737 = vpop.permute.xlu0 %3736
  %v3739 = vsel %vm3663, %v3587, %v3685
  %v3740 = vsel %vm3665, %v3739, %v3689
  %v3741 = vsel %vm2024, %v3740, %v3693
  %v3742 = vsel %vm3668, %v3741, %v3697
  %v3743 = vsel %vm3670, %v3742, %v3701
  %v3744 = vsel %vm3672, %v3743, %v3705
  %v3745 = vsel %vm3674, %v3744, %v3709
  %v3746 = vsel %vm3663, %v3595, %v3713
  %v3747 = vsel %vm3665, %v3746, %v3717
  %v3748 = vsel %vm2024, %v3747, %v3721
  %v3749 = vsel %vm3668, %v3748, %v3725
  %v3750 = vsel %vm3670, %v3749, %v3729
  %v3751 = vsel %vm3672, %v3750, %v3733
  %v3752 = vsel %vm3674, %v3751, %v3737
  %3754 = vrot.lane.b32.xlu0 %v3604, 16
  %v3755 = vpop.permute.xlu0 %3754
  %3758 = vrot.lane.b32.xlu0 %v3605, 32
  %v3759 = vpop.permute.xlu0 %3758
  %3762 = vrot.lane.b32.xlu0 %v3606, 48
  %v3763 = vpop.permute.xlu0 %3762
  %v3765 = vsel %vm3663, %v3603, %v3755
  %v3766 = vsel %vm3665, %v3765, %v3759
  %v3767 = vsel %vm2024, %v3766, %v3763
  %v3768 = vpack.c.bf16 %v3675, %v3675
  %v3769 = vpack.c.bf16 %v3682, %v3682
  %v3770 = vpack.c.bf16 %v3745, %v3745
  %v3771 = vpack.c.bf16 %v3752, %v3752
  %v3772 = vpack.c.bf16 %v3767, %v3767
  %v3773 = vld [vmem:[%s6] sm:$0xf]
  %v3774 = vld [vmem:[%s6 + $0x4] sm:$0xf]
  %v3775 = vld [vmem:[%s6 + $0x8] sm:$0xf]
  %v3776 = vld [vmem:[%s6 + $0xc] sm:$0xf]
  %v3777 = vld [vmem:[%s6 + $0x10] sm:$0xf]
  %v3778 = vld [vmem:[%s6 + $0x14] sm:$0xf]
  %v3779 = vld [vmem:[%s6 + $0x18] sm:$0xf]
  %v3780 = vld [vmem:[%s6 + $0x1c] sm:$0xf]
  %v3781 = vld [vmem:[%s6 + $0x20] sm:$0xf]
  %v3782 = vld [vmem:[%s6 + $0x24] sm:$0xf]
  %v3783 = vld [vmem:[%s6 + $0x28] sm:$0xf]
  %v3784 = vld [vmem:[%s6 + $0x2c] sm:$0xf]
  %v3785 = vld [vmem:[%s6 + $0x30] sm:$0xf]
  %v3786 = vld [vmem:[%s6 + $0x34] sm:$0xf]
  %v3787 = vld [vmem:[%s6 + $0x38] sm:$0xf]
  %v3788 = vld [vmem:[%s6 + $0x3c] sm:$0xf]
  %v3789 = vld [vmem:[%s6 + $0x40] sm:$0xf]
  %v3790 = vld [vmem:[%s6 + $0x44] sm:$0xf]
  %v3791 = vld [vmem:[%s6 + $0x48] sm:$0xf]
  %v3792 = vld [vmem:[%s6 + $0x4c] sm:$0xf]
  %v3793 = vld [vmem:[%s6 + $0x50] sm:$0xf]
  %v3794 = vld [vmem:[%s6 + $0x54] sm:$0xf]
  %v3795 = vld [vmem:[%s6 + $0x58] sm:$0xf]
  %v3796 = vld [vmem:[%s6 + $0x5c] sm:$0xf]
  %v3797 = vld [vmem:[%s6 + $0x60] sm:$0xf]
  %v3798 = vld [vmem:[%s6 + $0x64] sm:$0xf]
  %v3799 = vld [vmem:[%s6 + $0x68] sm:$0xf]
  %v3800 = vld [vmem:[%s6 + $0x6c] sm:$0xf]
  %v3801 = vld [vmem:[%s6 + $0x70] sm:$0xf]
  %v3802 = vld [vmem:[%s6 + $0x74] sm:$0xf]
  %v3803 = vld [vmem:[%s6 + $0x78] sm:$0xf]
  %v3804 = vld [vmem:[%s6 + $0x7c] sm:$0xf]
  %v3805 = vld [vmem:[%s6 + $0x80] sm:$0xf]
  %v3806 = vld [vmem:[%s6 + $0x84] sm:$0xf]
  %v3807 = vld [vmem:[%s6 + $0x88] sm:$0xf]
  %v3808 = vld [vmem:[%s6 + $0x8c] sm:$0xf]
  %v3809 = vld [vmem:[%s6 + $0x90] sm:$0xf]
  %v3810 = vld [vmem:[%s6 + $0x94] sm:$0xf]
  %v3811 = vld [vmem:[%s6 + $0x98] sm:$0xf]
  %v3812 = vld [vmem:[%s6 + $0x9c] sm:$0xf]
  %v3813 = vld [vmem:[%s6 + $0xa0] sm:$0xf]
  %v3814 = vld [vmem:[%s6 + $0xa4] sm:$0xf]
  %v3815 = vld [vmem:[%s6 + $0xa8] sm:$0xf]
  %v3816 = vld [vmem:[%s6 + $0xac] sm:$0xf]
  %v3817 = vld [vmem:[%s6 + $0xb0] sm:$0xf]
  %v3818 = vld [vmem:[%s6 + $0xb4] sm:$0xf]
  %v3819 = vld [vmem:[%s6 + $0xb8] sm:$0xf]
  %v3820 = vld [vmem:[%s6 + $0xbc] sm:$0xf]
  %v3821 = vld [vmem:[%s6 + $0xc0] sm:$0xf]
  %v3822 = vld [vmem:[%s6 + $0xc4] sm:$0xf]
  %v3823 = vld [vmem:[%s6 + $0xc8] sm:$0xf]
  %v3824 = vld [vmem:[%s6 + $0xcc] sm:$0xf]
  %v3825 = vld [vmem:[%s6 + $0xd0] sm:$0xf]
  %v3826 = vld [vmem:[%s6 + $0xd4] sm:$0xf]
  %v3827 = vld [vmem:[%s6 + $0xd8] sm:$0xf]
  %v3828 = vld [vmem:[%s6 + $0xdc] sm:$0xf]
  %v3829 = vld [vmem:[%s6 + $0xe0] sm:$0xf]
  %v3830 = vld [vmem:[%s6 + $0xe4] sm:$0xf]
  %v3831 = vld [vmem:[%s6 + $0xe8] sm:$0xf]
  %v3832 = vld [vmem:[%s6 + $0xec] sm:$0xf]
  %v3833 = vld [vmem:[%s6 + $0xf0] sm:$0xf]
  %v3834 = vld [vmem:[%s6 + $0xf4] sm:$0xf]
  %v3835 = vld [vmem:[%s6 + $0xf8] sm:$0xf]
  %v3836 = vld [vmem:[%s6 + $0xfc] sm:$0xf]
  %v3837 = vld [vmem:[%s6 + $0x100] sm:$0xf]
  %v3838 = vld [vmem:[%s6 + $0x104] sm:$0xf]
  %v3839 = vld [vmem:[%s6 + $0x108] sm:$0xf]
  %v3840 = vld [vmem:[%s6 + $0x10c] sm:$0xf]
  %v3841 = vld [vmem:[%s6 + $0x110] sm:$0xf]
  %v3842 = vld [vmem:[%s6 + $0x114] sm:$0xf]
  %v3843 = vld [vmem:[%s6 + $0x118] sm:$0xf]
  %v3844 = vld [vmem:[%s6 + $0x11c] sm:$0xf]
  %v3845 = vld [vmem:[%s7] sm:$0x1]
  %v3847 = vlaneseq
  %v3848 = vshrl.u32 %v3847, 7
  %v3849 = vsub.s32 0, %v3848
  %v3850 = vrot.slane %v3845, %v3849
  %v3924 = vunpack.c.l.b16 %v3773
  %v3925 = vunpack.c.l.b16 %v3774
  %v3926 = vunpack.c.l.b16 %v3775
  %v3927 = vunpack.c.l.b16 %v3776
  %v3928 = vunpack.c.l.b16 %v3777
  %v3929 = vunpack.c.l.b16 %v3778
  %v3930 = vunpack.c.l.b16 %v3779
  %v3931 = vunpack.c.l.b16 %v3780
  %v3932 = vunpack.c.l.b16 %v3781
  %v3933 = vunpack.c.l.b16 %v3782
  %v3934 = vunpack.c.l.b16 %v3783
  %v3935 = vunpack.c.l.b16 %v3784
  %v3936 = vunpack.c.l.b16 %v3785
  %v3937 = vunpack.c.l.b16 %v3786
  %v3938 = vunpack.c.l.b16 %v3787
  %v3939 = vunpack.c.l.b16 %v3788
  %v3940 = vunpack.c.l.b16 %v3789
  %v3941 = vunpack.c.l.b16 %v3790
  %v3942 = vunpack.c.l.b16 %v3791
  %v3943 = vunpack.c.l.b16 %v3792
  %v3944 = vunpack.c.l.b16 %v3793
  %v3945 = vunpack.c.l.b16 %v3794
  %v3946 = vunpack.c.l.b16 %v3795
  %v3947 = vunpack.c.l.b16 %v3796
  %v3948 = vunpack.c.l.b16 %v3797
  %v3949 = vunpack.c.l.b16 %v3798
  %v3950 = vunpack.c.l.b16 %v3799
  %v3951 = vunpack.c.l.b16 %v3800
  %v3952 = vunpack.c.l.b16 %v3801
  %v3953 = vunpack.c.l.b16 %v3802
  %v3954 = vunpack.c.l.b16 %v3803
  %v3955 = vunpack.c.l.b16 %v3804
  %v3956 = vunpack.c.l.b16 %v3805
  %v3957 = vunpack.c.l.b16 %v3806
  %v3958 = vunpack.c.l.b16 %v3807
  %v3959 = vunpack.c.l.b16 %v3808
  %v3960 = vunpack.c.l.b16 %v3809
  %v3961 = vunpack.c.l.b16 %v3810
  %v3962 = vunpack.c.l.b16 %v3811
  %v3963 = vunpack.c.l.b16 %v3812
  %v3964 = vunpack.c.l.b16 %v3813
  %v3965 = vunpack.c.l.b16 %v3814
  %v3966 = vunpack.c.l.b16 %v3815
  %v3967 = vunpack.c.l.b16 %v3816
  %v3968 = vunpack.c.l.b16 %v3817
  %v3969 = vunpack.c.l.b16 %v3818
  %v3970 = vunpack.c.l.b16 %v3819
  %v3971 = vunpack.c.l.b16 %v3820
  %v3972 = vunpack.c.l.b16 %v3821
  %v3973 = vunpack.c.l.b16 %v3822
  %v3974 = vunpack.c.l.b16 %v3823
  %v3975 = vunpack.c.l.b16 %v3824
  %v3976 = vunpack.c.l.b16 %v3825
  %v3977 = vunpack.c.l.b16 %v3826
  %v3978 = vunpack.c.l.b16 %v3827
  %v3979 = vunpack.c.l.b16 %v3828
  %v3980 = vunpack.c.l.b16 %v3829
  %v3981 = vunpack.c.l.b16 %v3830
  %v3982 = vunpack.c.l.b16 %v3831
  %v3983 = vunpack.c.l.b16 %v3832
  %v3984 = vunpack.c.l.b16 %v3833
  %v3985 = vunpack.c.l.b16 %v3834
  %v3986 = vunpack.c.l.b16 %v3835
  %v3987 = vunpack.c.l.b16 %v3836
  %v3988 = vunpack.c.l.b16 %v3837
  %v3989 = vunpack.c.l.b16 %v3838
  %v3990 = vunpack.c.l.b16 %v3839
  %v3991 = vunpack.c.l.b16 %v3840
  %v3992 = vunpack.c.l.b16 %v3841
  %v3993 = vunpack.c.l.b16 %v3842
  %v3994 = vunpack.c.l.b16 %v3843
  %v3995 = vunpack.c.l.b16 %v3844
  %v3996 = vpack.c.b16 %v3925, %v3924
  %v3997 = vpack.c.b16 %v3927, %v3926
  %v3998 = vpack.c.b16 %v3929, %v3928
  %v3999 = vpack.c.b16 %v3931, %v3930
  %v4000 = vpack.c.b16 %v3933, %v3932
  %v4001 = vpack.c.b16 %v3935, %v3934
  %v4002 = vpack.c.b16 %v3937, %v3936
  %v4003 = vpack.c.b16 %v3939, %v3938
  %v4004 = vpack.c.b16 %v3941, %v3940
  %v4005 = vpack.c.b16 %v3943, %v3942
  %v4006 = vpack.c.b16 %v3945, %v3944
  %v4007 = vpack.c.b16 %v3947, %v3946
  %v4008 = vpack.c.b16 %v3949, %v3948
  %v4009 = vpack.c.b16 %v3951, %v3950
  %v4010 = vpack.c.b16 %v3953, %v3952
  %v4011 = vpack.c.b16 %v3955, %v3954
  %v4012 = vpack.c.b16 %v3957, %v3956
  %v4013 = vpack.c.b16 %v3959, %v3958
  %v4014 = vpack.c.b16 %v3961, %v3960
  %v4015 = vpack.c.b16 %v3963, %v3962
  %v4016 = vpack.c.b16 %v3965, %v3964
  %v4017 = vpack.c.b16 %v3967, %v3966
  %v4018 = vpack.c.b16 %v3969, %v3968
  %v4019 = vpack.c.b16 %v3971, %v3970
  %v4020 = vpack.c.b16 %v3973, %v3972
  %v4021 = vpack.c.b16 %v3975, %v3974
  %v4022 = vpack.c.b16 %v3977, %v3976
  %v4023 = vpack.c.b16 %v3979, %v3978
  %v4024 = vpack.c.b16 %v3981, %v3980
  %v4025 = vpack.c.b16 %v3983, %v3982
  %v4026 = vpack.c.b16 %v3985, %v3984
  %v4027 = vpack.c.b16 %v3987, %v3986
  %v4028 = vpack.c.b16 %v3989, %v3988
  %v4029 = vpack.c.b16 %v3991, %v3990
  %v4030 = vpack.c.b16 %v3993, %v3992
  %v4031 = vpack.c.b16 %v3995, %v3994
  %v4069 = vsel %vm3668, %v3772, 0
  %4071 = vmatprep.subr.bf16.mxu0 0
  %4072 = vmatpush1.bf16.msra.mxu0 %v3996
  %4073 = vmatprep.subr.bf16.mxu0 0
  %4074 = vmatpush1.bf16.msra.mxu0 %v3997
  %4075 = vmatprep.subr.bf16.mxu0 0
  %4076 = vmatpush1.bf16.msra.mxu0 %v3998
  %4077 = vmatprep.subr.bf16.mxu0 0
  %4078 = vmatpush1.bf16.msra.mxu0 %v3999
  %4079 = vmatprep.subr.bf16.mxu0 0
  %4080 = vmatpush1.bf16.msra.mxu0 %v4000
  %4081 = vmatprep.subr.bf16.mxu0 0
  %4082 = vmatpush1.bf16.msra.mxu0 %v4001
  %4083 = vmatprep.subr.bf16.mxu0 0
  %4084 = vmatpush1.bf16.msra.mxu0 %v4002
  %4085 = vmatprep.subr.bf16.mxu0 0
  %4086 = vmatpush1.bf16.msra.mxu0 %v4003
  %4087 = vmatprep.subr.bf16.mxu0 0
  %4088 = vmatpush1.bf16.msra.mxu0 %v4004
  %4089 = vmatprep.subr.bf16.mxu0 0
  %4090 = vmatpush1.bf16.msra.mxu0 %v4005
  %4091 = vmatprep.subr.bf16.mxu0 0
  %4092 = vmatpush1.bf16.msra.mxu0 %v4006
  %4093 = vmatprep.subr.bf16.mxu0 0
  %4094 = vmatpush1.bf16.msra.mxu0 %v4007
  %4095 = vmatprep.subr.bf16.mxu0 0
  %4096 = vmatpush1.bf16.msra.mxu0 %v4008
  %4097 = vmatprep.subr.bf16.mxu0 0
  %4098 = vmatpush1.bf16.msra.mxu0 %v4009
  %4099 = vmatprep.subr.bf16.mxu0 0
  %4100 = vmatpush1.bf16.msra.mxu0 %v4010
  %4101 = vmatprep.subr.bf16.mxu0 0
  %4102 = vmatpush1.bf16.msra.mxu0 %v4011
  %4103 = vmatprep.mubr.bf16.mxu0 %v3769
  %4104 = vmatmul.mubr.bf16.gmra.mrb[0].mxu0 %v3768
  %v4105 = vpop.f32.mrb[0].mxu0
  %v4106 = vadd.f32 %v3850, %v4105
  %v4107 = vpop.f32.mrb[0].mxu0
  %v4108 = vpop.f32.mrb[0].mxu0
  %v4109 = vpop.f32.mrb[0].mxu0
  %4110 = vdwg.mxu0
  %4111 = vmatprep.subr.bf16.mxu0 0
  %4112 = vmatpush1.bf16.msra.mxu0 %v4012
  %4113 = vmatprep.subr.bf16.mxu0 0
  %4114 = vmatpush1.bf16.msra.mxu0 %v4013
  %4115 = vmatprep.subr.bf16.mxu0 0
  %4116 = vmatpush1.bf16.msra.mxu0 %v4014
  %4117 = vmatprep.subr.bf16.mxu0 0
  %4118 = vmatpush1.bf16.msra.mxu0 %v4015
  %4119 = vmatprep.subr.bf16.mxu0 0
  %4120 = vmatpush1.bf16.msra.mxu0 %v4016
  %4121 = vmatprep.subr.bf16.mxu0 0
  %4122 = vmatpush1.bf16.msra.mxu0 %v4017
  %4123 = vmatprep.subr.bf16.mxu0 0
  %4124 = vmatpush1.bf16.msra.mxu0 %v4018
  %4125 = vmatprep.subr.bf16.mxu0 0
  %4126 = vmatpush1.bf16.msra.mxu0 %v4019
  %4127 = vmatprep.subr.bf16.mxu0 0
  %4128 = vmatpush1.bf16.msra.mxu0 %v4020
  %4129 = vmatprep.subr.bf16.mxu0 0
  %4130 = vmatpush1.bf16.msra.mxu0 %v4021
  %4131 = vmatprep.subr.bf16.mxu0 0
  %4132 = vmatpush1.bf16.msra.mxu0 %v4022
  %4133 = vmatprep.subr.bf16.mxu0 0
  %4134 = vmatpush1.bf16.msra.mxu0 %v4023
  %4135 = vmatprep.subr.bf16.mxu0 0
  %4136 = vmatpush1.bf16.msra.mxu0 %v4024
  %4137 = vmatprep.subr.bf16.mxu0 0
  %4138 = vmatpush1.bf16.msra.mxu0 %v4025
  %4139 = vmatprep.subr.bf16.mxu0 0
  %4140 = vmatpush1.bf16.msra.mxu0 %v4026
  %4141 = vmatprep.subr.bf16.mxu0 0
  %4142 = vmatpush1.bf16.msra.mxu0 %v4027
  %4143 = vmatprep.mubr.bf16.mxu0 %v3771
  %4144 = vmatmul.mubr.bf16.gmra.mrb[0].mxu0 %v3770
  %v4145 = vpop.f32.mrb[0].mxu0
  %v4146 = vadd.f32 %v4106, %v4145
  %v4147 = vpop.f32.mrb[0].mxu0
  %v4148 = vpop.f32.mrb[0].mxu0
  %v4149 = vpop.f32.mrb[0].mxu0
  %4150 = vdwg.mxu0
  %4151 = vmatprep.subr.bf16.mxu0 0
  %4152 = vmatpush1.bf16.msra.mxu0 %v4028
  %4153 = vmatprep.subr.bf16.mxu0 0
  %4154 = vmatpush1.bf16.msra.mxu0 %v4029
  %4155 = vmatprep.subr.bf16.mxu0 0
  %4156 = vmatpush1.bf16.msra.mxu0 %v4030
  %4157 = vmatprep.subr.bf16.mxu0 0
  %4158 = vmatpush1.bf16.msra.mxu0 %v4031
  %4159 = vmatprep.subr.bf16.mxu0 0
  %4160 = vmatpush1.bf16.msra.mxu0 0
  %4161 = vmatprep.subr.bf16.mxu0 0
  %4162 = vmatpush1.bf16.msra.mxu0 0
  %4163 = vmatprep.subr.bf16.mxu0 0
  %4164 = vmatpush1.bf16.msra.mxu0 0
  %4165 = vmatprep.subr.bf16.mxu0 0
  %4166 = vmatpush1.bf16.msra.mxu0 0
  %4167 = vmatprep.subr.bf16.mxu0 0
  %4168 = vmatpush1.bf16.msra.mxu0 0
  %4169 = vmatprep.subr.bf16.mxu0 0
  %4170 = vmatpush1.bf16.msra.mxu0 0
  %4171 = vmatprep.subr.bf16.mxu0 0
  %4172 = vmatpush1.bf16.msra.mxu0 0
  %4173 = vmatprep.subr.bf16.mxu0 0
  %4174 = vmatpush1.bf16.msra.mxu0 0
  %4175 = vmatprep.subr.bf16.mxu0 0
  %4176 = vmatpush1.bf16.msra.mxu0 0
  %4177 = vmatprep.subr.bf16.mxu0 0
  %4178 = vmatpush1.bf16.msra.mxu0 0
  %4179 = vmatprep.subr.bf16.mxu0 0
  %4180 = vmatpush1.bf16.msra.mxu0 0
  %4181 = vmatprep.subr.bf16.mxu0 0
  %4182 = vmatpush1.bf16.msra.mxu0 0
  %4183 = vmatprep.mubr.bf16.mxu0 0
  %4184 = vmatmul.mubr.bf16.gmra.mrb[0].mxu0 %v4069
  %v4185 = vpop.f32.mrb[0].mxu0
  %v4186 = vadd.f32 %v4146, %v4185
  %v4187 = vpop.f32.mrb[0].mxu0
  %v4188 = vpop.f32.mrb[0].mxu0
  %v4189 = vpop.f32.mrb[0].mxu0
  %4190 = vdwg.mxu0
  %vm4191 = vcmask 162816
  %4192 = vst.msk [vmem:[%s15] sm:$0xff] %vm4191, %v4186
  %v4193 = vmul.f32 %v4186, 0.5
  %v4194 = vmul.f32 %v4193, 1.442695
  %v4195 = vpow.pop %v4194
  %v4196 = vld [vmem:[%s1] sm:$0xff]
  %4198 = vrot.lane.b32.xlu0 %v4196, 10
  %v4199 = vpop.permute.xlu0 %4198
  %v4201 = vmul.f32 %v4195, %v4199
  %4203 = vrot.lane.b32.xlu0 %v4201, 118
  %v4204 = vpop.permute.xlu0 %4203
  %v4206 = vadd.f32 %v4186, %v4204
  %v4207 = vpack.c.bf16 %v4206, %v4206
  %v4208 = vld [vmem:[%s8] sm:$0xff]
  %v4209 = vld [vmem:[%s8 + $0x8] sm:$0xff]
  %v4210 = vld [vmem:[%s8 + $0x10] sm:$0xf]
  %v4211 = vld [vmem:[%s8 + $0x14] sm:$0x11]
  %v4212 = vld [vmem:[%s8 + $0x1c] sm:$0x11]
  %v4213 = vld [vmem:[%s8 + $0x24] sm:$0x1]
  %v4214 = vld [vmem:[%s9] sm:$0x1f]
  %v4216 = vlaneseq
  %v4217 = vshrl.u32 %v4216, 7
  %v4218 = vsub.s32 0, %v4217
  %v4219 = vrot.slane %v4214, %v4218
  %v4220 = vlaneseq
  %v4221 = vshrl.u32 %v4220, 7
  %v4222 = vsub.s32 1, %v4221
  %v4223 = vrot.slane %v4214, %v4222
  %v4224 = vlaneseq
  %v4225 = vshrl.u32 %v4224, 7
  %v4226 = vsub.s32 2, %v4225
  %v4227 = vrot.slane %v4214, %v4226
  %v4228 = vlaneseq
  %v4229 = vshrl.u32 %v4228, 7
  %v4230 = vsub.s32 3, %v4229
  %v4231 = vrot.slane %v4214, %v4230
  %v4232 = vlaneseq
  %v4233 = vshrl.u32 %v4232, 7
  %v4234 = vsub.s32 4, %v4233
  %v4235 = vrot.slane %v4214, %v4234
  %v4247 = vunpack.c.l.b16 %v4208
  %v4248 = vunpack.c.h.b16 %v4208
  %v4249 = vunpack.c.l.b16 %v4209
  %v4250 = vunpack.c.h.b16 %v4209
  %v4251 = vunpack.c.l.b16 %v4210
  %v4252 = vunpack.c.l.b16 %v4211
  %v4253 = vunpack.c.h.b16 %v4211
  %v4254 = vunpack.c.l.b16 %v4212
  %v4255 = vunpack.c.h.b16 %v4212
  %v4256 = vunpack.c.l.b16 %v4213
  %v4257 = vpack.c.b16 %v4252, %v4247
  %v4258 = vpack.c.b16 %v4253, %v4248
  %v4259 = vpack.c.b16 %v4254, %v4249
  %v4260 = vpack.c.b16 %v4255, %v4250
  %v4261 = vpack.c.b16 %v4256, %v4251
  %vm4262 = vcmask 80896
  %v4264 = vsel %vm4262, %v4207, 0
  %vm4266 = vcmask 1044480
  %v4268 = vsel %vm4266, %v4257, 0
  %v4271 = vsel %vm4266, %v4258, 0
  %v4274 = vsel %vm4266, %v4259, 0
  %v4277 = vsel %vm4266, %v4260, 0
  %v4280 = vsel %vm4266, %v4261, 0
  %4282 = vmatprep.subr.bf16.mxu0 %v4271
  %4283 = vmatpush1.bf16.msra.mxu0 %v4268
  %4284 = vmatprep.subr.bf16.mxu0 0
  %4285 = vmatpush1.bf16.msra.mxu0 0
  %4286 = vmatprep.subr.bf16.mxu0 0
  %4287 = vmatpush1.bf16.msra.mxu0 0
  %4288 = vmatprep.subr.bf16.mxu0 0
  %4289 = vmatpush1.bf16.msra.mxu0 0
  %4290 = vmatprep.subr.bf16.mxu0 0
  %4291 = vmatpush1.bf16.msra.mxu0 0
  %4292 = vmatprep.subr.bf16.mxu0 0
  %4293 = vmatpush1.bf16.msra.mxu0 0
  %4294 = vmatprep.subr.bf16.mxu0 0
  %4295 = vmatpush1.bf16.msra.mxu0 0
  %4296 = vmatprep.subr.bf16.mxu0 0
  %4297 = vmatpush1.bf16.msra.mxu0 0
  %4298 = vmatprep.subr.bf16.mxu0 0
  %4299 = vmatpush1.bf16.msra.mxu0 0
  %4300 = vmatprep.subr.bf16.mxu0 0
  %4301 = vmatpush1.bf16.msra.mxu0 0
  %4302 = vmatprep.subr.bf16.mxu0 0
  %4303 = vmatpush1.bf16.msra.mxu0 0
  %4304 = vmatprep.subr.bf16.mxu0 0
  %4305 = vmatpush1.bf16.msra.mxu0 0
  %4306 = vmatprep.subr.bf16.mxu0 0
  %4307 = vmatpush1.bf16.msra.mxu0 0
  %4308 = vmatprep.subr.bf16.mxu0 0
  %4309 = vmatpush1.bf16.msra.mxu0 0
  %4310 = vmatprep.subr.bf16.mxu0 0
  %4311 = vmatpush1.bf16.msra.mxu0 0
  %4312 = vmatprep.subr.bf16.mxu0 0
  %4313 = vmatpush1.bf16.msra.mxu0 0
  %4314 = vmatprep.mubr.bf16.mxu0 0
  %4315 = vmatmul.mubr.bf16.gmra.mrb[0].mxu0 %v4264
  %v4316 = vpop.f32.mrb[0].mxu0
  %v4317 = vadd.f32 %v4219, %v4316
  %v4318 = vpop.f32.mrb[0].mxu0
  %v4319 = vadd.f32 %v4223, %v4318
  %v4320 = vpop.f32.mrb[0].mxu0
  %v4321 = vpop.f32.mrb[0].mxu0
  %4322 = vdwg.mxu0
  %4323 = vmatprep.subr.bf16.mxu0 %v4277
  %4324 = vmatpush1.bf16.msra.mxu0 %v4274
  %4325 = vmatprep.subr.bf16.mxu0 0
  %4326 = vmatpush1.bf16.msra.mxu0 0
  %4327 = vmatprep.subr.bf16.mxu0 0
  %4328 = vmatpush1.bf16.msra.mxu0 0
  %4329 = vmatprep.subr.bf16.mxu0 0
  %4330 = vmatpush1.bf16.msra.mxu0 0
  %4331 = vmatprep.subr.bf16.mxu0 0
  %4332 = vmatpush1.bf16.msra.mxu0 0
  %4333 = vmatprep.subr.bf16.mxu0 0
  %4334 = vmatpush1.bf16.msra.mxu0 0
  %4335 = vmatprep.subr.bf16.mxu0 0
  %4336 = vmatpush1.bf16.msra.mxu0 0
  %4337 = vmatprep.subr.bf16.mxu0 0
  %4338 = vmatpush1.bf16.msra.mxu0 0
  %4339 = vmatprep.subr.bf16.mxu0 0
  %4340 = vmatpush1.bf16.msra.mxu0 0
  %4341 = vmatprep.subr.bf16.mxu0 0
  %4342 = vmatpush1.bf16.msra.mxu0 0
  %4343 = vmatprep.subr.bf16.mxu0 0
  %4344 = vmatpush1.bf16.msra.mxu0 0
  %4345 = vmatprep.subr.bf16.mxu0 0
  %4346 = vmatpush1.bf16.msra.mxu0 0
  %4347 = vmatprep.subr.bf16.mxu0 0
  %4348 = vmatpush1.bf16.msra.mxu0 0
  %4349 = vmatprep.subr.bf16.mxu0 0
  %4350 = vmatpush1.bf16.msra.mxu0 0
  %4351 = vmatprep.subr.bf16.mxu0 0
  %4352 = vmatpush1.bf16.msra.mxu0 0
  %4353 = vmatprep.subr.bf16.mxu0 0
  %4354 = vmatpush1.bf16.msra.mxu0 0
  %4355 = vmatprep.mubr.bf16.mxu0 0
  %4356 = vmatmul.mubr.bf16.gmra.mrb[0].mxu0 %v4264
  %v4357 = vpop.f32.mrb[0].mxu0
  %v4358 = vadd.f32 %v4227, %v4357
  %v4359 = vpop.f32.mrb[0].mxu0
  %v4360 = vadd.f32 %v4231, %v4359
  %v4361 = vpop.f32.mrb[0].mxu0
  %v4362 = vpop.f32.mrb[0].mxu0
  %4363 = vdwg.mxu0
  %4364 = vmatprep.subr.bf16.mxu0 0
  %4365 = vmatpush1.bf16.msra.mxu0 %v4280
  %4366 = vmatprep.subr.bf16.mxu0 0
  %4367 = vmatpush1.bf16.msra.mxu0 0
  %4368 = vmatprep.subr.bf16.mxu0 0
  %4369 = vmatpush1.bf16.msra.mxu0 0
  %4370 = vmatprep.subr.bf16.mxu0 0
  %4371 = vmatpush1.bf16.msra.mxu0 0
  %4372 = vmatprep.subr.bf16.mxu0 0
  %4373 = vmatpush1.bf16.msra.mxu0 0
  %4374 = vmatprep.subr.bf16.mxu0 0
  %4375 = vmatpush1.bf16.msra.mxu0 0
  %4376 = vmatprep.subr.bf16.mxu0 0
  %4377 = vmatpush1.bf16.msra.mxu0 0
  %4378 = vmatprep.subr.bf16.mxu0 0
  %4379 = vmatpush1.bf16.msra.mxu0 0
  %4380 = vmatprep.subr.bf16.mxu0 0
  %4381 = vmatpush1.bf16.msra.mxu0 0
  %4382 = vmatprep.subr.bf16.mxu0 0
  %4383 = vmatpush1.bf16.msra.mxu0 0
  %4384 = vmatprep.subr.bf16.mxu0 0
  %4385 = vmatpush1.bf16.msra.mxu0 0
  %4386 = vmatprep.subr.bf16.mxu0 0
  %4387 = vmatpush1.bf16.msra.mxu0 0
  %4388 = vmatprep.subr.bf16.mxu0 0
  %4389 = vmatpush1.bf16.msra.mxu0 0
  %4390 = vmatprep.subr.bf16.mxu0 0
  %4391 = vmatpush1.bf16.msra.mxu0 0
  %4392 = vmatprep.subr.bf16.mxu0 0
  %4393 = vmatpush1.bf16.msra.mxu0 0
  %4394 = vmatprep.subr.bf16.mxu0 0
  %4395 = vmatpush1.bf16.msra.mxu0 0
  %4396 = vmatprep.mubr.bf16.mxu0 0
  %4397 = vmatmul.mubr.bf16.gmra.mrb[0].mxu0 %v4264
  %v4398 = vpop.f32.mrb[0].mxu0
  %v4399 = vadd.f32 %v4235, %v4398
  %v4400 = vpop.f32.mrb[0].mxu0
  %v4401 = vpop.f32.mrb[0].mxu0
  %v4402 = vpop.f32.mrb[0].mxu0
  %4403 = vdwg.mxu0
  %4404 = vst [vmem:[#allocation2] sm:$0xff] 0.0
  %4405 = vst [vmem:[#allocation2 + $0x8] sm:$0xff] 0.0
  %4406 = vst [vmem:[#allocation2 + $0x10] sm:$0xff] 0.0
  %4407 = vst [vmem:[#allocation2 + $0x18] sm:$0xff] 0.0
  %4408 = vst [vmem:[#allocation2 + $0x20] sm:$0xff] 0.0
  %4409 = vst [vmem:[#allocation2 + $0x28] sm:$0xff] 0.0
  %4410 = vst [vmem:[#allocation2 + $0x30] sm:$0xff] 0.0
  %4411 = vst [vmem:[#allocation2 + $0x38] sm:$0xff] 0.0
  %4412 = vst [vmem:[#allocation2 + $0x40] sm:$0xff] 0.0
  %4413 = vst [vmem:[#allocation2 + $0x48] sm:$0xff] 0.0
  %4414 = vst [vmem:[#allocation2 + $0x50] sm:$0xff] 0.0
  %4415 = vst [vmem:[#allocation2 + $0x58] sm:$0xff] 0.0
  %4416 = vst [vmem:[#allocation2 + $0x60] sm:$0xff] 0.0
  %4417 = vst [vmem:[#allocation2 + $0x68] sm:$0xff] 0.0
  %4418 = vst [vmem:[#allocation2 + $0x70] sm:$0xff] 0.0
  %4419 = vst [vmem:[#allocation2 + $0x78] sm:$0xff] 0.0
  %4420 = vst [vmem:[#allocation2 + $0x80] sm:$0xff] 0.0
  %4421 = vst [vmem:[#allocation2 + $0x88] sm:$0xff] 0.0
  %4422 = vst [vmem:[#allocation2 + $0x90] sm:$0xff] 0.0
  %4423 = vst.msk [vmem:[#allocation2 + $0x20] sm:$0xff] %vm3672, %v4317
  %4426 = vrot.lane.b32.xlu0 %v4317, 32
  %v4427 = vpop.permute.xlu0 %4426
  %4428 = vrot.lane.b32.xlu0 %v4319, 32
  %v4429 = vpop.permute.xlu0 %4428
  %v4430 = vsel %vm3665, %v4427, %v4429
  %4432 = vst.msk [vmem:[#allocation2 + $0x30] sm:$0xff] %vm3672, %v4430
  %4434 = vrot.lane.b32.xlu0 %v4319, 64
  %v4435 = vpop.permute.xlu0 %4434
  %4436 = vrot.lane.b32.xlu0 %v4358, 64
  %v4437 = vpop.permute.xlu0 %4436
  %v4438 = vsel %vm3668, %v4435, %v4437
  %4440 = vst.msk [vmem:[#allocation2 + $0x40] sm:$0xff] %vm3672, %v4438
  %4441 = vrot.lane.b32.xlu0 %v4358, 96
  %v4442 = vpop.permute.xlu0 %4441
  %4444 = vst.msk [vmem:[#allocation2 + $0x50] sm:$0xff] %vm3672, %v4442
  %4445 = vst.msk [vmem:[#allocation2 + $0x60] sm:$0xff] %vm3672, %v4360
  %4448 = vrot.lane.b32.xlu0 %v4360, 32
  %v4449 = vpop.permute.xlu0 %4448
  %4450 = vrot.lane.b32.xlu0 %v4399, 32
  %v4451 = vpop.permute.xlu0 %4450
  %v4452 = vsel %vm3665, %v4449, %v4451
  %4454 = vst.msk [vmem:[#allocation2 + $0x70] sm:$0xff] %vm3672, %v4452
  %v4455 = vld [vmem:[#allocation2] sm:$0xff]
  %v4456 = vld [vmem:[#allocation2 + $0x8] sm:$0xff]
  %v4457 = vld [vmem:[#allocation2 + $0x10] sm:$0xff]
  %v4458 = vld [vmem:[#allocation2 + $0x18] sm:$0xff]
  %v4459 = vld [vmem:[#allocation2 + $0x20] sm:$0xff]
  %v4460 = vld [vmem:[#allocation2 + $0x28] sm:$0xff]
  %v4461 = vld [vmem:[#allocation2 + $0x30] sm:$0xff]
  %v4462 = vld [vmem:[#allocation2 + $0x38] sm:$0xff]
  %v4463 = vld [vmem:[#allocation2 + $0x40] sm:$0xff]
  %v4464 = vld [vmem:[#allocation2 + $0x48] sm:$0xff]
  %v4465 = vld [vmem:[#allocation2 + $0x50] sm:$0xff]
  %v4466 = vld [vmem:[#allocation2 + $0x58] sm:$0xff]
  %v4467 = vld [vmem:[#allocation2 + $0x60] sm:$0xff]
  %v4468 = vld [vmem:[#allocation2 + $0x68] sm:$0xff]
  %v4469 = vld [vmem:[#allocation2 + $0x70] sm:$0xff]
  %v4470 = vld [vmem:[#allocation2 + $0x78] sm:$0xff]
  %v4471 = vld [vmem:[#allocation2 + $0x80] sm:$0xff]
  %v4472 = vld [vmem:[#allocation2 + $0x88] sm:$0xff]
  %v4473 = vld [vmem:[#allocation2 + $0x20] sm:$0xff]
  %v4474 = vld [vmem:[#allocation2 + $0x28] sm:$0xff]
  %v4475 = vld [vmem:[#allocation2 + $0x30] sm:$0xff]
  %v4476 = vld [vmem:[#allocation2 + $0x38] sm:$0xff]
  %v4477 = vld [vmem:[#allocation2 + $0x40] sm:$0xff]
  %v4478 = vld [vmem:[#allocation2 + $0x48] sm:$0xff]
  %v4479 = vld [vmem:[#allocation2 + $0x50] sm:$0xff]
  %v4480 = vld [vmem:[#allocation2 + $0x58] sm:$0xff]
  %v4481 = vld [vmem:[#allocation2 + $0x60] sm:$0xff]
  %v4482 = vld [vmem:[#allocation2 + $0x68] sm:$0xff]
  %v4483 = vld [vmem:[#allocation2 + $0x70] sm:$0xff]
  %v4484 = vld [vmem:[#allocation2 + $0x78] sm:$0xff]
  %v4485 = vld [vmem:[#allocation2 + $0x80] sm:$0xff]
  %v4486 = vld [vmem:[#allocation2 + $0x88] sm:$0xff]
  %v4487 = vld [vmem:[#allocation2 + $0x90] sm:$0xff]
  %v4488 = vpack.c.bf16 %v4456, %v4455
  %v4489 = vpack.c.bf16 %v4457, %v4456
  %v4490 = vpack.c.bf16 %v4458, %v4457
  %v4491 = vpack.c.bf16 %v4459, %v4458
  %v4492 = vpack.c.bf16 %v4474, %v4473
  %v4493 = vpack.c.bf16 %v4460, %v4459
  %v4494 = vpack.c.bf16 %v4461, %v4460
  %v4495 = vpack.c.bf16 %v4476, %v4475
  %v4496 = vpack.c.bf16 %v4462, %v4461
  %v4497 = vpack.c.bf16 %v4463, %v4462
  %v4498 = vpack.c.bf16 %v4478, %v4477
  %v4499 = vpack.c.bf16 %v4464, %v4463
  %v4500 = vpack.c.bf16 %v4465, %v4464
  %v4501 = vpack.c.bf16 %v4480, %v4479
  %v4502 = vpack.c.bf16 %v4466, %v4465
  %v4503 = vpack.c.bf16 %v4467, %v4466
  %v4504 = vpack.c.bf16 %v4482, %v4481
  %v4505 = vpack.c.bf16 %v4468, %v4467
  %v4506 = vpack.c.bf16 %v4469, %v4468
  %v4507 = vpack.c.bf16 %v4484, %v4483
  %v4508 = vpack.c.bf16 %v4470, %v4469
  %v4509 = vpack.c.bf16 %v4471, %v4470
  %v4510 = vpack.c.bf16 %v4486, %v4485
  %v4511 = vpack.c.bf16 %v4469, %v4469
  %v4512 = vpack.c.bf16 %v4470, %v4470
  %v4513 = vpack.c.bf16 %v4471, %v4471
  %v4514 = vpack.c.bf16 %v4472, %v4472
  %v4515 = vpack.c.bf16 %v4487, %v4487
  %v4516 = vld [vmem:[%s10] sm:$0xf]
  %v4517 = vld [vmem:[%s10 + $0x4] sm:$0xf]
  %v4518 = vld [vmem:[%s10 + $0x8] sm:$0xf]
  %v4519 = vld [vmem:[%s10 + $0xc] sm:$0xf]
  %v4520 = vld [vmem:[%s10 + $0x10] sm:$0xf]
  %v4521 = vld [vmem:[%s10 + $0x14] sm:$0xf]
  %v4522 = vld [vmem:[%s10 + $0x18] sm:$0xf]
  %v4523 = vld [vmem:[%s10 + $0x1c] sm:$0xf]
  %v4524 = vld [vmem:[%s10 + $0x20] sm:$0xf]
  %v4525 = vld [vmem:[%s10 + $0x24] sm:$0xf]
  %v4526 = vld [vmem:[%s10 + $0x28] sm:$0xf]
  %v4527 = vld [vmem:[%s10 + $0x2c] sm:$0xf]
  %v4528 = vld [vmem:[%s10 + $0x30] sm:$0xf]
  %v4529 = vld [vmem:[%s10 + $0x34] sm:$0xf]
  %v4530 = vld [vmem:[%s10 + $0x38] sm:$0xf]
  %v4531 = vld [vmem:[%s10 + $0x3c] sm:$0xf]
  %v4532 = vld [vmem:[%s10 + $0x40] sm:$0xf]
  %v4533 = vld [vmem:[%s10 + $0x44] sm:$0xf]
  %v4534 = vld [vmem:[%s10 + $0x48] sm:$0xf]
  %v4535 = vld [vmem:[%s10 + $0x4c] sm:$0xf]
  %v4536 = vld [vmem:[%s10 + $0x50] sm:$0xf]
  %v4537 = vld [vmem:[%s10 + $0x54] sm:$0xf]
  %v4538 = vld [vmem:[%s10 + $0x58] sm:$0xf]
  %v4539 = vld [vmem:[%s10 + $0x5c] sm:$0xf]
  %v4540 = vld [vmem:[%s10 + $0x60] sm:$0xf]
  %v4541 = vld [vmem:[%s10 + $0x64] sm:$0xf]
  %v4542 = vld [vmem:[%s10 + $0x68] sm:$0xf]
  %v4543 = vld [vmem:[%s10 + $0x6c] sm:$0xf]
  %v4544 = vld [vmem:[%s10 + $0x70] sm:$0xf]
  %v4545 = vld [vmem:[%s10 + $0x74] sm:$0xf]
  %v4546 = vld [vmem:[%s10 + $0x78] sm:$0xf]
  %v4547 = vld [vmem:[%s10 + $0x7c] sm:$0xf]
  %v4548 = vld [vmem:[%s10 + $0x80] sm:$0xf]
  %v4549 = vld [vmem:[%s10 + $0x84] sm:$0xf]
  %v4550 = vld [vmem:[%s10 + $0x88] sm:$0xf]
  %v4551 = vld [vmem:[%s10 + $0x8c] sm:$0xf]
  %v4552 = vld [vmem:[%s10 + $0x90] sm:$0xf]
  %v4553 = vld [vmem:[%s10 + $0x94] sm:$0xf]
  %v4554 = vld [vmem:[%s10 + $0x98] sm:$0xf]
  %v4555 = vld [vmem:[%s10 + $0x9c] sm:$0xf]
  %v4556 = vld [vmem:[%s10 + $0xa0] sm:$0xf]
  %v4557 = vld [vmem:[%s10 + $0xa4] sm:$0xf]
  %v4558 = vld [vmem:[%s10 + $0xa8] sm:$0xf]
  %v4559 = vld [vmem:[%s10 + $0xac] sm:$0xf]
  %v4560 = vld [vmem:[%s10 + $0xb0] sm:$0xf]
  %v4561 = vld [vmem:[%s10 + $0xb4] sm:$0xf]
  %v4562 = vld [vmem:[%s10 + $0xb8] sm:$0xf]
  %v4563 = vld [vmem:[%s10 + $0xbc] sm:$0xf]
  %v4564 = vld [vmem:[%s10 + $0xc0] sm:$0xf]
  %v4565 = vld [vmem:[%s10 + $0xc4] sm:$0xf]
  %v4566 = vld [vmem:[%s10 + $0xc8] sm:$0xf]
  %v4567 = vld [vmem:[%s10 + $0xcc] sm:$0xf]
  %v4568 = vld [vmem:[%s10 + $0xd0] sm:$0xf]
  %v4569 = vld [vmem:[%s10 + $0xd4] sm:$0xf]
  %v4570 = vld [vmem:[%s10 + $0xd8] sm:$0xf]
  %v4571 = vld [vmem:[%s10 + $0xdc] sm:$0xf]
  %v4572 = vld [vmem:[%s10 + $0xe0] sm:$0xf]
  %v4573 = vld [vmem:[%s10 + $0xe4] sm:$0xf]
  %v4574 = vld [vmem:[%s10 + $0xe8] sm:$0xf]
  %v4575 = vld [vmem:[%s10 + $0xec] sm:$0xf]
  %v4576 = vld [vmem:[%s10 + $0xf0] sm:$0xf]
  %v4577 = vld [vmem:[%s10 + $0xf4] sm:$0xf]
  %v4578 = vld [vmem:[%s10 + $0xf8] sm:$0xf]
  %v4579 = vld [vmem:[%s10 + $0xfc] sm:$0xf]
  %v4580 = vld [vmem:[%s10 + $0x100] sm:$0xf]
  %v4581 = vld [vmem:[%s10 + $0x104] sm:$0xf]
  %v4582 = vld [vmem:[%s10 + $0x108] sm:$0xf]
  %v4583 = vld [vmem:[%s10 + $0x10c] sm:$0xf]
  %v4584 = vld [vmem:[%s10 + $0x110] sm:$0xf]
  %v4585 = vld [vmem:[%s10 + $0x114] sm:$0xf]
  %v4586 = vld [vmem:[%s10 + $0x118] sm:$0xf]
  %v4587 = vld [vmem:[%s10 + $0x11c] sm:$0xf]
  %v4588 = vld [vmem:[%s10 + $0x120] sm:$0xf]
  %v4589 = vld [vmem:[%s10 + $0x124] sm:$0xf]
  %v4590 = vld [vmem:[%s10 + $0x128] sm:$0xf]
  %v4591 = vld [vmem:[%s10 + $0x12c] sm:$0xf]
  %v4592 = vld [vmem:[%s10 + $0x130] sm:$0xf]
  %v4593 = vld [vmem:[%s10 + $0x134] sm:$0xf]
  %v4594 = vld [vmem:[%s10 + $0x138] sm:$0xf]
  %v4595 = vld [vmem:[%s10 + $0x13c] sm:$0xf]
  %v4596 = vld [vmem:[%s11] sm:$0x1]
  %v4598 = vlaneseq
  %v4599 = vshrl.u32 %v4598, 7
  %v4600 = vsub.s32 0, %v4599
  %v4601 = vrot.slane %v4596, %v4600
  %v4683 = vunpack.c.l.b16 %v4516
  %v4684 = vunpack.c.l.b16 %v4517
  %v4685 = vunpack.c.l.b16 %v4518
  %v4686 = vunpack.c.l.b16 %v4519
  %v4687 = vunpack.c.l.b16 %v4520
  %v4688 = vunpack.c.l.b16 %v4521
  %v4689 = vunpack.c.l.b16 %v4522
  %v4690 = vunpack.c.l.b16 %v4523
  %v4691 = vunpack.c.l.b16 %v4524
  %v4692 = vunpack.c.l.b16 %v4525
  %v4693 = vunpack.c.l.b16 %v4526
  %v4694 = vunpack.c.l.b16 %v4527
  %v4695 = vunpack.c.l.b16 %v4528
  %v4696 = vunpack.c.l.b16 %v4529
  %v4697 = vunpack.c.l.b16 %v4530
  %v4698 = vunpack.c.l.b16 %v4531
  %v4699 = vunpack.c.l.b16 %v4532
  %v4700 = vunpack.c.l.b16 %v4533
  %v4701 = vunpack.c.l.b16 %v4534
  %v4702 = vunpack.c.l.b16 %v4535
  %v4703 = vunpack.c.l.b16 %v4536
  %v4704 = vunpack.c.l.b16 %v4537
  %v4705 = vunpack.c.l.b16 %v4538
  %v4706 = vunpack.c.l.b16 %v4539
  %v4707 = vunpack.c.l.b16 %v4540
  %v4708 = vunpack.c.l.b16 %v4541
  %v4709 = vunpack.c.l.b16 %v4542
  %v4710 = vunpack.c.l.b16 %v4543
  %v4711 = vunpack.c.l.b16 %v4544
  %v4712 = vunpack.c.l.b16 %v4545
  %v4713 = vunpack.c.l.b16 %v4546
  %v4714 = vunpack.c.l.b16 %v4547
  %v4715 = vunpack.c.l.b16 %v4548
  %v4716 = vunpack.c.l.b16 %v4549
  %v4717 = vunpack.c.l.b16 %v4550
  %v4718 = vunpack.c.l.b16 %v4551
  %v4719 = vunpack.c.l.b16 %v4552
  %v4720 = vunpack.c.l.b16 %v4553
  %v4721 = vunpack.c.l.b16 %v4554
  %v4722 = vunpack.c.l.b16 %v4555
  %v4723 = vunpack.c.l.b16 %v4556
  %v4724 = vunpack.c.l.b16 %v4557
  %v4725 = vunpack.c.l.b16 %v4558
  %v4726 = vunpack.c.l.b16 %v4559
  %v4727 = vunpack.c.l.b16 %v4560
  %v4728 = vunpack.c.l.b16 %v4561
  %v4729 = vunpack.c.l.b16 %v4562
  %v4730 = vunpack.c.l.b16 %v4563
  %v4731 = vunpack.c.l.b16 %v4564
  %v4732 = vunpack.c.l.b16 %v4565
  %v4733 = vunpack.c.l.b16 %v4566
  %v4734 = vunpack.c.l.b16 %v4567
  %v4735 = vunpack.c.l.b16 %v4568
  %v4736 = vunpack.c.l.b16 %v4569
  %v4737 = vunpack.c.l.b16 %v4570
  %v4738 = vunpack.c.l.b16 %v4571
  %v4739 = vunpack.c.l.b16 %v4572
  %v4740 = vunpack.c.l.b16 %v4573
  %v4741 = vunpack.c.l.b16 %v4574
  %v4742 = vunpack.c.l.b16 %v4575
  %v4743 = vunpack.c.l.b16 %v4576
  %v4744 = vunpack.c.l.b16 %v4577
  %v4745 = vunpack.c.l.b16 %v4578
  %v4746 = vunpack.c.l.b16 %v4579
  %v4747 = vunpack.c.l.b16 %v4580
  %v4748 = vunpack.c.l.b16 %v4581
  %v4749 = vunpack.c.l.b16 %v4582
  %v4750 = vunpack.c.l.b16 %v4583
  %v4751 = vunpack.c.l.b16 %v4584
  %v4752 = vunpack.c.l.b16 %v4585
  %v4753 = vunpack.c.l.b16 %v4586
  %v4754 = vunpack.c.l.b16 %v4587
  %v4755 = vunpack.c.l.b16 %v4588
  %v4756 = vunpack.c.l.b16 %v4589
  %v4757 = vunpack.c.l.b16 %v4590
  %v4758 = vunpack.c.l.b16 %v4591
  %v4759 = vunpack.c.l.b16 %v4592
  %v4760 = vunpack.c.l.b16 %v4593
  %v4761 = vunpack.c.l.b16 %v4594
  %v4762 = vunpack.c.l.b16 %v4595
  %v4763 = vpack.c.b16 %v4684, %v4683
  %v4764 = vpack.c.b16 %v4686, %v4685
  %v4765 = vpack.c.b16 %v4688, %v4687
  %v4766 = vpack.c.b16 %v4690, %v4689
  %v4767 = vpack.c.b16 %v4692, %v4691
  %v4768 = vpack.c.b16 %v4694, %v4693
  %v4769 = vpack.c.b16 %v4696, %v4695
  %v4770 = vpack.c.b16 %v4698, %v4697
  %v4771 = vpack.c.b16 %v4700, %v4699
  %v4772 = vpack.c.b16 %v4702, %v4701
  %v4773 = vpack.c.b16 %v4704, %v4703
  %v4774 = vpack.c.b16 %v4706, %v4705
  %v4775 = vpack.c.b16 %v4708, %v4707
  %v4776 = vpack.c.b16 %v4710, %v4709
  %v4777 = vpack.c.b16 %v4712, %v4711
  %v4778 = vpack.c.b16 %v4714, %v4713
  %v4779 = vpack.c.b16 %v4716, %v4715
  %v4780 = vpack.c.b16 %v4718, %v4717
  %v4781 = vpack.c.b16 %v4720, %v4719
  %v4782 = vpack.c.b16 %v4722, %v4721
  %v4783 = vpack.c.b16 %v4724, %v4723
  %v4784 = vpack.c.b16 %v4726, %v4725
  %v4785 = vpack.c.b16 %v4728, %v4727
  %v4786 = vpack.c.b16 %v4730, %v4729
  %v4787 = vpack.c.b16 %v4732, %v4731
  %v4788 = vpack.c.b16 %v4734, %v4733
  %v4789 = vpack.c.b16 %v4736, %v4735
  %v4790 = vpack.c.b16 %v4738, %v4737
  %v4791 = vpack.c.b16 %v4740, %v4739
  %v4792 = vpack.c.b16 %v4742, %v4741
  %v4793 = vpack.c.b16 %v4744, %v4743
  %v4794 = vpack.c.b16 %v4746, %v4745
  %v4795 = vpack.c.b16 %v4748, %v4747
  %v4796 = vpack.c.b16 %v4750, %v4749
  %v4797 = vpack.c.b16 %v4752, %v4751
  %v4798 = vpack.c.b16 %v4754, %v4753
  %v4799 = vpack.c.b16 %v4756, %v4755
  %v4800 = vpack.c.b16 %v4758, %v4757
  %v4801 = vpack.c.b16 %v4760, %v4759
  %v4802 = vpack.c.b16 %v4762, %v4761
  %4843 = vmatprep.subr.bf16.mxu0 0
  %4844 = vmatpush1.bf16.msra.mxu0 %v4763
  %4845 = vmatprep.subr.bf16.mxu0 0
  %4846 = vmatpush1.bf16.msra.mxu0 %v4764
  %4847 = vmatprep.subr.bf16.mxu0 0
  %4848 = vmatpush1.bf16.msra.mxu0 %v4765
  %4849 = vmatprep.subr.bf16.mxu0 0
  %4850 = vmatpush1.bf16.msra.mxu0 %v4766
  %4851 = vmatprep.subr.bf16.mxu0 0
  %4852 = vmatpush1.bf16.msra.mxu0 %v4767
  %4853 = vmatprep.subr.bf16.mxu0 0
  %4854 = vmatpush1.bf16.msra.mxu0 %v4768
  %4855 = vmatprep.subr.bf16.mxu0 0
  %4856 = vmatpush1.bf16.msra.mxu0 %v4769
  %4857 = vmatprep.subr.bf16.mxu0 0
  %4858 = vmatpush1.bf16.msra.mxu0 %v4770
  %4859 = vmatprep.subr.bf16.mxu0 0
  %4860 = vmatpush1.bf16.msra.mxu0 %v4771
  %4861 = vmatprep.subr.bf16.mxu0 0
  %4862 = vmatpush1.bf16.msra.mxu0 %v4772
  %4863 = vmatprep.subr.bf16.mxu0 0
  %4864 = vmatpush1.bf16.msra.mxu0 %v4773
  %4865 = vmatprep.subr.bf16.mxu0 0
  %4866 = vmatpush1.bf16.msra.mxu0 %v4774
  %4867 = vmatprep.subr.bf16.mxu0 0
  %4868 = vmatpush1.bf16.msra.mxu0 %v4775
  %4869 = vmatprep.subr.bf16.mxu0 0
  %4870 = vmatpush1.bf16.msra.mxu0 %v4776
  %4871 = vmatprep.subr.bf16.mxu0 0
  %4872 = vmatpush1.bf16.msra.mxu0 %v4777
  %4873 = vmatprep.subr.bf16.mxu0 0
  %4874 = vmatpush1.bf16.msra.mxu0 %v4778
  %4875 = vmatprep.mubr.bf16.mxu0 %v4489
  %4876 = vmatmul.mubr.bf16.gmra.mrb[0].mxu0 %v4488
  %v4877 = vpop.f32.mrb[0].mxu0
  %v4878 = vadd.f32 %v4601, %v4877
  %v4879 = vpop.f32.mrb[0].mxu0
  %v4880 = vpop.f32.mrb[0].mxu0
  %v4881 = vadd.f32 %v4601, %v4880
  %v4882 = vpop.f32.mrb[0].mxu0
  %4883 = vmatprep.mubr.bf16.mxu0 %v4491
  %4884 = vmatmul.mubr.bf16.gmra.mrb[0].mxu0 %v4490
  %v4885 = vpop.f32.mrb[0].mxu0
  %v4886 = vadd.f32 %v4601, %v4885
  %v4887 = vpop.f32.mrb[0].mxu0
  %v4888 = vpop.f32.mrb[0].mxu0
  %v4889 = vadd.f32 %v4601, %v4888
  %v4890 = vpop.f32.mrb[0].mxu0
  %4891 = vmatprep.mubr.bf16.mxu0 %v4494
  %4892 = vmatmul.mubr.bf16.gmra.mrb[0].mxu0 %v4493
  %v4893 = vpop.f32.mrb[0].mxu0
  %v4894 = vadd.f32 %v4601, %v4893
  %v4895 = vpop.f32.mrb[0].mxu0
  %v4896 = vpop.f32.mrb[0].mxu0
  %v4897 = vadd.f32 %v4601, %v4896
  %v4898 = vpop.f32.mrb[0].mxu0
  %4899 = vmatprep.mubr.bf16.mxu0 %v4497
  %4900 = vmatmul.mubr.bf16.gmra.mrb[0].mxu0 %v4496
  %v4901 = vpop.f32.mrb[0].mxu0
  %v4902 = vadd.f32 %v4601, %v4901
  %v4903 = vpop.f32.mrb[0].mxu0
  %v4904 = vpop.f32.mrb[0].mxu0
  %v4905 = vadd.f32 %v4601, %v4904
  %v4906 = vpop.f32.mrb[0].mxu0
  %4907 = vmatprep.mubr.bf16.mxu0 %v4500
  %4908 = vmatmul.mubr.bf16.gmra.mrb[0].mxu0 %v4499
  %v4909 = vpop.f32.mrb[0].mxu0
  %v4910 = vadd.f32 %v4601, %v4909
  %v4911 = vpop.f32.mrb[0].mxu0
  %v4912 = vpop.f32.mrb[0].mxu0
  %v4913 = vadd.f32 %v4601, %v4912
  %v4914 = vpop.f32.mrb[0].mxu0
  %4915 = vmatprep.mubr.bf16.mxu0 %v4503
  %4916 = vmatmul.mubr.bf16.gmra.mrb[0].mxu0 %v4502
  %v4917 = vpop.f32.mrb[0].mxu0
  %v4918 = vadd.f32 %v4601, %v4917
  %v4919 = vpop.f32.mrb[0].mxu0
  %v4920 = vpop.f32.mrb[0].mxu0
  %v4921 = vadd.f32 %v4601, %v4920
  %v4922 = vpop.f32.mrb[0].mxu0
  %4923 = vmatprep.mubr.bf16.mxu0 %v4506
  %4924 = vmatmul.mubr.bf16.gmra.mrb[0].mxu0 %v4505
  %v4925 = vpop.f32.mrb[0].mxu0
  %v4926 = vadd.f32 %v4601, %v4925
  %v4927 = vpop.f32.mrb[0].mxu0
  %v4928 = vpop.f32.mrb[0].mxu0
  %v4929 = vadd.f32 %v4601, %v4928
  %v4930 = vpop.f32.mrb[0].mxu0
  %4931 = vmatprep.mubr.bf16.mxu0 %v4512
  %4932 = vmatmul.mubr.bf16.gmra.mrb[0].mxu0 %v4511
  %v4933 = vpop.f32.mrb[0].mxu0
  %v4934 = vadd.f32 %v4601, %v4933
  %v4935 = vpop.f32.mrb[0].mxu0
  %v4936 = vpop.f32.mrb[0].mxu0
  %v4937 = vpop.f32.mrb[0].mxu0
  %4938 = vdwg.mxu0
  %4939 = vmatprep.subr.bf16.mxu0 0
  %4940 = vmatpush1.bf16.msra.mxu0 %v4779
  %4941 = vmatprep.subr.bf16.mxu0 0
  %4942 = vmatpush1.bf16.msra.mxu0 %v4780
  %4943 = vmatprep.subr.bf16.mxu0 0
  %4944 = vmatpush1.bf16.msra.mxu0 %v4781
  %4945 = vmatprep.subr.bf16.mxu0 0
  %4946 = vmatpush1.bf16.msra.mxu0 %v4782
  %4947 = vmatprep.subr.bf16.mxu0 0
  %4948 = vmatpush1.bf16.msra.mxu0 %v4783
  %4949 = vmatprep.subr.bf16.mxu0 0
  %4950 = vmatpush1.bf16.msra.mxu0 %v4784
  %4951 = vmatprep.subr.bf16.mxu0 0
  %4952 = vmatpush1.bf16.msra.mxu0 %v4785
  %4953 = vmatprep.subr.bf16.mxu0 0
  %4954 = vmatpush1.bf16.msra.mxu0 %v4786
  %4955 = vmatprep.subr.bf16.mxu0 0
  %4956 = vmatpush1.bf16.msra.mxu0 %v4787
  %4957 = vmatprep.subr.bf16.mxu0 0
  %4958 = vmatpush1.bf16.msra.mxu0 %v4788
  %4959 = vmatprep.subr.bf16.mxu0 0
  %4960 = vmatpush1.bf16.msra.mxu0 %v4789
  %4961 = vmatprep.subr.bf16.mxu0 0
  %4962 = vmatpush1.bf16.msra.mxu0 %v4790
  %4963 = vmatprep.subr.bf16.mxu0 0
  %4964 = vmatpush1.bf16.msra.mxu0 %v4791
  %4965 = vmatprep.subr.bf16.mxu0 0
  %4966 = vmatpush1.bf16.msra.mxu0 %v4792
  %4967 = vmatprep.subr.bf16.mxu0 0
  %4968 = vmatpush1.bf16.msra.mxu0 %v4793
  %4969 = vmatprep.subr.bf16.mxu0 0
  %4970 = vmatpush1.bf16.msra.mxu0 %v4794
  %4971 = vmatprep.mubr.bf16.mxu0 %v4491
  %4972 = vmatmul.mubr.bf16.gmra.mrb[0].mxu0 %v4490
  %v4973 = vpop.f32.mrb[0].mxu0
  %v4974 = vadd.f32 %v4878, %v4973
  %v4975 = vpop.f32.mrb[0].mxu0
  %v4976 = vpop.f32.mrb[0].mxu0
  %v4977 = vadd.f32 %v4881, %v4976
  %v4978 = vpop.f32.mrb[0].mxu0
  %4979 = vmatprep.mubr.bf16.mxu0 %v4494
  %4980 = vmatmul.mubr.bf16.gmra.mrb[0].mxu0 %v4493
  %v4981 = vpop.f32.mrb[0].mxu0
  %v4982 = vadd.f32 %v4886, %v4981
  %v4983 = vpop.f32.mrb[0].mxu0
  %v4984 = vpop.f32.mrb[0].mxu0
  %v4985 = vadd.f32 %v4889, %v4984
  %v4986 = vpop.f32.mrb[0].mxu0
  %4987 = vmatprep.mubr.bf16.mxu0 %v4497
  %4988 = vmatmul.mubr.bf16.gmra.mrb[0].mxu0 %v4496
  %v4989 = vpop.f32.mrb[0].mxu0
  %v4990 = vadd.f32 %v4894, %v4989
  %v4991 = vpop.f32.mrb[0].mxu0
  %v4992 = vpop.f32.mrb[0].mxu0
  %v4993 = vadd.f32 %v4897, %v4992
  %v4994 = vpop.f32.mrb[0].mxu0
  %4995 = vmatprep.mubr.bf16.mxu0 %v4500
  %4996 = vmatmul.mubr.bf16.gmra.mrb[0].mxu0 %v4499
  %v4997 = vpop.f32.mrb[0].mxu0
  %v4998 = vadd.f32 %v4902, %v4997
  %v4999 = vpop.f32.mrb[0].mxu0
  %v5000 = vpop.f32.mrb[0].mxu0
  %v5001 = vadd.f32 %v4905, %v5000
  %v5002 = vpop.f32.mrb[0].mxu0
  %5003 = vmatprep.mubr.bf16.mxu0 %v4503
  %5004 = vmatmul.mubr.bf16.gmra.mrb[0].mxu0 %v4502
  %v5005 = vpop.f32.mrb[0].mxu0
  %v5006 = vadd.f32 %v4910, %v5005
  %v5007 = vpop.f32.mrb[0].mxu0
  %v5008 = vpop.f32.mrb[0].mxu0
  %v5009 = vadd.f32 %v4913, %v5008
  %v5010 = vpop.f32.mrb[0].mxu0
  %5011 = vmatprep.mubr.bf16.mxu0 %v4506
  %5012 = vmatmul.mubr.bf16.gmra.mrb[0].mxu0 %v4505
  %v5013 = vpop.f32.mrb[0].mxu0
  %v5014 = vadd.f32 %v4918, %v5013
  %v5015 = vpop.f32.mrb[0].mxu0
  %v5016 = vpop.f32.mrb[0].mxu0
  %v5017 = vadd.f32 %v4921, %v5016
  %v5018 = vpop.f32.mrb[0].mxu0
  %5019 = vmatprep.mubr.bf16.mxu0 %v4509
  %5020 = vmatmul.mubr.bf16.gmra.mrb[0].mxu0 %v4508
  %v5021 = vpop.f32.mrb[0].mxu0
  %v5022 = vadd.f32 %v4926, %v5021
  %v5023 = vpop.f32.mrb[0].mxu0
  %v5024 = vpop.f32.mrb[0].mxu0
  %v5025 = vadd.f32 %v4929, %v5024
  %v5026 = vpop.f32.mrb[0].mxu0
  %5027 = vmatprep.mubr.bf16.mxu0 %v4514
  %5028 = vmatmul.mubr.bf16.gmra.mrb[0].mxu0 %v4513
  %v5029 = vpop.f32.mrb[0].mxu0
  %v5030 = vadd.f32 %v4934, %v5029
  %v5031 = vpop.f32.mrb[0].mxu0
  %v5032 = vpop.f32.mrb[0].mxu0
  %v5033 = vpop.f32.mrb[0].mxu0
  %5034 = vdwg.mxu0
  %5035 = vmatprep.subr.bf16.mxu0 0
  %5036 = vmatpush1.bf16.msra.mxu0 %v4795
  %5037 = vmatprep.subr.bf16.mxu0 0
  %5038 = vmatpush1.bf16.msra.mxu0 %v4796
  %5039 = vmatprep.subr.bf16.mxu0 0
  %5040 = vmatpush1.bf16.msra.mxu0 %v4797
  %5041 = vmatprep.subr.bf16.mxu0 0
  %5042 = vmatpush1.bf16.msra.mxu0 %v4798
  %5043 = vmatprep.subr.bf16.mxu0 0
  %5044 = vmatpush1.bf16.msra.mxu0 %v4799
  %5045 = vmatprep.subr.bf16.mxu0 0
  %5046 = vmatpush1.bf16.msra.mxu0 %v4800
  %5047 = vmatprep.subr.bf16.mxu0 0
  %5048 = vmatpush1.bf16.msra.mxu0 %v4801
  %5049 = vmatprep.subr.bf16.mxu0 0
  %5050 = vmatpush1.bf16.msra.mxu0 %v4802
  %5051 = vmatprep.subr.bf16.mxu0 0
  %5052 = vmatpush1.bf16.msra.mxu0 0
  %5053 = vmatprep.subr.bf16.mxu0 0
  %5054 = vmatpush1.bf16.msra.mxu0 0
  %5055 = vmatprep.subr.bf16.mxu0 0
  %5056 = vmatpush1.bf16.msra.mxu0 0
  %5057 = vmatprep.subr.bf16.mxu0 0
  %5058 = vmatpush1.bf16.msra.mxu0 0
  %5059 = vmatprep.subr.bf16.mxu0 0
  %5060 = vmatpush1.bf16.msra.mxu0 0
  %5061 = vmatprep.subr.bf16.mxu0 0
  %5062 = vmatpush1.bf16.msra.mxu0 0
  %5063 = vmatprep.subr.bf16.mxu0 0
  %5064 = vmatpush1.bf16.msra.mxu0 0
  %5065 = vmatprep.subr.bf16.mxu0 0
  %5066 = vmatpush1.bf16.msra.mxu0 0
  %5067 = vmatprep.mubr.bf16.mxu0 0
  %5068 = vmatmul.mubr.bf16.gmra.mrb[0].mxu0 %v4492
  %v5069 = vpop.f32.mrb[0].mxu0
  %v5070 = vadd.f32 %v4974, %v5069
  %v5071 = vpop.f32.mrb[0].mxu0
  %v5072 = vpop.f32.mrb[0].mxu0
  %v5073 = vadd.f32 %v4977, %v5072
  %v5074 = vpop.f32.mrb[0].mxu0
  %5075 = vmatprep.mubr.bf16.mxu0 0
  %5076 = vmatmul.mubr.bf16.gmra.mrb[0].mxu0 %v4495
  %v5077 = vpop.f32.mrb[0].mxu0
  %v5078 = vadd.f32 %v4982, %v5077
  %v5079 = vpop.f32.mrb[0].mxu0
  %v5080 = vpop.f32.mrb[0].mxu0
  %v5081 = vadd.f32 %v4985, %v5080
  %v5082 = vpop.f32.mrb[0].mxu0
  %5083 = vmatprep.mubr.bf16.mxu0 0
  %5084 = vmatmul.mubr.bf16.gmra.mrb[0].mxu0 %v4498
  %v5085 = vpop.f32.mrb[0].mxu0
  %v5086 = vadd.f32 %v4990, %v5085
  %v5087 = vpop.f32.mrb[0].mxu0
  %v5088 = vpop.f32.mrb[0].mxu0
  %v5089 = vadd.f32 %v4993, %v5088
  %v5090 = vpop.f32.mrb[0].mxu0
  %5091 = vmatprep.mubr.bf16.mxu0 0
  %5092 = vmatmul.mubr.bf16.gmra.mrb[0].mxu0 %v4501
  %v5093 = vpop.f32.mrb[0].mxu0
  %v5094 = vadd.f32 %v4998, %v5093
  %v5095 = vpop.f32.mrb[0].mxu0
  %v5096 = vpop.f32.mrb[0].mxu0
  %v5097 = vadd.f32 %v5001, %v5096
  %v5098 = vpop.f32.mrb[0].mxu0
  %5099 = vmatprep.mubr.bf16.mxu0 0
  %5100 = vmatmul.mubr.bf16.gmra.mrb[0].mxu0 %v4504
  %v5101 = vpop.f32.mrb[0].mxu0
  %v5102 = vadd.f32 %v5006, %v5101
  %v5103 = vpop.f32.mrb[0].mxu0
  %v5104 = vpop.f32.mrb[0].mxu0
  %v5105 = vadd.f32 %v5009, %v5104
  %v5106 = vpop.f32.mrb[0].mxu0
  %5107 = vmatprep.mubr.bf16.mxu0 0
  %5108 = vmatmul.mubr.bf16.gmra.mrb[0].mxu0 %v4507
  %v5109 = vpop.f32.mrb[0].mxu0
  %v5110 = vadd.f32 %v5014, %v5109
  %v5111 = vpop.f32.mrb[0].mxu0
  %v5112 = vpop.f32.mrb[0].mxu0
  %v5113 = vadd.f32 %v5017, %v5112
  %v5114 = vpop.f32.mrb[0].mxu0
  %5115 = vmatprep.mubr.bf16.mxu0 0
  %5116 = vmatmul.mubr.bf16.gmra.mrb[0].mxu0 %v4510
  %v5117 = vpop.f32.mrb[0].mxu0
  %v5118 = vadd.f32 %v5022, %v5117
  %v5119 = vpop.f32.mrb[0].mxu0
  %v5120 = vpop.f32.mrb[0].mxu0
  %v5121 = vadd.f32 %v5025, %v5120
  %v5122 = vpop.f32.mrb[0].mxu0
  %5123 = vmatprep.mubr.bf16.mxu0 0
  %5124 = vmatmul.mubr.bf16.gmra.mrb[0].mxu0 %v4515
  %v5125 = vpop.f32.mrb[0].mxu0
  %v5126 = vadd.f32 %v5030, %v5125
  %v5127 = vpop.f32.mrb[0].mxu0
  %v5128 = vpop.f32.mrb[0].mxu0
  %v5129 = vpop.f32.mrb[0].mxu0
  %5130 = vdwg.mxu0
  %v5131 = vmax.f32 %v5070, 0.0
  %v5132 = vmax.f32 %v5073, 0.0
  %v5133 = vmax.f32 %v5078, 0.0
  %v5134 = vmax.f32 %v5081, 0.0
  %v5135 = vmax.f32 %v5086, 0.0
  %v5136 = vmax.f32 %v5089, 0.0
  %v5137 = vmax.f32 %v5094, 0.0
  %v5138 = vmax.f32 %v5097, 0.0
  %v5139 = vmax.f32 %v5102, 0.0
  %v5140 = vmax.f32 %v5105, 0.0
  %v5141 = vmax.f32 %v5110, 0.0
  %v5142 = vmax.f32 %v5113, 0.0
  %v5143 = vmax.f32 %v5118, 0.0
  %v5144 = vmax.f32 %v5121, 0.0
  %v5145 = vmax.f32 %v5126, 0.0
  %5146 = vst [vmem:[#allocation3] sm:$0xff] 0.0
  %5147 = vst [vmem:[#allocation3 + $0x8] sm:$0xff] 0.0
  %5148 = vst [vmem:[#allocation3 + $0x10] sm:$0xff] 0.0
  %5149 = vst [vmem:[#allocation3 + $0x18] sm:$0xff] 0.0
  %5150 = vst [vmem:[#allocation3 + $0x20] sm:$0xff] 0.0
  %5151 = vst [vmem:[#allocation3 + $0x28] sm:$0xff] 0.0
  %5152 = vst [vmem:[#allocation3 + $0x30] sm:$0xff] 0.0
  %5153 = vst [vmem:[#allocation3 + $0x38] sm:$0xff] 0.0
  %5154 = vst [vmem:[#allocation3 + $0x40] sm:$0xff] 0.0
  %5155 = vst [vmem:[#allocation3 + $0x48] sm:$0xff] 0.0
  %5156 = vst [vmem:[#allocation3 + $0x50] sm:$0xff] 0.0
  %5157 = vst [vmem:[#allocation3 + $0x58] sm:$0xff] 0.0
  %5158 = vst [vmem:[#allocation3 + $0x60] sm:$0xff] 0.0
  %5159 = vst [vmem:[#allocation3 + $0x68] sm:$0xff] 0.0
  %5160 = vst [vmem:[#allocation3 + $0x70] sm:$0xff] 0.0
  %5161 = vst [vmem:[#allocation3 + $0x78] sm:$0xff] 0.0
  %5162 = vst [vmem:[#allocation3 + $0x80] sm:$0xff] 0.0
  %5163 = vst [vmem:[#allocation3 + $0x88] sm:$0xff] 0.0
  %5164 = vst [vmem:[#allocation3 + $0x90] sm:$0xff] 0.0
  %5165 = vst [vmem:[#allocation3 + $0x98] sm:$0xff] 0.0
  %5166 = vst [vmem:[#allocation3 + $0xa0] sm:$0xff] 0.0
  %5167 = vst [vmem:[#allocation3 + $0xa8] sm:$0xff] 0.0
  %5168 = vst [vmem:[#allocation3 + $0xb0] sm:$0xff] 0.0
  %5169 = vst [vmem:[#allocation3 + $0xb8] sm:$0xff] 0.0
  %5170 = vst [vmem:[#allocation3 + $0xc0] sm:$0xff] 0.0
  %5171 = vst [vmem:[#allocation3 + $0xc8] sm:$0xff] 0.0
  %5172 = vst [vmem:[#allocation3 + $0xd0] sm:$0xff] 0.0
  %5173 = vst [vmem:[#allocation3 + $0xd8] sm:$0xff] 0.0
  %5174 = vst [vmem:[#allocation3 + $0xe0] sm:$0xff] 0.0
  %5175 = vst [vmem:[#allocation3 + $0xe8] sm:$0xff] 0.0
  %5176 = vst [vmem:[#allocation3 + $0xf0] sm:$0xff] 0.0
  %5177 = vst [vmem:[#allocation3 + $0xf8] sm:$0xff] 0.0
  %5178 = vst [vmem:[#allocation3 + $0x100] sm:$0xff] 0.0
  %5179 = vst [vmem:[#allocation3 + $0x108] sm:$0xff] 0.0
  %5180 = vst [vmem:[#allocation3 + $0x110] sm:$0xff] 0.0
  %vm5181 = vcmask 736256
  %5182 = vst.msk [vmem:[#allocation3 + $0x18] sm:$0xff] %vm5181, %v5131
  %5183 = vst.msk [vmem:[#allocation3 + $0x28] sm:$0xff] %vm5181, %v5132
  %5184 = vst.msk [vmem:[#allocation3 + $0x38] sm:$0xff] %vm5181, %v5133
  %5185 = vst.msk [vmem:[#allocation3 + $0x48] sm:$0xff] %vm5181, %v5134
  %5186 = vst.msk [vmem:[#allocation3 + $0x58] sm:$0xff] %vm5181, %v5135
  %5187 = vst.msk [vmem:[#allocation3 + $0x68] sm:$0xff] %vm5181, %v5136
  %5188 = vst.msk [vmem:[#allocation3 + $0x78] sm:$0xff] %vm5181, %v5137
  %5189 = vst.msk [vmem:[#allocation3 + $0x88] sm:$0xff] %vm5181, %v5138
  %5190 = vst.msk [vmem:[#allocation3 + $0x98] sm:$0xff] %vm5181, %v5139
  %5191 = vst.msk [vmem:[#allocation3 + $0xa8] sm:$0xff] %vm5181, %v5140
  %5192 = vst.msk [vmem:[#allocation3 + $0xb8] sm:$0xff] %vm5181, %v5141
  %5193 = vst.msk [vmem:[#allocation3 + $0xc8] sm:$0xff] %vm5181, %v5142
  %5194 = vst.msk [vmem:[#allocation3 + $0xd8] sm:$0xff] %vm5181, %v5143
  %5195 = vst.msk [vmem:[#allocation3 + $0xe8] sm:$0xff] %vm5181, %v5144
  %5196 = vst.msk [vmem:[#allocation3 + $0xf8] sm:$0xff] %vm5181, %v5145
  %v5197 = vld [vmem:[#allocation3] sm:$0xff]
  %v5198 = vld [vmem:[#allocation3 + $0x8] sm:$0xff]
  %v5199 = vld [vmem:[#allocation3 + $0x10] sm:$0xff]
  %v5200 = vld [vmem:[#allocation3 + $0x18] sm:$0xff]
  %v5201 = vld [vmem:[#allocation3 + $0x20] sm:$0xff]
  %v5202 = vld [vmem:[#allocation3 + $0x28] sm:$0xff]
  %v5203 = vld [vmem:[#allocation3 + $0x30] sm:$0xff]
  %v5204 = vld [vmem:[#allocation3 + $0x38] sm:$0xff]
  %v5205 = vld [vmem:[#allocation3 + $0x40] sm:$0xff]
  %v5206 = vld [vmem:[#allocation3 + $0x48] sm:$0xff]
  %v5207 = vld [vmem:[#allocation3 + $0x50] sm:$0xff]
  %v5208 = vld [vmem:[#allocation3 + $0x58] sm:$0xff]
  %v5209 = vld [vmem:[#allocation3 + $0x60] sm:$0xff]
  %v5210 = vld [vmem:[#allocation3 + $0x68] sm:$0xff]
  %v5211 = vld [vmem:[#allocation3 + $0x70] sm:$0xff]
  %v5212 = vld [vmem:[#allocation3 + $0x78] sm:$0xff]
  %v5213 = vld [vmem:[#allocation3 + $0x80] sm:$0xff]
  %v5214 = vld [vmem:[#allocation3 + $0x88] sm:$0xff]
  %v5215 = vld [vmem:[#allocation3 + $0x90] sm:$0xff]
  %v5216 = vld [vmem:[#allocation3 + $0x98] sm:$0xff]
  %v5217 = vld [vmem:[#allocation3 + $0xa0] sm:$0xff]
  %v5218 = vld [vmem:[#allocation3 + $0xa8] sm:$0xff]
  %v5219 = vld [vmem:[#allocation3 + $0xb0] sm:$0xff]
  %v5220 = vld [vmem:[#allocation3 + $0xb8] sm:$0xff]
  %v5221 = vld [vmem:[#allocation3 + $0xc0] sm:$0xff]
  %v5222 = vld [vmem:[#allocation3 + $0xc8] sm:$0xff]
  %v5223 = vld [vmem:[#allocation3 + $0xd0] sm:$0xff]
  %v5224 = vld [vmem:[#allocation3 + $0xd8] sm:$0xff]
  %v5225 = vld [vmem:[#allocation3 + $0xe0] sm:$0xff]
  %v5226 = vld [vmem:[#allocation3 + $0xe8] sm:$0xff]
  %v5227 = vld [vmem:[#allocation3 + $0xf0] sm:$0xff]
  %v5228 = vld [vmem:[#allocation3 + $0xf8] sm:$0xff]
  %v5229 = vld [vmem:[#allocation3 + $0x100] sm:$0xff]
  %v5230 = vld [vmem:[#allocation3 + $0x108] sm:$0xff]
  %v5231 = vld [vmem:[#allocation3 + $0x18] sm:$0xff]
  %v5232 = vld [vmem:[#allocation3 + $0x20] sm:$0xff]
  %v5233 = vld [vmem:[#allocation3 + $0x28] sm:$0xff]
  %v5234 = vld [vmem:[#allocation3 + $0x30] sm:$0xff]
  %v5235 = vld [vmem:[#allocation3 + $0x38] sm:$0xff]
  %v5236 = vld [vmem:[#allocation3 + $0x40] sm:$0xff]
  %v5237 = vld [vmem:[#allocation3 + $0x48] sm:$0xff]
  %v5238 = vld [vmem:[#allocation3 + $0x50] sm:$0xff]
  %v5239 = vld [vmem:[#allocation3 + $0x58] sm:$0xff]
  %v5240 = vld [vmem:[#allocation3 + $0x60] sm:$0xff]
  %v5241 = vld [vmem:[#allocation3 + $0x68] sm:$0xff]
  %v5242 = vld [vmem:[#allocation3 + $0x70] sm:$0xff]
  %v5243 = vld [vmem:[#allocation3 + $0x78] sm:$0xff]
  %v5244 = vld [vmem:[#allocation3 + $0x80] sm:$0xff]
  %v5245 = vld [vmem:[#allocation3 + $0x88] sm:$0xff]
  %v5246 = vld [vmem:[#allocation3 + $0x90] sm:$0xff]
  %v5247 = vld [vmem:[#allocation3 + $0x98] sm:$0xff]
  %v5248 = vld [vmem:[#allocation3 + $0xa0] sm:$0xff]
  %v5249 = vld [vmem:[#allocation3 + $0xa8] sm:$0xff]
  %v5250 = vld [vmem:[#allocation3 + $0xb0] sm:$0xff]
  %v5251 = vld [vmem:[#allocation3 + $0xb8] sm:$0xff]
  %v5252 = vld [vmem:[#allocation3 + $0xc0] sm:$0xff]
  %v5253 = vld [vmem:[#allocation3 + $0xc8] sm:$0xff]
  %v5254 = vld [vmem:[#allocation3 + $0xd0] sm:$0xff]
  %v5255 = vld [vmem:[#allocation3 + $0xd8] sm:$0xff]
  %v5256 = vld [vmem:[#allocation3 + $0xe0] sm:$0xff]
  %v5257 = vld [vmem:[#allocation3 + $0xe8] sm:$0xff]
  %v5258 = vld [vmem:[#allocation3 + $0xf0] sm:$0xff]
  %v5259 = vld [vmem:[#allocation3 + $0xf8] sm:$0xff]
  %v5260 = vld [vmem:[#allocation3 + $0x100] sm:$0xff]
  %v5261 = vld [vmem:[#allocation3 + $0x108] sm:$0xff]
  %v5262 = vld [vmem:[#allocation3 + $0x110] sm:$0xff]
  %v5263 = vpack.c.bf16 %v5198, %v5197
  %v5264 = vpack.c.bf16 %v5199, %v5198
  %v5265 = vpack.c.bf16 %v5200, %v5199
  %v5266 = vpack.c.bf16 %v5232, %v5231
  %v5267 = vpack.c.bf16 %v5201, %v5200
  %v5268 = vpack.c.bf16 %v5202, %v5201
  %v5269 = vpack.c.bf16 %v5234, %v5233
  %v5270 = vpack.c.bf16 %v5203, %v5202
  %v5271 = vpack.c.bf16 %v5204, %v5203
  %v5272 = vpack.c.bf16 %v5236, %v5235
  %v5273 = vpack.c.bf16 %v5205, %v5204
  %v5274 = vpack.c.bf16 %v5206, %v5205
  %v5275 = vpack.c.bf16 %v5238, %v5237
  %v5276 = vpack.c.bf16 %v5207, %v5206
  %v5277 = vpack.c.bf16 %v5208, %v5207
  %v5278 = vpack.c.bf16 %v5240, %v5239
  %v5279 = vpack.c.bf16 %v5209, %v5208
  %v5280 = vpack.c.bf16 %v5210, %v5209
  %v5281 = vpack.c.bf16 %v5242, %v5241
  %v5282 = vpack.c.bf16 %v5211, %v5210
  %v5283 = vpack.c.bf16 %v5212, %v5211
  %v5284 = vpack.c.bf16 %v5244, %v5243
  %v5285 = vpack.c.bf16 %v5213, %v5212
  %v5286 = vpack.c.bf16 %v5214, %v5213
  %v5287 = vpack.c.bf16 %v5246, %v5245
  %v5288 = vpack.c.bf16 %v5215, %v5214
  %v5289 = vpack.c.bf16 %v5216, %v5215
  %v5290 = vpack.c.bf16 %v5248, %v5247
  %v5291 = vpack.c.bf16 %v5217, %v5216
  %v5292 = vpack.c.bf16 %v5218, %v5217
  %v5293 = vpack.c.bf16 %v5250, %v5249
  %v5294 = vpack.c.bf16 %v5219, %v5218
  %v5295 = vpack.c.bf16 %v5220, %v5219
  %v5296 = vpack.c.bf16 %v5252, %v5251
  %v5297 = vpack.c.bf16 %v5221, %v5220
  %v5298 = vpack.c.bf16 %v5222, %v5221
  %v5299 = vpack.c.bf16 %v5254, %v5253
  %v5300 = vpack.c.bf16 %v5223, %v5222
  %v5301 = vpack.c.bf16 %v5224, %v5223
  %v5302 = vpack.c.bf16 %v5256, %v5255
  %v5303 = vpack.c.bf16 %v5225, %v5224
  %v5304 = vpack.c.bf16 %v5226, %v5225
  %v5305 = vpack.c.bf16 %v5258, %v5257
  %v5306 = vpack.c.bf16 %v5227, %v5226
  %v5307 = vpack.c.bf16 %v5228, %v5227
  %v5308 = vpack.c.bf16 %v5260, %v5259
  %v5309 = vpack.c.bf16 %v5229, %v5228
  %v5310 = vpack.c.bf16 %v5230, %v5229
  %v5311 = vpack.c.bf16 %v5262, %v5261
  %v5312 = vld [vmem:[%s12] sm:$0xf]
  %v5313 = vld [vmem:[%s12 + $0x4] sm:$0xf]
  %v5314 = vld [vmem:[%s12 + $0x8] sm:$0xf]
  %v5315 = vld [vmem:[%s12 + $0xc] sm:$0xf]
  %v5316 = vld [vmem:[%s12 + $0x10] sm:$0xf]
  %v5317 = vld [vmem:[%s12 + $0x14] sm:$0xf]
  %v5318 = vld [vmem:[%s12 + $0x18] sm:$0xf]
  %v5319 = vld [vmem:[%s12 + $0x1c] sm:$0xf]
  %v5320 = vld [vmem:[%s12 + $0x20] sm:$0xf]
  %v5321 = vld [vmem:[%s12 + $0x24] sm:$0xf]
  %v5322 = vld [vmem:[%s12 + $0x28] sm:$0xf]
  %v5323 = vld [vmem:[%s12 + $0x2c] sm:$0xf]
  %v5324 = vld [vmem:[%s12 + $0x30] sm:$0xf]
  %v5325 = vld [vmem:[%s12 + $0x34] sm:$0xf]
  %v5326 = vld [vmem:[%s12 + $0x38] sm:$0xf]
  %v5327 = vld [vmem:[%s12 + $0x3c] sm:$0xf]
  %v5328 = vld [vmem:[%s12 + $0x40] sm:$0xf]
  %v5329 = vld [vmem:[%s12 + $0x44] sm:$0xf]
  %v5330 = vld [vmem:[%s12 + $0x48] sm:$0xf]
  %v5331 = vld [vmem:[%s12 + $0x4c] sm:$0xf]
  %v5332 = vld [vmem:[%s12 + $0x50] sm:$0xf]
  %v5333 = vld [vmem:[%s12 + $0x54] sm:$0xf]
  %v5334 = vld [vmem:[%s12 + $0x58] sm:$0xf]
  %v5335 = vld [vmem:[%s12 + $0x5c] sm:$0xf]
  %v5336 = vld [vmem:[%s12 + $0x60] sm:$0xf]
  %v5337 = vld [vmem:[%s12 + $0x64] sm:$0xf]
  %v5338 = vld [vmem:[%s12 + $0x68] sm:$0xf]
  %v5339 = vld [vmem:[%s12 + $0x6c] sm:$0xf]
  %v5340 = vld [vmem:[%s12 + $0x70] sm:$0xf]
  %v5341 = vld [vmem:[%s12 + $0x74] sm:$0xf]
  %v5342 = vld [vmem:[%s12 + $0x78] sm:$0xf]
  %v5343 = vld [vmem:[%s12 + $0x7c] sm:$0xf]
  %v5344 = vld [vmem:[%s12 + $0x80] sm:$0xf]
  %v5345 = vld [vmem:[%s12 + $0x84] sm:$0xf]
  %v5346 = vld [vmem:[%s12 + $0x88] sm:$0xf]
  %v5347 = vld [vmem:[%s12 + $0x8c] sm:$0xf]
  %v5348 = vld [vmem:[%s12 + $0x90] sm:$0xf]
  %v5349 = vld [vmem:[%s12 + $0x94] sm:$0xf]
  %v5350 = vld [vmem:[%s12 + $0x98] sm:$0xf]
  %v5351 = vld [vmem:[%s12 + $0x9c] sm:$0xf]
  %v5352 = vld [vmem:[%s12 + $0xa0] sm:$0xf]
  %v5353 = vld [vmem:[%s12 + $0xa4] sm:$0xf]
  %v5354 = vld [vmem:[%s12 + $0xa8] sm:$0xf]
  %v5355 = vld [vmem:[%s12 + $0xac] sm:$0xf]
  %v5356 = vld [vmem:[%s12 + $0xb0] sm:$0xf]
  %v5357 = vld [vmem:[%s12 + $0xb4] sm:$0xf]
  %v5358 = vld [vmem:[%s12 + $0xb8] sm:$0xf]
  %v5359 = vld [vmem:[%s12 + $0xbc] sm:$0xf]
  %v5360 = vld [vmem:[%s12 + $0xc0] sm:$0xf]
  %v5361 = vld [vmem:[%s12 + $0xc4] sm:$0xf]
  %v5362 = vld [vmem:[%s12 + $0xc8] sm:$0xf]
  %v5363 = vld [vmem:[%s12 + $0xcc] sm:$0xf]
  %v5364 = vld [vmem:[%s12 + $0xd0] sm:$0xf]
  %v5365 = vld [vmem:[%s12 + $0xd4] sm:$0xf]
  %v5366 = vld [vmem:[%s12 + $0xd8] sm:$0xf]
  %v5367 = vld [vmem:[%s12 + $0xdc] sm:$0xf]
  %v5368 = vld [vmem:[%s12 + $0xe0] sm:$0xf]
  %v5369 = vld [vmem:[%s12 + $0xe4] sm:$0xf]
  %v5370 = vld [vmem:[%s12 + $0xe8] sm:$0xf]
  %v5371 = vld [vmem:[%s12 + $0xec] sm:$0xf]
  %v5372 = vld [vmem:[%s12 + $0xf0] sm:$0xf]
  %v5373 = vld [vmem:[%s12 + $0xf4] sm:$0xf]
  %v5374 = vld [vmem:[%s12 + $0xf8] sm:$0xf]
  %v5375 = vld [vmem:[%s12 + $0xfc] sm:$0xf]
  %v5376 = vld [vmem:[%s13] sm:$0x1]
  %v5378 = vlaneseq
  %v5379 = vshrl.u32 %v5378, 7
  %v5380 = vsub.s32 0, %v5379
  %v5381 = vrot.slane %v5376, %v5380
  %v5447 = vunpack.c.l.b16 %v5312
  %v5448 = vunpack.c.l.b16 %v5313
  %v5449 = vunpack.c.l.b16 %v5314
  %v5450 = vunpack.c.l.b16 %v5315
  %v5451 = vunpack.c.l.b16 %v5316
  %v5452 = vunpack.c.l.b16 %v5317
  %v5453 = vunpack.c.l.b16 %v5318
  %v5454 = vunpack.c.l.b16 %v5319
  %v5455 = vunpack.c.l.b16 %v5320
  %v5456 = vunpack.c.l.b16 %v5321
  %v5457 = vunpack.c.l.b16 %v5322
  %v5458 = vunpack.c.l.b16 %v5323
  %v5459 = vunpack.c.l.b16 %v5324
  %v5460 = vunpack.c.l.b16 %v5325
  %v5461 = vunpack.c.l.b16 %v5326
  %v5462 = vunpack.c.l.b16 %v5327
  %v5463 = vunpack.c.l.b16 %v5328
  %v5464 = vunpack.c.l.b16 %v5329
  %v5465 = vunpack.c.l.b16 %v5330
  %v5466 = vunpack.c.l.b16 %v5331
  %v5467 = vunpack.c.l.b16 %v5332
  %v5468 = vunpack.c.l.b16 %v5333
  %v5469 = vunpack.c.l.b16 %v5334
  %v5470 = vunpack.c.l.b16 %v5335
  %v5471 = vunpack.c.l.b16 %v5336
  %v5472 = vunpack.c.l.b16 %v5337
  %v5473 = vunpack.c.l.b16 %v5338
  %v5474 = vunpack.c.l.b16 %v5339
  %v5475 = vunpack.c.l.b16 %v5340
  %v5476 = vunpack.c.l.b16 %v5341
  %v5477 = vunpack.c.l.b16 %v5342
  %v5478 = vunpack.c.l.b16 %v5343
  %v5479 = vunpack.c.l.b16 %v5344
  %v5480 = vunpack.c.l.b16 %v5345
  %v5481 = vunpack.c.l.b16 %v5346
  %v5482 = vunpack.c.l.b16 %v5347
  %v5483 = vunpack.c.l.b16 %v5348
  %v5484 = vunpack.c.l.b16 %v5349
  %v5485 = vunpack.c.l.b16 %v5350
  %v5486 = vunpack.c.l.b16 %v5351
  %v5487 = vunpack.c.l.b16 %v5352
  %v5488 = vunpack.c.l.b16 %v5353
  %v5489 = vunpack.c.l.b16 %v5354
  %v5490 = vunpack.c.l.b16 %v5355
  %v5491 = vunpack.c.l.b16 %v5356
  %v5492 = vunpack.c.l.b16 %v5357
  %v5493 = vunpack.c.l.b16 %v5358
  %v5494 = vunpack.c.l.b16 %v5359
  %v5495 = vunpack.c.l.b16 %v5360
  %v5496 = vunpack.c.l.b16 %v5361
  %v5497 = vunpack.c.l.b16 %v5362
  %v5498 = vunpack.c.l.b16 %v5363
  %v5499 = vunpack.c.l.b16 %v5364
  %v5500 = vunpack.c.l.b16 %v5365
  %v5501 = vunpack.c.l.b16 %v5366
  %v5502 = vunpack.c.l.b16 %v5367
  %v5503 = vunpack.c.l.b16 %v5368
  %v5504 = vunpack.c.l.b16 %v5369
  %v5505 = vunpack.c.l.b16 %v5370
  %v5506 = vunpack.c.l.b16 %v5371
  %v5507 = vunpack.c.l.b16 %v5372
  %v5508 = vunpack.c.l.b16 %v5373
  %v5509 = vunpack.c.l.b16 %v5374
  %v5510 = vunpack.c.l.b16 %v5375
  %v5511 = vpack.c.b16 %v5448, %v5447
  %v5512 = vpack.c.b16 %v5450, %v5449
  %v5513 = vpack.c.b16 %v5452, %v5451
  %v5514 = vpack.c.b16 %v5454, %v5453
  %v5515 = vpack.c.b16 %v5456, %v5455
  %v5516 = vpack.c.b16 %v5458, %v5457
  %v5517 = vpack.c.b16 %v5460, %v5459
  %v5518 = vpack.c.b16 %v5462, %v5461
  %v5519 = vpack.c.b16 %v5464, %v5463
  %v5520 = vpack.c.b16 %v5466, %v5465
  %v5521 = vpack.c.b16 %v5468, %v5467
  %v5522 = vpack.c.b16 %v5470, %v5469
  %v5523 = vpack.c.b16 %v5472, %v5471
  %v5524 = vpack.c.b16 %v5474, %v5473
  %v5525 = vpack.c.b16 %v5476, %v5475
  %v5526 = vpack.c.b16 %v5478, %v5477
  %v5527 = vpack.c.b16 %v5480, %v5479
  %v5528 = vpack.c.b16 %v5482, %v5481
  %v5529 = vpack.c.b16 %v5484, %v5483
  %v5530 = vpack.c.b16 %v5486, %v5485
  %v5531 = vpack.c.b16 %v5488, %v5487
  %v5532 = vpack.c.b16 %v5490, %v5489
  %v5533 = vpack.c.b16 %v5492, %v5491
  %v5534 = vpack.c.b16 %v5494, %v5493
  %v5535 = vpack.c.b16 %v5496, %v5495
  %v5536 = vpack.c.b16 %v5498, %v5497
  %v5537 = vpack.c.b16 %v5500, %v5499
  %v5538 = vpack.c.b16 %v5502, %v5501
  %v5539 = vpack.c.b16 %v5504, %v5503
  %v5540 = vpack.c.b16 %v5506, %v5505
  %v5541 = vpack.c.b16 %v5508, %v5507
  %v5542 = vpack.c.b16 %v5510, %v5509
  %5575 = vmatprep.subr.bf16.mxu0 0
  %5576 = vmatpush1.bf16.msra.mxu0 %v5511
  %5577 = vmatprep.subr.bf16.mxu0 0
  %5578 = vmatpush1.bf16.msra.mxu0 %v5512
  %5579 = vmatprep.subr.bf16.mxu0 0
  %5580 = vmatpush1.bf16.msra.mxu0 %v5513
  %5581 = vmatprep.subr.bf16.mxu0 0
  %5582 = vmatpush1.bf16.msra.mxu0 %v5514
  %5583 = vmatprep.subr.bf16.mxu0 0
  %5584 = vmatpush1.bf16.msra.mxu0 %v5515
  %5585 = vmatprep.subr.bf16.mxu0 0
  %5586 = vmatpush1.bf16.msra.mxu0 %v5516
  %5587 = vmatprep.subr.bf16.mxu0 0
  %5588 = vmatpush1.bf16.msra.mxu0 %v5517
  %5589 = vmatprep.subr.bf16.mxu0 0
  %5590 = vmatpush1.bf16.msra.mxu0 %v5518
  %5591 = vmatprep.subr.bf16.mxu0 0
  %5592 = vmatpush1.bf16.msra.mxu0 %v5519
  %5593 = vmatprep.subr.bf16.mxu0 0
  %5594 = vmatpush1.bf16.msra.mxu0 %v5520
  %5595 = vmatprep.subr.bf16.mxu0 0
  %5596 = vmatpush1.bf16.msra.mxu0 %v5521
  %5597 = vmatprep.subr.bf16.mxu0 0
  %5598 = vmatpush1.bf16.msra.mxu0 %v5522
  %5599 = vmatprep.subr.bf16.mxu0 0
  %5600 = vmatpush1.bf16.msra.mxu0 %v5523
  %5601 = vmatprep.subr.bf16.mxu0 0
  %5602 = vmatpush1.bf16.msra.mxu0 %v5524
  %5603 = vmatprep.subr.bf16.mxu0 0
  %5604 = vmatpush1.bf16.msra.mxu0 %v5525
  %5605 = vmatprep.subr.bf16.mxu0 0
  %5606 = vmatpush1.bf16.msra.mxu0 %v5526
  %5607 = vmatprep.mubr.bf16.mxu0 %v5264
  %5608 = vmatmul.mubr.bf16.gmra.mrb[0].mxu0 %v5263
  %v5609 = vpop.f32.mrb[0].mxu0
  %v5610 = vadd.f32 %v5381, %v5609
  %v5611 = vpop.f32.mrb[0].mxu0
  %v5612 = vpop.f32.mrb[0].mxu0
  %v5613 = vadd.f32 %v5381, %v5612
  %v5614 = vpop.f32.mrb[0].mxu0
  %5615 = vmatprep.mubr.bf16.mxu0 %v5267
  %5616 = vmatmul.mubr.bf16.gmra.mrb[0].mxu0 %v5265
  %v5617 = vpop.f32.mrb[0].mxu0
  %v5618 = vadd.f32 %v5381, %v5617
  %v5619 = vpop.f32.mrb[0].mxu0
  %v5620 = vpop.f32.mrb[0].mxu0
  %v5621 = vadd.f32 %v5381, %v5620
  %v5622 = vpop.f32.mrb[0].mxu0
  %5623 = vmatprep.mubr.bf16.mxu0 %v5270
  %5624 = vmatmul.mubr.bf16.gmra.mrb[0].mxu0 %v5268
  %v5625 = vpop.f32.mrb[0].mxu0
  %v5626 = vadd.f32 %v5381, %v5625
  %v5627 = vpop.f32.mrb[0].mxu0
  %v5628 = vpop.f32.mrb[0].mxu0
  %v5629 = vadd.f32 %v5381, %v5628
  %v5630 = vpop.f32.mrb[0].mxu0
  %5631 = vmatprep.mubr.bf16.mxu0 %v5273
  %5632 = vmatmul.mubr.bf16.gmra.mrb[0].mxu0 %v5271
  %v5633 = vpop.f32.mrb[0].mxu0
  %v5634 = vadd.f32 %v5381, %v5633
  %v5635 = vpop.f32.mrb[0].mxu0
  %v5636 = vpop.f32.mrb[0].mxu0
  %v5637 = vadd.f32 %v5381, %v5636
  %v5638 = vpop.f32.mrb[0].mxu0
  %5639 = vmatprep.mubr.bf16.mxu0 %v5276
  %5640 = vmatmul.mubr.bf16.gmra.mrb[0].mxu0 %v5274
  %v5641 = vpop.f32.mrb[0].mxu0
  %v5642 = vadd.f32 %v5381, %v5641
  %v5643 = vpop.f32.mrb[0].mxu0
  %v5644 = vpop.f32.mrb[0].mxu0
  %v5645 = vadd.f32 %v5381, %v5644
  %v5646 = vpop.f32.mrb[0].mxu0
  %5647 = vmatprep.mubr.bf16.mxu0 %v5279
  %5648 = vmatmul.mubr.bf16.gmra.mrb[0].mxu0 %v5277
  %v5649 = vpop.f32.mrb[0].mxu0
  %v5650 = vadd.f32 %v5381, %v5649
  %v5651 = vpop.f32.mrb[0].mxu0
  %v5652 = vpop.f32.mrb[0].mxu0
  %v5653 = vadd.f32 %v5381, %v5652
  %v5654 = vpop.f32.mrb[0].mxu0
  %5655 = vmatprep.mubr.bf16.mxu0 %v5282
  %5656 = vmatmul.mubr.bf16.gmra.mrb[0].mxu0 %v5280
  %v5657 = vpop.f32.mrb[0].mxu0
  %v5658 = vadd.f32 %v5381, %v5657
  %v5659 = vpop.f32.mrb[0].mxu0
  %v5660 = vpop.f32.mrb[0].mxu0
  %v5661 = vadd.f32 %v5381, %v5660
  %v5662 = vpop.f32.mrb[0].mxu0
  %5663 = vmatprep.mubr.bf16.mxu0 %v5285
  %5664 = vmatmul.mubr.bf16.gmra.mrb[0].mxu0 %v5283
  %v5665 = vpop.f32.mrb[0].mxu0
  %v5666 = vadd.f32 %v5381, %v5665
  %v5667 = vpop.f32.mrb[0].mxu0
  %v5668 = vpop.f32.mrb[0].mxu0
  %v5669 = vadd.f32 %v5381, %v5668
  %v5670 = vpop.f32.mrb[0].mxu0
  %5671 = vmatprep.mubr.bf16.mxu0 %v5288
  %5672 = vmatmul.mubr.bf16.gmra.mrb[0].mxu0 %v5286
  %v5673 = vpop.f32.mrb[0].mxu0
  %v5674 = vadd.f32 %v5381, %v5673
  %v5675 = vpop.f32.mrb[0].mxu0
  %v5676 = vpop.f32.mrb[0].mxu0
  %v5677 = vadd.f32 %v5381, %v5676
  %v5678 = vpop.f32.mrb[0].mxu0
  %5679 = vmatprep.mubr.bf16.mxu0 %v5291
  %5680 = vmatmul.mubr.bf16.gmra.mrb[0].mxu0 %v5289
  %v5681 = vpop.f32.mrb[0].mxu0
  %v5682 = vadd.f32 %v5381, %v5681
  %v5683 = vpop.f32.mrb[0].mxu0
  %v5684 = vpop.f32.mrb[0].mxu0
  %v5685 = vadd.f32 %v5381, %v5684
  %v5686 = vpop.f32.mrb[0].mxu0
  %5687 = vmatprep.mubr.bf16.mxu0 %v5294
  %5688 = vmatmul.mubr.bf16.gmra.mrb[0].mxu0 %v5292
  %v5689 = vpop.f32.mrb[0].mxu0
  %v5690 = vadd.f32 %v5381, %v5689
  %v5691 = vpop.f32.mrb[0].mxu0
  %v5692 = vpop.f32.mrb[0].mxu0
  %v5693 = vadd.f32 %v5381, %v5692
  %v5694 = vpop.f32.mrb[0].mxu0
  %5695 = vmatprep.mubr.bf16.mxu0 %v5297
  %5696 = vmatmul.mubr.bf16.gmra.mrb[0].mxu0 %v5295
  %v5697 = vpop.f32.mrb[0].mxu0
  %v5698 = vadd.f32 %v5381, %v5697
  %v5699 = vpop.f32.mrb[0].mxu0
  %v5700 = vpop.f32.mrb[0].mxu0
  %v5701 = vadd.f32 %v5381, %v5700
  %v5702 = vpop.f32.mrb[0].mxu0
  %5703 = vmatprep.mubr.bf16.mxu0 %v5300
  %5704 = vmatmul.mubr.bf16.gmra.mrb[0].mxu0 %v5298
  %v5705 = vpop.f32.mrb[0].mxu0
  %v5706 = vadd.f32 %v5381, %v5705
  %v5707 = vpop.f32.mrb[0].mxu0
  %v5708 = vpop.f32.mrb[0].mxu0
  %v5709 = vadd.f32 %v5381, %v5708
  %v5710 = vpop.f32.mrb[0].mxu0
  %5711 = vmatprep.mubr.bf16.mxu0 %v5303
  %5712 = vmatmul.mubr.bf16.gmra.mrb[0].mxu0 %v5301
  %v5713 = vpop.f32.mrb[0].mxu0
  %v5714 = vadd.f32 %v5381, %v5713
  %v5715 = vpop.f32.mrb[0].mxu0
  %v5716 = vpop.f32.mrb[0].mxu0
  %v5717 = vadd.f32 %v5381, %v5716
  %v5718 = vpop.f32.mrb[0].mxu0
  %5719 = vmatprep.mubr.bf16.mxu0 %v5306
  %5720 = vmatmul.mubr.bf16.gmra.mrb[0].mxu0 %v5304
  %v5721 = vpop.f32.mrb[0].mxu0
  %v5722 = vadd.f32 %v5381, %v5721
  %v5723 = vpop.f32.mrb[0].mxu0
  %v5724 = vpop.f32.mrb[0].mxu0
  %v5725 = vadd.f32 %v5381, %v5724
  %v5726 = vpop.f32.mrb[0].mxu0
  %5727 = vmatprep.mubr.bf16.mxu0 %v5309
  %5728 = vmatmul.mubr.bf16.gmra.mrb[0].mxu0 %v5307
  %v5729 = vpop.f32.mrb[0].mxu0
  %v5730 = vadd.f32 %v5381, %v5729
  %v5731 = vpop.f32.mrb[0].mxu0
  %v5732 = vpop.f32.mrb[0].mxu0
  %v5733 = vadd.f32 %v5381, %v5732
  %v5734 = vpop.f32.mrb[0].mxu0
  %5735 = vdwg.mxu0
  %5736 = vmatprep.subr.bf16.mxu0 0
  %5737 = vmatpush1.bf16.msra.mxu0 %v5527
  %5738 = vmatprep.subr.bf16.mxu0 0
  %5739 = vmatpush1.bf16.msra.mxu0 %v5528
  %5740 = vmatprep.subr.bf16.mxu0 0
  %5741 = vmatpush1.bf16.msra.mxu0 %v5529
  %5742 = vmatprep.subr.bf16.mxu0 0
  %5743 = vmatpush1.bf16.msra.mxu0 %v5530
  %5744 = vmatprep.subr.bf16.mxu0 0
  %5745 = vmatpush1.bf16.msra.mxu0 %v5531
  %5746 = vmatprep.subr.bf16.mxu0 0
  %5747 = vmatpush1.bf16.msra.mxu0 %v5532
  %5748 = vmatprep.subr.bf16.mxu0 0
  %5749 = vmatpush1.bf16.msra.mxu0 %v5533
  %5750 = vmatprep.subr.bf16.mxu0 0
  %5751 = vmatpush1.bf16.msra.mxu0 %v5534
  %5752 = vmatprep.subr.bf16.mxu0 0
  %5753 = vmatpush1.bf16.msra.mxu0 %v5535
  %5754 = vmatprep.subr.bf16.mxu0 0
  %5755 = vmatpush1.bf16.msra.mxu0 %v5536
  %5756 = vmatprep.subr.bf16.mxu0 0
  %5757 = vmatpush1.bf16.msra.mxu0 %v5537
  %5758 = vmatprep.subr.bf16.mxu0 0
  %5759 = vmatpush1.bf16.msra.mxu0 %v5538
  %5760 = vmatprep.subr.bf16.mxu0 0
  %5761 = vmatpush1.bf16.msra.mxu0 %v5539
  %5762 = vmatprep.subr.bf16.mxu0 0
  %5763 = vmatpush1.bf16.msra.mxu0 %v5540
  %5764 = vmatprep.subr.bf16.mxu0 0
  %5765 = vmatpush1.bf16.msra.mxu0 %v5541
  %5766 = vmatprep.subr.bf16.mxu0 0
  %5767 = vmatpush1.bf16.msra.mxu0 %v5542
  %5768 = vmatprep.mubr.bf16.mxu0 %v5266
  %5769 = vmatmul.mubr.bf16.gmra.mrb[0].mxu0 %v5265
  %v5770 = vpop.f32.mrb[0].mxu0
  %v5771 = vadd.f32 %v5610, %v5770
  %v5772 = vpop.f32.mrb[0].mxu0
  %v5773 = vpop.f32.mrb[0].mxu0
  %v5774 = vadd.f32 %v5613, %v5773
  %v5775 = vpop.f32.mrb[0].mxu0
  %5776 = vmatprep.mubr.bf16.mxu0 %v5269
  %5777 = vmatmul.mubr.bf16.gmra.mrb[0].mxu0 %v5268
  %v5778 = vpop.f32.mrb[0].mxu0
  %v5779 = vadd.f32 %v5618, %v5778
  %v5780 = vpop.f32.mrb[0].mxu0
  %v5781 = vpop.f32.mrb[0].mxu0
  %v5782 = vadd.f32 %v5621, %v5781
  %v5783 = vpop.f32.mrb[0].mxu0
  %5784 = vmatprep.mubr.bf16.mxu0 %v5272
  %5785 = vmatmul.mubr.bf16.gmra.mrb[0].mxu0 %v5271
  %v5786 = vpop.f32.mrb[0].mxu0
  %v5787 = vadd.f32 %v5626, %v5786
  %v5788 = vpop.f32.mrb[0].mxu0
  %v5789 = vpop.f32.mrb[0].mxu0
  %v5790 = vadd.f32 %v5629, %v5789
  %v5791 = vpop.f32.mrb[0].mxu0
  %5792 = vmatprep.mubr.bf16.mxu0 %v5275
  %5793 = vmatmul.mubr.bf16.gmra.mrb[0].mxu0 %v5274
  %v5794 = vpop.f32.mrb[0].mxu0
  %v5795 = vadd.f32 %v5634, %v5794
  %v5796 = vpop.f32.mrb[0].mxu0
  %v5797 = vpop.f32.mrb[0].mxu0
  %v5798 = vadd.f32 %v5637, %v5797
  %v5799 = vpop.f32.mrb[0].mxu0
  %5800 = vmatprep.mubr.bf16.mxu0 %v5278
  %5801 = vmatmul.mubr.bf16.gmra.mrb[0].mxu0 %v5277
  %v5802 = vpop.f32.mrb[0].mxu0
  %v5803 = vadd.f32 %v5642, %v5802
  %v5804 = vpop.f32.mrb[0].mxu0
  %v5805 = vpop.f32.mrb[0].mxu0
  %v5806 = vadd.f32 %v5645, %v5805
  %v5807 = vpop.f32.mrb[0].mxu0
  %5808 = vmatprep.mubr.bf16.mxu0 %v5281
  %5809 = vmatmul.mubr.bf16.gmra.mrb[0].mxu0 %v5280
  %v5810 = vpop.f32.mrb[0].mxu0
  %v5811 = vadd.f32 %v5650, %v5810
  %v5812 = vpop.f32.mrb[0].mxu0
  %v5813 = vpop.f32.mrb[0].mxu0
  %v5814 = vadd.f32 %v5653, %v5813
  %v5815 = vpop.f32.mrb[0].mxu0
  %5816 = vmatprep.mubr.bf16.mxu0 %v5284
  %5817 = vmatmul.mubr.bf16.gmra.mrb[0].mxu0 %v5283
  %v5818 = vpop.f32.mrb[0].mxu0
  %v5819 = vadd.f32 %v5658, %v5818
  %v5820 = vpop.f32.mrb[0].mxu0
  %v5821 = vpop.f32.mrb[0].mxu0
  %v5822 = vadd.f32 %v5661, %v5821
  %v5823 = vpop.f32.mrb[0].mxu0
  %5824 = vmatprep.mubr.bf16.mxu0 %v5287
  %5825 = vmatmul.mubr.bf16.gmra.mrb[0].mxu0 %v5286
  %v5826 = vpop.f32.mrb[0].mxu0
  %v5827 = vadd.f32 %v5666, %v5826
  %v5828 = vpop.f32.mrb[0].mxu0
  %v5829 = vpop.f32.mrb[0].mxu0
  %v5830 = vadd.f32 %v5669, %v5829
  %v5831 = vpop.f32.mrb[0].mxu0
  %5832 = vmatprep.mubr.bf16.mxu0 %v5290
  %5833 = vmatmul.mubr.bf16.gmra.mrb[0].mxu0 %v5289
  %v5834 = vpop.f32.mrb[0].mxu0
  %v5835 = vadd.f32 %v5674, %v5834
  %v5836 = vpop.f32.mrb[0].mxu0
  %v5837 = vpop.f32.mrb[0].mxu0
  %v5838 = vadd.f32 %v5677, %v5837
  %v5839 = vpop.f32.mrb[0].mxu0
  %5840 = vmatprep.mubr.bf16.mxu0 %v5293
  %5841 = vmatmul.mubr.bf16.gmra.mrb[0].mxu0 %v5292
  %v5842 = vpop.f32.mrb[0].mxu0
  %v5843 = vadd.f32 %v5682, %v5842
  %v5844 = vpop.f32.mrb[0].mxu0
  %v5845 = vpop.f32.mrb[0].mxu0
  %v5846 = vadd.f32 %v5685, %v5845
  %v5847 = vpop.f32.mrb[0].mxu0
  %5848 = vmatprep.mubr.bf16.mxu0 %v5296
  %5849 = vmatmul.mubr.bf16.gmra.mrb[0].mxu0 %v5295
  %v5850 = vpop.f32.mrb[0].mxu0
  %v5851 = vadd.f32 %v5690, %v5850
  %v5852 = vpop.f32.mrb[0].mxu0
  %v5853 = vpop.f32.mrb[0].mxu0
  %v5854 = vadd.f32 %v5693, %v5853
  %v5855 = vpop.f32.mrb[0].mxu0
  %5856 = vmatprep.mubr.bf16.mxu0 %v5299
  %5857 = vmatmul.mubr.bf16.gmra.mrb[0].mxu0 %v5298
  %v5858 = vpop.f32.mrb[0].mxu0
  %v5859 = vadd.f32 %v5698, %v5858
  %v5860 = vpop.f32.mrb[0].mxu0
  %v5861 = vpop.f32.mrb[0].mxu0
  %v5862 = vadd.f32 %v5701, %v5861
  %v5863 = vpop.f32.mrb[0].mxu0
  %5864 = vmatprep.mubr.bf16.mxu0 %v5302
  %5865 = vmatmul.mubr.bf16.gmra.mrb[0].mxu0 %v5301
  %v5866 = vpop.f32.mrb[0].mxu0
  %v5867 = vadd.f32 %v5706, %v5866
  %v5868 = vpop.f32.mrb[0].mxu0
  %v5869 = vpop.f32.mrb[0].mxu0
  %v5870 = vadd.f32 %v5709, %v5869
  %v5871 = vpop.f32.mrb[0].mxu0
  %5872 = vmatprep.mubr.bf16.mxu0 %v5305
  %5873 = vmatmul.mubr.bf16.gmra.mrb[0].mxu0 %v5304
  %v5874 = vpop.f32.mrb[0].mxu0
  %v5875 = vadd.f32 %v5714, %v5874
  %v5876 = vpop.f32.mrb[0].mxu0
  %v5877 = vpop.f32.mrb[0].mxu0
  %v5878 = vadd.f32 %v5717, %v5877
  %v5879 = vpop.f32.mrb[0].mxu0
  %5880 = vmatprep.mubr.bf16.mxu0 %v5308
  %5881 = vmatmul.mubr.bf16.gmra.mrb[0].mxu0 %v5307
  %v5882 = vpop.f32.mrb[0].mxu0
  %v5883 = vadd.f32 %v5722, %v5882
  %v5884 = vpop.f32.mrb[0].mxu0
  %v5885 = vpop.f32.mrb[0].mxu0
  %v5886 = vadd.f32 %v5725, %v5885
  %v5887 = vpop.f32.mrb[0].mxu0
  %5888 = vmatprep.mubr.bf16.mxu0 %v5311
  %5889 = vmatmul.mubr.bf16.gmra.mrb[0].mxu0 %v5310
  %v5890 = vpop.f32.mrb[0].mxu0
  %v5891 = vadd.f32 %v5730, %v5890
  %v5892 = vpop.f32.mrb[0].mxu0
  %v5893 = vpop.f32.mrb[0].mxu0
  %v5894 = vadd.f32 %v5733, %v5893
  %v5895 = vpop.f32.mrb[0].mxu0
  %5896 = vdwg.mxu0
  %v5897 = vtanh.pop %v5771
  %v5898 = vtanh.pop %v5774
  %v5899 = vtanh.pop %v5779
  %v5900 = vtanh.pop %v5782
  %v5901 = vtanh.pop %v5787
  %v5902 = vtanh.pop %v5790
  %v5903 = vtanh.pop %v5795
  %v5904 = vtanh.pop %v5798
  %v5905 = vtanh.pop %v5803
  %v5906 = vtanh.pop %v5806
  %v5907 = vtanh.pop %v5811
  %v5908 = vtanh.pop %v5814
  %v5909 = vtanh.pop %v5819
  %v5910 = vtanh.pop %v5822
  %v5911 = vtanh.pop %v5827
  %v5912 = vtanh.pop %v5830
  %v5913 = vtanh.pop %v5835
  %v5914 = vtanh.pop %v5838
  %v5915 = vtanh.pop %v5843
  %v5916 = vtanh.pop %v5846
  %v5917 = vtanh.pop %v5851
  %v5918 = vtanh.pop %v5854
  %v5919 = vtanh.pop %v5859
  %v5920 = vtanh.pop %v5862
  %v5921 = vtanh.pop %v5867
  %v5922 = vtanh.pop %v5870
  %v5923 = vtanh.pop %v5875
  %v5924 = vtanh.pop %v5878
  %v5925 = vtanh.pop %v5883
  %v5926 = vtanh.pop %v5886
  %v5927 = vtanh.pop %v5891
  %v5928 = vtanh.pop %v5894
  %5929 = vst.msk [vmem:[%s14] sm:$0xff] %vm3672, %v5897
  %5930 = vst.msk [vmem:[%s14 + $0x8] sm:$0xff] %vm3672, %v5898
  %5931 = vst.msk [vmem:[%s14 + $0x10] sm:$0xff] %vm3672, %v5899
  %5932 = vst.msk [vmem:[%s14 + $0x18] sm:$0xff] %vm3672, %v5900
  %5933 = vst.msk [vmem:[%s14 + $0x20] sm:$0xff] %vm3672, %v5901
  %5934 = vst.msk [vmem:[%s14 + $0x28] sm:$0xff] %vm3672, %v5902
  %5935 = vst.msk [vmem:[%s14 + $0x30] sm:$0xff] %vm3672, %v5903
  %5936 = vst.msk [vmem:[%s14 + $0x38] sm:$0xff] %vm3672, %v5904
  %5937 = vst.msk [vmem:[%s14 + $0x40] sm:$0xff] %vm3672, %v5905
  %5938 = vst.msk [vmem:[%s14 + $0x48] sm:$0xff] %vm3672, %v5906
  %5939 = vst.msk [vmem:[%s14 + $0x50] sm:$0xff] %vm3672, %v5907
  %5940 = vst.msk [vmem:[%s14 + $0x58] sm:$0xff] %vm3672, %v5908
  %5941 = vst.msk [vmem:[%s14 + $0x60] sm:$0xff] %vm3672, %v5909
  %5942 = vst.msk [vmem:[%s14 + $0x68] sm:$0xff] %vm3672, %v5910
  %5943 = vst.msk [vmem:[%s14 + $0x70] sm:$0xff] %vm3672, %v5911
  %5944 = vst.msk [vmem:[%s14 + $0x78] sm:$0xff] %vm3672, %v5912
  %5945 = vst.msk [vmem:[%s14 + $0x80] sm:$0xff] %vm3672, %v5913
  %5946 = vst.msk [vmem:[%s14 + $0x88] sm:$0xff] %vm3672, %v5914
  %5947 = vst.msk [vmem:[%s14 + $0x90] sm:$0xff] %vm3672, %v5915
  %5948 = vst.msk [vmem:[%s14 + $0x98] sm:$0xff] %vm3672, %v5916
  %5949 = vst.msk [vmem:[%s14 + $0xa0] sm:$0xff] %vm3672, %v5917
  %5950 = vst.msk [vmem:[%s14 + $0xa8] sm:$0xff] %vm3672, %v5918
  %5951 = vst.msk [vmem:[%s14 + $0xb0] sm:$0xff] %vm3672, %v5919
  %5952 = vst.msk [vmem:[%s14 + $0xb8] sm:$0xff] %vm3672, %v5920
  %5953 = vst.msk [vmem:[%s14 + $0xc0] sm:$0xff] %vm3672, %v5921
  %5954 = vst.msk [vmem:[%s14 + $0xc8] sm:$0xff] %vm3672, %v5922
  %5955 = vst.msk [vmem:[%s14 + $0xd0] sm:$0xff] %vm3672, %v5923
  %5956 = vst.msk [vmem:[%s14 + $0xd8] sm:$0xff] %vm3672, %v5924
  %5957 = vst.msk [vmem:[%s14 + $0xe0] sm:$0xff] %vm3672, %v5925
  %5958 = vst.msk [vmem:[%s14 + $0xe8] sm:$0xff] %vm3672, %v5926
  %5959 = vst.msk [vmem:[%s14 + $0xf0] sm:$0xff] %vm3672, %v5927
  %5960 = vst.msk [vmem:[%s14 + $0xf8] sm:$0xff] %vm3672, %v5928
  // Predicated region
  $region58: #{vae_forward.1} parent=0 // pred_check
    _
  $region59: #{vae_forward.1} parent=0 // pred_check_branch
    %5962 = sbr.rel (0) target = $region61
  $region60: #{vae_forward.1} parent=0 // pred_region
    _
  $region61: #{vae_forward.1} parent=0 // pred_fallthru
    _
  // Predicated region
  $region62: #{vae_forward.1} parent=0 // pred_check
    _
  $region63: #{vae_forward.1} parent=0 // pred_check_branch
    %5964 = sbr.rel (0) target = $region65
  $region64: #{vae_forward.1} parent=0 // pred_region
    _
  $region65: #{vae_forward.1} parent=0 // pred_fallthru
    _
  // Predicated region
  $region66: #{vae_forward.1} parent=0 // pred_check
    _
  $region67: #{vae_forward.1} parent=0 // pred_check_branch
    %5966 = sbr.rel (0) target = $region69
  $region68: #{vae_forward.1} parent=0 // pred_region
    _
  $region69: #{vae_forward.1} parent=0 // pred_fallthru
    _
  // Predicated region
  $region70: #{vae_forward.1} parent=0 // pred_check
    _
  $region71: #{vae_forward.1} parent=0 // pred_check_branch
    %5968 = sbr.rel (0) target = $region73
  $region72: #{vae_forward.1} parent=0 // pred_region
    _
  $region73: #{vae_forward.1} parent=0 // pred_fallthru
    _

</llo_original>
